<compile_context>
chip_gen: v7x
topology: tpu7x:2x2x1
jax: 0.10.0
libtpu: 0.0.40
codegen_flags: <defaults>
</compile_context>

<pallas_src>
import functools

import jax
import jax.numpy as jnp
from jax import lax
from jax.experimental import pallas as pl
from jax.experimental.pallas import tpu as pltpu


# --------------------------------------------------------------------------
# helpers
# --------------------------------------------------------------------------
def _bn_fold(gamma, beta, mean, var, eps):
    scale = gamma / jnp.sqrt(var + eps)
    bias = beta - mean * scale
    return scale.astype(jnp.float32), bias.astype(jnp.float32)


def _silu(x):
    return x * jax.nn.sigmoid(x)


def _divisors(n):
    return [d for d in range(1, n + 1) if n % d == 0]


def _vmem_limit(est_bytes):
    # >= default 32 MiB, <= 64 MiB so the request is legal on v7x (64 MiB
    # physical VMEM) as well as v5e / v6e (128 MiB).
    return int(min(max(2 * est_bytes + (4 << 20), 32 << 20), 64 << 20))


# --------------------------------------------------------------------------
# Kernel A: 3x3 stride-2 conv (single K=9*Cin MXU matmul) + folded BN + SiLU
# --------------------------------------------------------------------------
def _conv3x3s2_kernel(p_ref, w_ref, b_ref, o_ref):
    _, th, Wo, K = p_ref.shape
    Cout = o_ref.shape[-1]
    x = p_ref[0].reshape(th * Wo, K)                 # merge leading dims: free
    acc = jnp.dot(x, w_ref[...], preferred_element_type=jnp.float32)
    y = _silu(acc + b_ref[...])
    o_ref[0] = y.astype(o_ref.dtype).reshape(th, Wo, Cout)


def conv3x3_s2_bn_silu(x_nhwc, w_hwio, scale, bias, *, target_rows=2048):
    B, H, W, Cin = x_nhwc.shape
    Ho, Wo = H // 2, W // 2
    Cout = w_hwio.shape[-1]
    K = 9 * Cin

    # Fold BN scale into the conv weight at trace time; bf16 for the MXU.
    w_eff = (w_hwio * scale).reshape(K, Cout).astype(jnp.bfloat16)

    # bf16 im2col for the stride-2 conv: only ~2.25x the input element count
    # (vs 9x for stride-1), and the last dim becomes 9*Cin -> lane-dense loads
    # and a single large-K matmul per tile.
    xp = jnp.pad(x_nhwc.astype(jnp.bfloat16), ((0, 0), (1, 1), (1, 1), (0, 0)))
    cols = [xp[:, kh:kh + 2 * Ho:2, kw:kw + 2 * Wo:2, :]
            for kh in range(3) for kw in range(3)]
    patches = jnp.concatenate(cols, axis=-1)         # (B, Ho, Wo, 9*Cin) bf16

    # Row tile: largest divisor of Ho with th*Wo <= target_rows and the
    # double-buffered in+out tiles under a v7x-friendly budget; fallback th=1.
    row_bytes = 2 * 2 * Wo * (K + Cout)              # dbl-buffered bf16 in+out
    th = 1
    for t in _divisors(Ho):
        if t * Wo <= target_rows and t * row_bytes <= (12 << 20):
            th = max(th, t)

    est = th * row_bytes + 2 * K * Cout
    grid = (B, Ho // th)
    return pl.pallas_call(
        _conv3x3s2_kernel,
        out_shape=jax.ShapeDtypeStruct((B, Ho, Wo, Cout), jnp.bfloat16),
        grid=grid,
        in_specs=[
            pl.BlockSpec((1, th, Wo, K), lambda b, r: (b, r, 0, 0)),
            pl.BlockSpec((K, Cout), lambda b, r: (0, 0)),
            pl.BlockSpec((1, Cout), lambda b, r: (0, 0)),
        ],
        out_specs=pl.BlockSpec((1, th, Wo, Cout), lambda b, r: (b, r, 0, 0)),
        compiler_params=pltpu.CompilerParams(
            dimension_semantics=("parallel", "parallel"),
            vmem_limit_bytes=_vmem_limit(est)),
    )(patches, w_eff, bias.reshape(1, Cout))


# --------------------------------------------------------------------------
# Kernel B: F_loc + F_sur + joint BN + SiLU + 1x1 reduce + BN + SiLU + FGlo,
#           fully fused, row-tiled with a 2-row halo.
#   grid = (B, phase, row tile):  phase 0 computes `red` tiles + FGlo sums,
#                                 phase 1 applies the sigmoid gate per tile.
# --------------------------------------------------------------------------
def _cgb_fused_kernel(ymid_ref, yprev_ref, ynext_ref,
                      wl_ref, bl_ref, ws_ref, bs_ref,
                      wrt_ref, wrb_ref, rb_ref,
                      w1_ref, b1_ref, w2_ref, b2_ref,
                      o_ref,
                      yp_ref, red_ref, sum_ref, gate_ref,
                      *, th, Wo, C, R, inv_hw):
    p = pl.program_id(1)
    r = pl.program_id(2)

    # ---------------- phase 0: depthwise + reduce, accumulate FGlo sums ----
    @pl.when(p == 0)
    def _compute():
        @pl.when(r == 0)
        def _init():
            sum_ref[...] = jnp.zeros_like(sum_ref)
            # zero only the 2-wide column halo (interior / row halo are fully
            # overwritten below) -- no whole-scratch clear per step.
            yp_ref[:, 0:2, :] = jnp.zeros((th + 4, 2, C), jnp.float32)
            yp_ref[:, Wo + 2:Wo + 4, :] = jnp.zeros((th + 4, 2, C), jnp.float32)

        # Stage this row tile (+ 2-row halo from neighbour tiles) into the
        # f32 pad-2 frame.
        yp_ref[2:2 + th, 2:2 + Wo, :] = ymid_ref[0].astype(jnp.float32)

        @pl.when(r == 0)
        def _():
            yp_ref[0:2, 2:2 + Wo, :] = jnp.zeros((2, Wo, C), jnp.float32)

        @pl.when(r == R - 1)
        def _():
            yp_ref[th + 2:th + 4, 2:2 + Wo, :] = jnp.zeros((2, Wo, C), jnp.float32)

        if R > 1:                      # halo from the adjacent row blocks
            @pl.when(r > 0)
            def _():
                yp_ref[0:2, 2:2 + Wo, :] = (
                    yprev_ref[0, th - 2:th].astype(jnp.float32))

            @pl.when(r < R - 1)
            def _():
                yp_ref[th + 2:th + 4, 2:2 + Wo, :] = (
                    ynext_ref[0, 0:2].astype(jnp.float32))

        # Pre-build the 5 W-shifted views once (unaligned sublane slices done
        # here, once); the tap loops below slice only the leading H dim (free).
        sh = [yp_ref[:, j:j + Wo, :] for j in range(5)]

        # F_loc (pad=1, dil=1): offset (1+kh, 1+kw) in the pad-2 frame.
        wl = wl_ref[...]
        loc = jnp.zeros((th, Wo, C), jnp.float32)
        for kh in range(3):
            for kw in range(3):
                loc = loc + sh[1 + kw][1 + kh:1 + kh + th] * wl[3 * kh + kw]
        loc = _silu(loc + bl_ref[0]).reshape(th * Wo, C)
        red = jnp.dot(loc.astype(jnp.bfloat16), wrt_ref[...],
                      preferred_element_type=jnp.float32)

        # F_sur (pad=2, dil=2): offset (2*kh, 2*kw).  Processed after loc so
        # only one (tile, C) f32 temporary is live at a time.
        ws = ws_ref[...]
        sur = jnp.zeros((th, Wo, C), jnp.float32)
        for kh in range(3):
            for kw in range(3):
                sur = sur + sh[2 * kw][2 * kh:2 * kh + th] * ws[3 * kh + kw]
        sur = _silu(sur + bs_ref[0]).reshape(th * Wo, C)
        red = red + jnp.dot(sur.astype(jnp.bfloat16), wrb_ref[...],
                            preferred_element_type=jnp.float32)

        red = _silu(red + rb_ref[...])                      # (th*Wo, C)

        sum_ref[...] += jnp.sum(red, axis=0, keepdims=True)
        red_ref[pl.ds(r * th, th)] = red.reshape(th, Wo, C)

    # ---------------- phase 1: FGlo gate + gated output tiles --------------
    @pl.when(p == 1)
    def _gate():
        @pl.when(r == 0)
        def _():
            g = sum_ref[...] * inv_hw
            h = jnp.dot(g, w1_ref[...],
                        preferred_element_type=jnp.float32) + b1_ref[...]
            h = jnp.maximum(h, 0.0)
            s = jnp.dot(h, w2_ref[...],
                        preferred_element_type=jnp.float32) + b2_ref[...]
            gate_ref[...] = jax.nn.sigmoid(s)

        o_ref[0] = (red_ref[pl.ds(r * th, th)] * gate_ref[0]).astype(o_ref.dtype)


def cgb_fused(y_nhwc, w_loc9, b_loc, w_sur9, b_sur, jscale, jbias,
              w_red, rscale, rbias, w_fc1, b_fc1, w_fc2, b_fc2,
              *, target_rows=1024):
    B, Ho, Wo, C = y_nhwc.shape
    Cr = w_fc1.shape[-1]

    # Fold joint-BN scale/bias into the depthwise weights / biases (per half)
    # and the reduce-BN scale into the split 1x1 reduce weight (kills concat).
    jsl, jss = jscale[:C], jscale[C:]
    jbl, jbs = jbias[:C], jbias[C:]
    wl_f = (w_loc9 * jsl).astype(jnp.float32)
    ws_f = (w_sur9 * jss).astype(jnp.float32)
    bl_f = (b_loc * jsl + jbl).reshape(1, C).astype(jnp.float32)
    bs_f = (b_sur * jss + jbs).reshape(1, C).astype(jnp.float32)
    w_red_eff = (w_red * rscale).astype(jnp.bfloat16)
    w_red_top, w_red_bot = w_red_eff[:C], w_red_eff[C:]

    # Row tile: needs th >= 2 (2-row halo from one neighbour) or th == Ho.
    cands = [t for t in _divisors(Ho) if t >= 2 or t == Ho]
    row_bytes = Wo * C * 64             # generous: y/out buffers + f32 temps
    ok = [t for t in cands if t * Wo <= target_rows and t * row_bytes <= (8 << 20)]
    th = max(ok) if ok else min(cands)
    R = Ho // th

    est = (Ho * Wo * C * 4 +                 # whole-image red scratch
           (th + 4) * (Wo + 4) * C * 4 +     # pad-2 halo tile
           th * row_bytes + 4 * C * C)       # per-tile buffers + weights

    kern = functools.partial(_cgb_fused_kernel, th=th, Wo=Wo, C=C, R=R,
                             inv_hw=1.0 / float(Ho * Wo))

    y_mid = pl.BlockSpec((1, th, Wo, C),
                         lambda b, p, r: (b, r * (1 - p), 0, 0))
    y_prev = pl.BlockSpec((1, th, Wo, C),
                          lambda b, p, r: (b, jnp.maximum(r - 1, 0) * (1 - p), 0, 0))
    y_next = pl.BlockSpec((1, th, Wo, C),
                          lambda b, p, r: (b, jnp.minimum(r + 1, R - 1) * (1 - p), 0, 0))
    vec = lambda b, p, r: (0, 0)

    return pl.pallas_call(
        kern,
        out_shape=jax.ShapeDtypeStruct((B, Ho, Wo, C), jnp.float32),
        grid=(B, 2, R),
        in_specs=[
            y_mid, y_prev, y_next,
            pl.BlockSpec((9, C), vec),     # w_loc (joint-BN folded)
            pl.BlockSpec((1, C), vec),     # b_loc (folded)
            pl.BlockSpec((9, C), vec),     # w_sur (folded)
            pl.BlockSpec((1, C), vec),     # b_sur (folded)
            pl.BlockSpec((C, C), vec),     # w_red top half (bf16, folded)
            pl.BlockSpec((C, C), vec),     # w_red bot half (bf16, folded)
            pl.BlockSpec((1, C), vec),     # reduce-BN bias
            pl.BlockSpec((C, Cr), vec),    # FGlo fc1
            pl.BlockSpec((1, Cr), vec),
            pl.BlockSpec((Cr, C), vec),    # FGlo fc2
            pl.BlockSpec((1, C), vec),
        ],
        out_specs=pl.BlockSpec((1, th, Wo, C),
                               lambda b, p, r: (b, r * p, 0, 0)),
        scratch_shapes=[
            pltpu.VMEM((th + 4, Wo + 4, C), jnp.float32),   # pad-2 halo tile
            pltpu.VMEM((Ho, Wo, C), jnp.float32),           # resident red (for gate pass)
            pltpu.VMEM((1, C), jnp.float32),                # FGlo channel sums
            pltpu.VMEM((1, C), jnp.float32),                # FGlo gate
        ],
        compiler_params=pltpu.CompilerParams(
            dimension_semantics=("parallel", "arbitrary", "arbitrary"),
            vmem_limit_bytes=_vmem_limit(est)),
    )(y_nhwc, y_nhwc, y_nhwc,
      wl_f, bl_f, ws_f, bs_f,
      w_red_top, w_red_bot, rbias.reshape(1, C),
      w_fc1, b_fc1.reshape(1, Cr), w_fc2, b_fc2.reshape(1, C))


# --------------------------------------------------------------------------
# parameters (deterministic, synthetic; same shapes as the torch module)
# --------------------------------------------------------------------------
def init_params(key, nIn, nOut, reduction=16):
    ks = jax.random.split(key, 16)
    f32 = jnp.float32
    Cr = nOut // reduction

    def bn(k, c, eps):
        k0, k1, k2, k3 = jax.random.split(k, 4)
        gamma = jax.random.uniform(k0, (c,), f32, 0.8, 1.2)
        beta = 0.1 * jax.random.normal(k1, (c,), f32)
        mean = 0.1 * jax.random.normal(k2, (c,), f32)
        var = jax.random.uniform(k3, (c,), f32, 0.5, 1.5)
        return _bn_fold(gamma, beta, mean, var, eps)

    p = {}
    # conv1x1 = Conv(nIn,nOut,3,s=2): torch (nOut,nIn,3,3) -> HWIO (3,3,nIn,nOut)
    p["w_conv1"] = 0.3 * jax.random.normal(ks[0], (3, 3, nIn, nOut), f32)
    p["s_conv1"], p["b_conv1"] = bn(ks[1], nOut, 1e-5)
    # F_loc / F_sur depthwise: torch (nOut,1,3,3) -> (3,3,nOut) -> (9,nOut)
    p["w_loc"] = (0.3 * jax.random.normal(ks[2], (3, 3, nOut), f32)).reshape(9, nOut)
    p["b_loc"] = 0.1 * jax.random.normal(ks[3], (nOut,), f32)
    p["w_sur"] = (0.3 * jax.random.normal(ks[4], (3, 3, nOut), f32)).reshape(9, nOut)
    p["b_sur"] = 0.1 * jax.random.normal(ks[5], (nOut,), f32)
    # bn = BatchNorm2d(2*nOut, eps=0.001)
    p["s_joi"], p["b_joi"] = bn(ks[6], 2 * nOut, 1e-3)
    # reduce = Conv(2*nOut,nOut,1): torch (nOut,2*nOut,1,1) -> (2*nOut,nOut)
    p["w_red"] = 0.3 * jax.random.normal(ks[7], (2 * nOut, nOut), f32)
    p["s_red"], p["b_red"] = bn(ks[8], nOut, 1e-5)
    # FGlo fc: Linear(nOut,Cr), Linear(Cr,nOut); stored as (in,out) = torch W.T
    p["w_fc1"] = 0.3 * jax.random.normal(ks[9], (nOut, Cr), f32)
    p["b_fc1"] = 0.1 * jax.random.normal(ks[10], (Cr,), f32)
    p["w_fc2"] = 0.3 * jax.random.normal(ks[11], (Cr, nOut), f32)
    p["b_fc2"] = 0.1 * jax.random.normal(ks[12], (nOut,), f32)
    return p


# --------------------------------------------------------------------------
# full forward (NCHW in / NCHW out, matching the torch module)
# --------------------------------------------------------------------------
def context_guided_block_down(x_nchw, p):
    x = jnp.transpose(x_nchw, (0, 2, 3, 1))                        # NCHW -> NHWC
    y = conv3x3_s2_bn_silu(x, p["w_conv1"], p["s_conv1"], p["b_conv1"])  # bf16
    out = cgb_fused(y, p["w_loc"], p["b_loc"], p["w_sur"], p["b_sur"],
                    p["s_joi"], p["b_joi"], p["w_red"], p["s_red"], p["b_red"],
                    p["w_fc1"], p["b_fc1"], p["w_fc2"], p["b_fc2"])
    return jnp.transpose(out, (0, 3, 1, 2))                        # NHWC -> NCHW


# --------------------------------------------------------------------------
# pure-JAX f32 reference (for correctness verification of the Pallas path)
# --------------------------------------------------------------------------
def reference(x_nchw, p, nOut):
    x = jnp.transpose(x_nchw, (0, 2, 3, 1)).astype(jnp.float32)
    dn = ("NHWC", "HWIO", "NHWC")
    y = lax.conv_general_dilated(x, p["w_conv1"], (2, 2), ((1, 1), (1, 1)),
                                 dimension_numbers=dn)
    y = _silu(y * p["s_conv1"] + p["b_conv1"])
    wl = p["w_loc"].reshape(3, 3, 1, nOut)
    ws = p["w_sur"].reshape(3, 3, 1, nOut)
    loc = lax.conv_general_dilated(y, wl, (1, 1), ((1, 1), (1, 1)),
                                   dimension_numbers=dn,
                                   feature_group_count=nOut) + p["b_loc"]
    sur = lax.conv_general_dilated(y, ws, (1, 1), ((2, 2), (2, 2)),
                                   rhs_dilation=(2, 2), dimension_numbers=dn,
                                   feature_group_count=nOut) + p["b_sur"]
    joi = jnp.concatenate([loc, sur], axis=-1)
    joi = _silu(joi * p["s_joi"] + p["b_joi"])
    red = jnp.einsum("bhwc,cd->bhwd", joi, p["w_red"])
    red = _silu(red * p["s_red"] + p["b_red"])
    g = red.mean(axis=(1, 2))
    h = jnp.maximum(g @ p["w_fc1"] + p["b_fc1"], 0.0)
    s = jax.nn.sigmoid(h @ p["w_fc2"] + p["b_fc2"])
    out = red * s[:, None, None, :]
    return jnp.transpose(out, (0, 3, 1, 2))


# --------------------------------------------------------------------------
if __name__ == "__main__":
    B, nIn, H, W = 2, 4, 16, 16
    nOut, reduction = 32, 16        # nOut // reduction = 2 (FGlo hidden dim)

    key = jax.random.PRNGKey(0)
    kx, kp = jax.random.split(key)
    x = jax.random.normal(kx, (B, nIn, H, W), jnp.float32)   # NCHW like torch
    params = init_params(kp, nIn, nOut, reduction)

    fwd = jax.jit(context_guided_block_down)
    out = jax.block_until_ready(fwd(x, params))
    assert out.shape == (B, nOut, H // 2, W // 2), out.shape

    ref = reference(x, params, nOut)
    err = float(jnp.max(jnp.abs(out - ref)))
    ref_scale = float(jnp.max(jnp.abs(ref)))
    # bf16 MXU operands + bf16 intermediate vs f32 reference -> relative check.
    assert err <= 5e-2 * max(1.0, ref_scale), (err, ref_scale)

    print("KERNEL_OK")
</pallas_src>

<mosaic_0001>
module attributes {stable_mosaic.version = 11 : i64} {
  func.func @_conv3x3s2_kernel(%arg0: i32, %arg1: i32, %arg2: memref<1x8x8x36xbf16, #tpu.memory_space<vmem>>, %arg3: memref<36x32xbf16, #tpu.memory_space<vmem>>, %arg4: memref<1x32xf32, #tpu.memory_space<vmem>>, %arg5: memref<1x8x8x32xbf16, #tpu.memory_space<vmem>>) attributes {dimension_semantics = [#tpu.dimension_semantics<parallel>, #tpu.dimension_semantics<parallel>], iteration_bounds = array<i64: 2, 1>, scalar_prefetch = 0 : i64, scratch_operands = 0 : i64, tpu.core_type = #tpu.core_type<tc>, window_params = [{transform_indices = @transform_0, window_bounds = array<i64: 1, 8, 8, 36>}, {pipeline_mode = #tpu.pipeline_mode<synchronous>, transform_indices = @transform_1, window_bounds = array<i64: 36, 32>}, {pipeline_mode = #tpu.pipeline_mode<synchronous>, transform_indices = @transform_2, window_bounds = array<i64: 1, 32>}, {transform_indices = @transform_3, window_bounds = array<i64: 1, 8, 8, 32>}]} {
    %c0 = arith.constant 0 : index
    %c0_0 = arith.constant 0 : index
    %c0_1 = arith.constant 0 : index
    %c0_2 = arith.constant 0 : index
    %0 = vector.load %arg2[%c0, %c0_0, %c0_1, %c0_2] : memref<1x8x8x36xbf16, #tpu.memory_space<vmem>>, vector<1x8x8x36xbf16>
    %1 = vector.shape_cast %0 : vector<1x8x8x36xbf16> to vector<8x8x36xbf16>
    %2 = vector.shape_cast %1 : vector<8x8x36xbf16> to vector<64x36xbf16>
    %c0_3 = arith.constant 0 : index
    %c0_4 = arith.constant 0 : index
    %3 = vector.load %arg3[%c0_3, %c0_4] : memref<36x32xbf16, #tpu.memory_space<vmem>>, vector<36x32xbf16>
    %cst = arith.constant dense<0.000000e+00> : vector<64x32xf32>
    %4 = tpu.matmul %2, %3, %cst {dimension_numbers = #tpu.dot_dimension_numbers<[1], [0], [0], [1], [0, 0, 1, 1], [], []>} : vector<64x36xbf16>, vector<36x32xbf16>, vector<64x32xf32> -> vector<64x32xf32>
    %c0_5 = arith.constant 0 : index
    %c0_6 = arith.constant 0 : index
    %5 = vector.load %arg4[%c0_5, %c0_6] : memref<1x32xf32, #tpu.memory_space<vmem>>, vector<1x32xf32>
    %6 = vector.broadcast %5 : vector<1x32xf32> to vector<64x32xf32>
    %7 = arith.addf %4, %6 : vector<64x32xf32>
    %8 = arith.negf %7 : vector<64x32xf32>
    %9 = math.exp %8 : vector<64x32xf32>
    %cst_7 = arith.constant 1.000000e+00 : f32
    %10 = vector.broadcast %cst_7 : f32 to vector<64x32xf32>
    %11 = arith.addf %10, %9 : vector<64x32xf32>
    %12 = arith.divf %10, %11 : vector<64x32xf32>
    %13 = arith.mulf %7, %12 : vector<64x32xf32>
    %14 = arith.truncf %13 : vector<64x32xf32> to vector<64x32xbf16>
    %15 = vector.shape_cast %14 : vector<64x32xbf16> to vector<8x8x32xbf16>
    %c0_8 = arith.constant 0 : index
    %c0_9 = arith.constant 0 : index
    %c0_10 = arith.constant 0 : index
    %c0_11 = arith.constant 0 : index
    %16 = vector.load %arg5[%c0_8, %c0_9, %c0_10, %c0_11] : memref<1x8x8x32xbf16, #tpu.memory_space<vmem>>, vector<1x8x8x32xbf16>
    %17 = vector.shape_cast %16 : vector<1x8x8x32xbf16> to vector<8x8x32xbf16>
    %18 = vector.shape_cast %15 : vector<8x8x32xbf16> to vector<1x8x8x32xbf16>
    tpu.vector_store %arg5[%c0_8, %c0_9, %c0_10, %c0_11], %18 {strides = array<i32>} : memref<1x8x8x32xbf16, #tpu.memory_space<vmem>>, vector<1x8x8x32xbf16>,
    return
  }
  func.func @transform_0(%arg0: i32, %arg1: i32) -> (i32, i32, i32, i32) {
    %c0_i32 = arith.constant 0 : i32
    %c0_i32_0 = arith.constant 0 : i32
    %c0_i32_1 = arith.constant 0 : i32
    return %arg0, %arg1, %c0_i32, %c0_i32_0 : i32, i32, i32, i32
  }
  func.func @transform_1(%arg0: i32, %arg1: i32) -> (i32, i32) {
    %c0_i32 = arith.constant 0 : i32
    %c0_i32_0 = arith.constant 0 : i32
    %c0_i32_1 = arith.constant 0 : i32
    return %c0_i32, %c0_i32_0 : i32, i32
  }
  func.func @transform_2(%arg0: i32, %arg1: i32) -> (i32, i32) {
    %c0_i32 = arith.constant 0 : i32
    %c0_i32_0 = arith.constant 0 : i32
    %c0_i32_1 = arith.constant 0 : i32
    return %c0_i32, %c0_i32_0 : i32, i32
  }
  func.func @transform_3(%arg0: i32, %arg1: i32) -> (i32, i32, i32, i32) {
    %c0_i32 = arith.constant 0 : i32
    %c0_i32_0 = arith.constant 0 : i32
    %c0_i32_1 = arith.constant 0 : i32
    return %arg0, %arg1, %c0_i32, %c0_i32_0 : i32, i32, i32, i32
  }
}

module attributes {stable_mosaic.version = 11 : i64} {
  func.func @_cgb_fused_kernel(%arg0: i32, %arg1: i32, %arg2: i32, %arg3: memref<1x8x8x32xbf16, #tpu.memory_space<vmem>>, %arg4: memref<1x8x8x32xbf16, #tpu.memory_space<vmem>>, %arg5: memref<1x8x8x32xbf16, #tpu.memory_space<vmem>>, %arg6: memref<9x32xf32, #tpu.memory_space<vmem>>, %arg7: memref<1x32xf32, #tpu.memory_space<vmem>>, %arg8: memref<9x32xf32, #tpu.memory_space<vmem>>, %arg9: memref<1x32xf32, #tpu.memory_space<vmem>>, %arg10: memref<32x32xbf16, #tpu.memory_space<vmem>>, %arg11: memref<32x32xbf16, #tpu.memory_space<vmem>>, %arg12: memref<1x32xf32, #tpu.memory_space<vmem>>, %arg13: memref<32x2xf32, #tpu.memory_space<vmem>>, %arg14: memref<1x2xf32, #tpu.memory_space<vmem>>, %arg15: memref<2x32xf32, #tpu.memory_space<vmem>>, %arg16: memref<1x32xf32, #tpu.memory_space<vmem>>, %arg17: memref<1x8x8x32xf32, #tpu.memory_space<vmem>>, %arg18: memref<12x12x32xf32, #tpu.memory_space<vmem>>, %arg19: memref<8x8x32xf32, #tpu.memory_space<vmem>>, %arg20: memref<1x32xf32, #tpu.memory_space<vmem>>, %arg21: memref<1x32xf32, #tpu.memory_space<vmem>>) attributes {dimension_semantics = [#tpu.dimension_semantics<parallel>, #tpu.dimension_semantics<arbitrary>, #tpu.dimension_semantics<arbitrary>], iteration_bounds = array<i64: 2, 2, 1>, scalar_prefetch = 0 : i64, scratch_operands = 4 : i64, tpu.core_type = #tpu.core_type<tc>, window_params = [{transform_indices = @transform_0, window_bounds = array<i64: 1, 8, 8, 32>}, {transform_indices = @transform_1, window_bounds = array<i64: 1, 8, 8, 32>}, {transform_indices = @transform_2, window_bounds = array<i64: 1, 8, 8, 32>}, {pipeline_mode = #tpu.pipeline_mode<synchronous>, transform_indices = @transform_3, window_bounds = array<i64: 9, 32>}, {pipeline_mode = #tpu.pipeline_mode<synchronous>, transform_indices = @transform_4, window_bounds = array<i64: 1, 32>}, {pipeline_mode = #tpu.pipeline_mode<synchronous>, transform_indices = @transform_5, window_bounds = array<i64: 9, 32>}, {pipeline_mode = #tpu.pipeline_mode<synchronous>, transform_indices = @transform_6, window_bounds = array<i64: 1, 32>}, {pipeline_mode = #tpu.pipeline_mode<synchronous>, transform_indices = @transform_7, window_bounds = array<i64: 32, 32>}, {pipeline_mode = #tpu.pipeline_mode<synchronous>, transform_indices = @transform_8, window_bounds = array<i64: 32, 32>}, {pipeline_mode = #tpu.pipeline_mode<synchronous>, transform_indices = @transform_9, window_bounds = array<i64: 1, 32>}, {pipeline_mode = #tpu.pipeline_mode<synchronous>, transform_indices = @transform_10, window_bounds = array<i64: 32, 2>}, {pipeline_mode = #tpu.pipeline_mode<synchronous>, transform_indices = @transform_11, window_bounds = array<i64: 1, 2>}, {pipeline_mode = #tpu.pipeline_mode<synchronous>, transform_indices = @transform_12, window_bounds = array<i64: 2, 32>}, {pipeline_mode = #tpu.pipeline_mode<synchronous>, transform_indices = @transform_13, window_bounds = array<i64: 1, 32>}, {transform_indices = @transform_14, window_bounds = array<i64: 1, 8, 8, 32>}]} {
    %c0_i32 = arith.constant 0 : i32
    %0 = arith.cmpi eq, %arg1, %c0_i32 : i32
    %1 = arith.extui %0 : i1 to i32
    %c0_i32_0 = arith.constant 0 : i32
    %2 = arith.cmpi ne, %1, %c0_i32_0 : i32
    scf.if %2 {
      %c0_i32_2 = arith.constant 0 : i32
      %6 = arith.cmpi eq, %arg2, %c0_i32_2 : i32
      %7 = arith.extui %6 : i1 to i32
      %c0_i32_3 = arith.constant 0 : i32
      %8 = arith.cmpi ne, %7, %c0_i32_3 : i32
      scf.if %8 {
        %cst_52 = arith.constant 0.000000e+00 : f32
        %203 = vector.broadcast %cst_52 : f32 to vector<1x32xf32>
        %c0_53 = arith.constant 0 : index
        %c0_54 = arith.constant 0 : index
        %204 = vector.load %arg20[%c0_53, %c0_54] : memref<1x32xf32, #tpu.memory_space<vmem>>, vector<1x32xf32>
        tpu.vector_store %arg20[%c0_53, %c0_54], %203 {strides = array<i32>} : memref<1x32xf32, #tpu.memory_space<vmem>>, vector<1x32xf32>,
        %cst_55 = arith.constant 0.000000e+00 : f32
        %205 = vector.broadcast %cst_55 : f32 to vector<12x2x32xf32>
        %c0_56 = arith.constant 0 : index
        %c0_57 = arith.constant 0 : index
        %c0_58 = arith.constant 0 : index
        %206 = vector.load %arg18[%c0_56, %c0_57, %c0_58] : memref<12x12x32xf32, #tpu.memory_space<vmem>>, vector<12x2x32xf32>
        tpu.vector_store %arg18[%c0_56, %c0_57, %c0_58], %205 {strides = array<i32>} : memref<12x12x32xf32, #tpu.memory_space<vmem>>, vector<12x2x32xf32>,
        %cst_59 = arith.constant 0.000000e+00 : f32
        %207 = vector.broadcast %cst_59 : f32 to vector<12x2x32xf32>
        %c0_60 = arith.constant 0 : index
        %c10 = arith.constant 10 : index
        %c0_61 = arith.constant 0 : index
        %208 = vector.load %arg18[%c0_60, %c10, %c0_61] : memref<12x12x32xf32, #tpu.memory_space<vmem>>, vector<12x2x32xf32>
        tpu.vector_store %arg18[%c0_60, %c10, %c0_61], %207 {strides = array<i32>} : memref<12x12x32xf32, #tpu.memory_space<vmem>>, vector<12x2x32xf32>,
      } else {
      }
      %c0 = arith.constant 0 : index
      %c0_4 = arith.constant 0 : index
      %c0_5 = arith.constant 0 : index
      %c0_6 = arith.constant 0 : index
      %9 = vector.load %arg3[%c0, %c0_4, %c0_5, %c0_6] : memref<1x8x8x32xbf16, #tpu.memory_space<vmem>>, vector<1x8x8x32xbf16>
      %10 = vector.shape_cast %9 : vector<1x8x8x32xbf16> to vector<8x8x32xbf16>
      %11 = arith.extf %10 : vector<8x8x32xbf16> to vector<8x8x32xf32>
      %c2 = arith.constant 2 : index
      %c2_7 = arith.constant 2 : index
      %c0_8 = arith.constant 0 : index
      %12 = vector.load %arg18[%c2, %c2_7, %c0_8] : memref<12x12x32xf32, #tpu.memory_space<vmem>>, vector<8x8x32xf32>
      tpu.vector_store %arg18[%c2, %c2_7, %c0_8], %11 {strides = array<i32>} : memref<12x12x32xf32, #tpu.memory_space<vmem>>, vector<8x8x32xf32>,
      %c0_i32_9 = arith.constant 0 : i32
      %13 = arith.cmpi eq, %arg2, %c0_i32_9 : i32
      %14 = arith.extui %13 : i1 to i32
      %c0_i32_10 = arith.constant 0 : i32
      %15 = arith.cmpi ne, %14, %c0_i32_10 : i32
      scf.if %15 {
        %cst_52 = arith.constant 0.000000e+00 : f32
        %203 = vector.broadcast %cst_52 : f32 to vector<2x8x32xf32>
        %c0_53 = arith.constant 0 : index
        %c2_54 = arith.constant 2 : index
        %c0_55 = arith.constant 0 : index
        %204 = vector.load %arg18[%c0_53, %c2_54, %c0_55] : memref<12x12x32xf32, #tpu.memory_space<vmem>>, vector<2x8x32xf32>
        tpu.vector_store %arg18[%c0_53, %c2_54, %c0_55], %203 {strides = array<i32>} : memref<12x12x32xf32, #tpu.memory_space<vmem>>, vector<2x8x32xf32>,
      } else {
      }
      %c0_i32_11 = arith.constant 0 : i32
      %16 = arith.cmpi eq, %arg2, %c0_i32_11 : i32
      %17 = arith.extui %16 : i1 to i32
      %c0_i32_12 = arith.constant 0 : i32
      %18 = arith.cmpi ne, %17, %c0_i32_12 : i32
      scf.if %18 {
        %cst_52 = arith.constant 0.000000e+00 : f32
        %203 = vector.broadcast %cst_52 : f32 to vector<2x8x32xf32>
        %c10 = arith.constant 10 : index
        %c2_53 = arith.constant 2 : index
        %c0_54 = arith.constant 0 : index
        %204 = vector.load %arg18[%c10, %c2_53, %c0_54] : memref<12x12x32xf32, #tpu.memory_space<vmem>>, vector<2x8x32xf32>
        tpu.vector_store %arg18[%c10, %c2_53, %c0_54], %203 {strides = array<i32>} : memref<12x12x32xf32, #tpu.memory_space<vmem>>, vector<2x8x32xf32>,
      } else {
      }
      %c0_13 = arith.constant 0 : index
      %c0_14 = arith.constant 0 : index
      %c0_15 = arith.constant 0 : index
      %19 = vector.load %arg18[%c0_13, %c0_14, %c0_15] : memref<12x12x32xf32, #tpu.memory_space<vmem>>, vector<12x8x32xf32>
      %c0_16 = arith.constant 0 : index
      %c1 = arith.constant 1 : index
      %c0_17 = arith.constant 0 : index
      %20 = vector.load %arg18[%c0_16, %c1, %c0_17] : memref<12x12x32xf32, #tpu.memory_space<vmem>>, vector<12x8x32xf32>
      %c0_18 = arith.constant 0 : index
      %c2_19 = arith.constant 2 : index
      %c0_20 = arith.constant 0 : index
      %21 = vector.load %arg18[%c0_18, %c2_19, %c0_20] : memref<12x12x32xf32, #tpu.memory_space<vmem>>, vector<12x8x32xf32>
      %c0_21 = arith.constant 0 : index
      %c3 = arith.constant 3 : index
      %c0_22 = arith.constant 0 : index
      %22 = vector.load %arg18[%c0_21, %c3, %c0_22] : memref<12x12x32xf32, #tpu.memory_space<vmem>>, vector<12x8x32xf32>
      %c0_23 = arith.constant 0 : index
      %c4 = arith.constant 4 : index
      %c0_24 = arith.constant 0 : index
      %23 = vector.load %arg18[%c0_23, %c4, %c0_24] : memref<12x12x32xf32, #tpu.memory_space<vmem>>, vector<12x8x32xf32>
      %c0_25 = arith.constant 0 : index
      %c0_26 = arith.constant 0 : index
      %24 = vector.load %arg6[%c0_25, %c0_26] : memref<9x32xf32, #tpu.memory_space<vmem>>, vector<9x32xf32>
      %cst = arith.constant 0.000000e+00 : f32
      %25 = vector.broadcast %cst : f32 to vector<8x8x32xf32>
      %26 = vector.extract_strided_slice %20 {offsets = [1, 0, 0], sizes = [8, 8, 32], strides = [1, 1, 1]} : vector<12x8x32xf32> to vector<8x8x32xf32>
      %27 = vector.extract_strided_slice %24 {offsets = [0, 0], sizes = [1, 32], strides = [1, 1]} : vector<9x32xf32> to vector<1x32xf32>
      %28 = vector.shape_cast %27 : vector<1x32xf32> to vector<32xf32>
      %29 = vector.shape_cast %28 : vector<32xf32> to vector<1x1x32xf32>
      %30 = vector.broadcast %29 : vector<1x1x32xf32> to vector<8x8x32xf32>
      %31 = arith.mulf %26, %30 : vector<8x8x32xf32>
      %32 = arith.addf %25, %31 : vector<8x8x32xf32>
      %33 = vector.extract_strided_slice %21 {offsets = [1, 0, 0], sizes = [8, 8, 32], strides = [1, 1, 1]} : vector<12x8x32xf32> to vector<8x8x32xf32>
      %34 = vector.extract_strided_slice %24 {offsets = [1, 0], sizes = [1, 32], strides = [1, 1]} : vector<9x32xf32> to vector<1x32xf32>
      %35 = vector.shape_cast %34 : vector<1x32xf32> to vector<32xf32>
      %36 = vector.shape_cast %35 : vector<32xf32> to vector<1x1x32xf32>
      %37 = vector.broadcast %36 : vector<1x1x32xf32> to vector<8x8x32xf32>
      %38 = arith.mulf %33, %37 : vector<8x8x32xf32>
      %39 = arith.addf %32, %38 : vector<8x8x32xf32>
      %40 = vector.extract_strided_slice %22 {offsets = [1, 0, 0], sizes = [8, 8, 32], strides = [1, 1, 1]} : vector<12x8x32xf32> to vector<8x8x32xf32>
      %41 = vector.extract_strided_slice %24 {offsets = [2, 0], sizes = [1, 32], strides = [1, 1]} : vector<9x32xf32> to vector<1x32xf32>
      %42 = vector.shape_cast %41 : vector<1x32xf32> to vector<32xf32>
      %43 = vector.shape_cast %42 : vector<32xf32> to vector<1x1x32xf32>
      %44 = vector.broadcast %43 : vector<1x1x32xf32> to vector<8x8x32xf32>
      %45 = arith.mulf %40, %44 : vector<8x8x32xf32>
      %46 = arith.addf %39, %45 : vector<8x8x32xf32>
      %47 = vector.extract_strided_slice %20 {offsets = [2, 0, 0], sizes = [8, 8, 32], strides = [1, 1, 1]} : vector<12x8x32xf32> to vector<8x8x32xf32>
      %48 = vector.extract_strided_slice %24 {offsets = [3, 0], sizes = [1, 32], strides = [1, 1]} : vector<9x32xf32> to vector<1x32xf32>
      %49 = vector.shape_cast %48 : vector<1x32xf32> to vector<32xf32>
      %50 = vector.shape_cast %49 : vector<32xf32> to vector<1x1x32xf32>
      %51 = vector.broadcast %50 : vector<1x1x32xf32> to vector<8x8x32xf32>
      %52 = arith.mulf %47, %51 : vector<8x8x32xf32>
      %53 = arith.addf %46, %52 : vector<8x8x32xf32>
      %54 = vector.extract_strided_slice %21 {offsets = [2, 0, 0], sizes = [8, 8, 32], strides = [1, 1, 1]} : vector<12x8x32xf32> to vector<8x8x32xf32>
      %55 = vector.extract_strided_slice %24 {offsets = [4, 0], sizes = [1, 32], strides = [1, 1]} : vector<9x32xf32> to vector<1x32xf32>
      %56 = vector.shape_cast %55 : vector<1x32xf32> to vector<32xf32>
      %57 = vector.shape_cast %56 : vector<32xf32> to vector<1x1x32xf32>
      %58 = vector.broadcast %57 : vector<1x1x32xf32> to vector<8x8x32xf32>
      %59 = arith.mulf %54, %58 : vector<8x8x32xf32>
      %60 = arith.addf %53, %59 : vector<8x8x32xf32>
      %61 = vector.extract_strided_slice %22 {offsets = [2, 0, 0], sizes = [8, 8, 32], strides = [1, 1, 1]} : vector<12x8x32xf32> to vector<8x8x32xf32>
      %62 = vector.extract_strided_slice %24 {offsets = [5, 0], sizes = [1, 32], strides = [1, 1]} : vector<9x32xf32> to vector<1x32xf32>
      %63 = vector.shape_cast %62 : vector<1x32xf32> to vector<32xf32>
      %64 = vector.shape_cast %63 : vector<32xf32> to vector<1x1x32xf32>
      %65 = vector.broadcast %64 : vector<1x1x32xf32> to vector<8x8x32xf32>
      %66 = arith.mulf %61, %65 : vector<8x8x32xf32>
      %67 = arith.addf %60, %66 : vector<8x8x32xf32>
      %68 = vector.extract_strided_slice %20 {offsets = [3, 0, 0], sizes = [8, 8, 32], strides = [1, 1, 1]} : vector<12x8x32xf32> to vector<8x8x32xf32>
      %69 = vector.extract_strided_slice %24 {offsets = [6, 0], sizes = [1, 32], strides = [1, 1]} : vector<9x32xf32> to vector<1x32xf32>
      %70 = vector.shape_cast %69 : vector<1x32xf32> to vector<32xf32>
      %71 = vector.shape_cast %70 : vector<32xf32> to vector<1x1x32xf32>
      %72 = vector.broadcast %71 : vector<1x1x32xf32> to vector<8x8x32xf32>
      %73 = arith.mulf %68, %72 : vector<8x8x32xf32>
      %74 = arith.addf %67, %73 : vector<8x8x32xf32>
      %75 = vector.extract_strided_slice %21 {offsets = [3, 0, 0], sizes = [8, 8, 32], strides = [1, 1, 1]} : vector<12x8x32xf32> to vector<8x8x32xf32>
      %76 = vector.extract_strided_slice %24 {offsets = [7, 0], sizes = [1, 32], strides = [1, 1]} : vector<9x32xf32> to vector<1x32xf32>
      %77 = vector.shape_cast %76 : vector<1x32xf32> to vector<32xf32>
      %78 = vector.shape_cast %77 : vector<32xf32> to vector<1x1x32xf32>
      %79 = vector.broadcast %78 : vector<1x1x32xf32> to vector<8x8x32xf32>
      %80 = arith.mulf %75, %79 : vector<8x8x32xf32>
      %81 = arith.addf %74, %80 : vector<8x8x32xf32>
      %82 = vector.extract_strided_slice %22 {offsets = [3, 0, 0], sizes = [8, 8, 32], strides = [1, 1, 1]} : vector<12x8x32xf32> to vector<8x8x32xf32>
      %83 = vector.extract_strided_slice %24 {offsets = [8, 0], sizes = [1, 32], strides = [1, 1]} : vector<9x32xf32> to vector<1x32xf32>
      %84 = vector.shape_cast %83 : vector<1x32xf32> to vector<32xf32>
      %85 = vector.shape_cast %84 : vector<32xf32> to vector<1x1x32xf32>
      %86 = vector.broadcast %85 : vector<1x1x32xf32> to vector<8x8x32xf32>
      %87 = arith.mulf %82, %86 : vector<8x8x32xf32>
      %88 = arith.addf %81, %87 : vector<8x8x32xf32>
      %c0_27 = arith.constant 0 : index
      %c0_28 = arith.constant 0 : index
      %89 = vector.load %arg7[%c0_27, %c0_28] : memref<1x32xf32, #tpu.memory_space<vmem>>, vector<1x32xf32>
      %90 = vector.shape_cast %89 : vector<1x32xf32> to vector<32xf32>
      %91 = vector.shape_cast %90 : vector<32xf32> to vector<1x1x32xf32>
      %92 = vector.broadcast %91 : vector<1x1x32xf32> to vector<8x8x32xf32>
      %93 = arith.addf %88, %92 : vector<8x8x32xf32>
      %94 = arith.negf %93 : vector<8x8x32xf32>
      %95 = math.exp %94 : vector<8x8x32xf32>
      %cst_29 = arith.constant 1.000000e+00 : f32
      %96 = vector.broadcast %cst_29 : f32 to vector<8x8x32xf32>
      %97 = arith.addf %96, %95 : vector<8x8x32xf32>
      %98 = arith.divf %96, %97 : vector<8x8x32xf32>
      %99 = arith.mulf %93, %98 : vector<8x8x32xf32>
      %100 = vector.shape_cast %99 : vector<8x8x32xf32> to vector<64x32xf32>
      %101 = arith.truncf %100 : vector<64x32xf32> to vector<64x32xbf16>
      %c0_30 = arith.constant 0 : index
      %c0_31 = arith.constant 0 : index
      %102 = vector.load %arg10[%c0_30, %c0_31] : memref<32x32xbf16, #tpu.memory_space<vmem>>, vector<32x32xbf16>
      %cst_32 = arith.constant dense<0.000000e+00> : vector<64x32xf32>
      %103 = tpu.matmul %101, %102, %cst_32 {dimension_numbers = #tpu.dot_dimension_numbers<[1], [0], [0], [1], [0, 0, 1, 1], [], []>} : vector<64x32xbf16>, vector<32x32xbf16>, vector<64x32xf32> -> vector<64x32xf32>
      %c0_33 = arith.constant 0 : index
      %c0_34 = arith.constant 0 : index
      %104 = vector.load %arg8[%c0_33, %c0_34] : memref<9x32xf32, #tpu.memory_space<vmem>>, vector<9x32xf32>
      %cst_35 = arith.constant 0.000000e+00 : f32
      %105 = vector.broadcast %cst_35 : f32 to vector<8x8x32xf32>
      %106 = vector.extract_strided_slice %19 {offsets = [0, 0, 0], sizes = [8, 8, 32], strides = [1, 1, 1]} : vector<12x8x32xf32> to vector<8x8x32xf32>
      %107 = vector.extract_strided_slice %104 {offsets = [0, 0], sizes = [1, 32], strides = [1, 1]} : vector<9x32xf32> to vector<1x32xf32>
      %108 = vector.shape_cast %107 : vector<1x32xf32> to vector<32xf32>
      %109 = vector.shape_cast %108 : vector<32xf32> to vector<1x1x32xf32>
      %110 = vector.broadcast %109 : vector<1x1x32xf32> to vector<8x8x32xf32>
      %111 = arith.mulf %106, %110 : vector<8x8x32xf32>
      %112 = arith.addf %105, %111 : vector<8x8x32xf32>
      %113 = vector.extract_strided_slice %21 {offsets = [0, 0, 0], sizes = [8, 8, 32], strides = [1, 1, 1]} : vector<12x8x32xf32> to vector<8x8x32xf32>
      %114 = vector.extract_strided_slice %104 {offsets = [1, 0], sizes = [1, 32], strides = [1, 1]} : vector<9x32xf32> to vector<1x32xf32>
      %115 = vector.shape_cast %114 : vector<1x32xf32> to vector<32xf32>
      %116 = vector.shape_cast %115 : vector<32xf32> to vector<1x1x32xf32>
      %117 = vector.broadcast %116 : vector<1x1x32xf32> to vector<8x8x32xf32>
      %118 = arith.mulf %113, %117 : vector<8x8x32xf32>
      %119 = arith.addf %112, %118 : vector<8x8x32xf32>
      %120 = vector.extract_strided_slice %23 {offsets = [0, 0, 0], sizes = [8, 8, 32], strides = [1, 1, 1]} : vector<12x8x32xf32> to vector<8x8x32xf32>
      %121 = vector.extract_strided_slice %104 {offsets = [2, 0], sizes = [1, 32], strides = [1, 1]} : vector<9x32xf32> to vector<1x32xf32>
      %122 = vector.shape_cast %121 : vector<1x32xf32> to vector<32xf32>
      %123 = vector.shape_cast %122 : vector<32xf32> to vector<1x1x32xf32>
      %124 = vector.broadcast %123 : vector<1x1x32xf32> to vector<8x8x32xf32>
      %125 = arith.mulf %120, %124 : vector<8x8x32xf32>
      %126 = arith.addf %119, %125 : vector<8x8x32xf32>
      %127 = vector.extract_strided_slice %19 {offsets = [2, 0, 0], sizes = [8, 8, 32], strides = [1, 1, 1]} : vector<12x8x32xf32> to vector<8x8x32xf32>
      %128 = vector.extract_strided_slice %104 {offsets = [3, 0], sizes = [1, 32], strides = [1, 1]} : vector<9x32xf32> to vector<1x32xf32>
      %129 = vector.shape_cast %128 : vector<1x32xf32> to vector<32xf32>
      %130 = vector.shape_cast %129 : vector<32xf32> to vector<1x1x32xf32>
      %131 = vector.broadcast %130 : vector<1x1x32xf32> to vector<8x8x32xf32>
      %132 = arith.mulf %127, %131 : vector<8x8x32xf32>
      %133 = arith.addf %126, %132 : vector<8x8x32xf32>
      %134 = vector.extract_strided_slice %21 {offsets = [2, 0, 0], sizes = [8, 8, 32], strides = [1, 1, 1]} : vector<12x8x32xf32> to vector<8x8x32xf32>
      %135 = vector.extract_strided_slice %104 {offsets = [4, 0], sizes = [1, 32], strides = [1, 1]} : vector<9x32xf32> to vector<1x32xf32>
      %136 = vector.shape_cast %135 : vector<1x32xf32> to vector<32xf32>
      %137 = vector.shape_cast %136 : vector<32xf32> to vector<1x1x32xf32>
      %138 = vector.broadcast %137 : vector<1x1x32xf32> to vector<8x8x32xf32>
      %139 = arith.mulf %134, %138 : vector<8x8x32xf32>
      %140 = arith.addf %133, %139 : vector<8x8x32xf32>
      %141 = vector.extract_strided_slice %23 {offsets = [2, 0, 0], sizes = [8, 8, 32], strides = [1, 1, 1]} : vector<12x8x32xf32> to vector<8x8x32xf32>
      %142 = vector.extract_strided_slice %104 {offsets = [5, 0], sizes = [1, 32], strides = [1, 1]} : vector<9x32xf32> to vector<1x32xf32>
      %143 = vector.shape_cast %142 : vector<1x32xf32> to vector<32xf32>
      %144 = vector.shape_cast %143 : vector<32xf32> to vector<1x1x32xf32>
      %145 = vector.broadcast %144 : vector<1x1x32xf32> to vector<8x8x32xf32>
      %146 = arith.mulf %141, %145 : vector<8x8x32xf32>
      %147 = arith.addf %140, %146 : vector<8x8x32xf32>
      %148 = vector.extract_strided_slice %19 {offsets = [4, 0, 0], sizes = [8, 8, 32], strides = [1, 1, 1]} : vector<12x8x32xf32> to vector<8x8x32xf32>
      %149 = vector.extract_strided_slice %104 {offsets = [6, 0], sizes = [1, 32], strides = [1, 1]} : vector<9x32xf32> to vector<1x32xf32>
      %150 = vector.shape_cast %149 : vector<1x32xf32> to vector<32xf32>
      %151 = vector.shape_cast %150 : vector<32xf32> to vector<1x1x32xf32>
      %152 = vector.broadcast %151 : vector<1x1x32xf32> to vector<8x8x32xf32>
      %153 = arith.mulf %148, %152 : vector<8x8x32xf32>
      %154 = arith.addf %147, %153 : vector<8x8x32xf32>
      %155 = vector.extract_strided_slice %21 {offsets = [4, 0, 0], sizes = [8, 8, 32], strides = [1, 1, 1]} : vector<12x8x32xf32> to vector<8x8x32xf32>
      %156 = vector.extract_strided_slice %104 {offsets = [7, 0], sizes = [1, 32], strides = [1, 1]} : vector<9x32xf32> to vector<1x32xf32>
      %157 = vector.shape_cast %156 : vector<1x32xf32> to vector<32xf32>
      %158 = vector.shape_cast %157 : vector<32xf32> to vector<1x1x32xf32>
      %159 = vector.broadcast %158 : vector<1x1x32xf32> to vector<8x8x32xf32>
      %160 = arith.mulf %155, %159 : vector<8x8x32xf32>
      %161 = arith.addf %154, %160 : vector<8x8x32xf32>
      %162 = vector.extract_strided_slice %23 {offsets = [4, 0, 0], sizes = [8, 8, 32], strides = [1, 1, 1]} : vector<12x8x32xf32> to vector<8x8x32xf32>
      %163 = vector.extract_strided_slice %104 {offsets = [8, 0], sizes = [1, 32], strides = [1, 1]} : vector<9x32xf32> to vector<1x32xf32>
      %164 = vector.shape_cast %163 : vector<1x32xf32> to vector<32xf32>
      %165 = vector.shape_cast %164 : vector<32xf32> to vector<1x1x32xf32>
      %166 = vector.broadcast %165 : vector<1x1x32xf32> to vector<8x8x32xf32>
      %167 = arith.mulf %162, %166 : vector<8x8x32xf32>
      %168 = arith.addf %161, %167 : vector<8x8x32xf32>
      %c0_36 = arith.constant 0 : index
      %c0_37 = arith.constant 0 : index
      %169 = vector.load %arg9[%c0_36, %c0_37] : memref<1x32xf32, #tpu.memory_space<vmem>>, vector<1x32xf32>
      %170 = vector.shape_cast %169 : vector<1x32xf32> to vector<32xf32>
      %171 = vector.shape_cast %170 : vector<32xf32> to vector<1x1x32xf32>
      %172 = vector.broadcast %171 : vector<1x1x32xf32> to vector<8x8x32xf32>
      %173 = arith.addf %168, %172 : vector<8x8x32xf32>
      %174 = arith.negf %173 : vector<8x8x32xf32>
      %175 = math.exp %174 : vector<8x8x32xf32>
      %cst_38 = arith.constant 1.000000e+00 : f32
      %176 = vector.broadcast %cst_38 : f32 to vector<8x8x32xf32>
      %177 = arith.addf %176, %175 : vector<8x8x32xf32>
      %178 = arith.divf %176, %177 : vector<8x8x32xf32>
      %179 = arith.mulf %173, %178 : vector<8x8x32xf32>
      %180 = vector.shape_cast %179 : vector<8x8x32xf32> to vector<64x32xf32>
      %181 = arith.truncf %180 : vector<64x32xf32> to vector<64x32xbf16>
      %c0_39 = arith.constant 0 : index
      %c0_40 = arith.constant 0 : index
      %182 = vector.load %arg11[%c0_39, %c0_40] : memref<32x32xbf16, #tpu.memory_space<vmem>>, vector<32x32xbf16>
      %cst_41 = arith.constant dense<0.000000e+00> : vector<64x32xf32>
      %183 = tpu.matmul %181, %182, %cst_41 {dimension_numbers = #tpu.dot_dimension_numbers<[1], [0], [0], [1], [0, 0, 1, 1], [], []>} : vector<64x32xbf16>, vector<32x32xbf16>, vector<64x32xf32> -> vector<64x32xf32>
      %184 = arith.addf %103, %183 : vector<64x32xf32>
      %c0_42 = arith.constant 0 : index
      %c0_43 = arith.constant 0 : index
      %185 = vector.load %arg12[%c0_42, %c0_43] : memref<1x32xf32, #tpu.memory_space<vmem>>, vector<1x32xf32>
      %186 = vector.broadcast %185 : vector<1x32xf32> to vector<64x32xf32>
      %187 = arith.addf %184, %186 : vector<64x32xf32>
      %188 = arith.negf %187 : vector<64x32xf32>
      %189 = math.exp %188 : vector<64x32xf32>
      %cst_44 = arith.constant 1.000000e+00 : f32
      %190 = vector.broadcast %cst_44 : f32 to vector<64x32xf32>
      %191 = arith.addf %190, %189 : vector<64x32xf32>
      %192 = arith.divf %190, %191 : vector<64x32xf32>
      %193 = arith.mulf %187, %192 : vector<64x32xf32>
      %c0_45 = arith.constant 0 : index
      %c0_46 = arith.constant 0 : index
      %194 = vector.load %arg20[%c0_45, %c0_46] : memref<1x32xf32, #tpu.memory_space<vmem>>, vector<1x32xf32>
      %cst_47 = arith.constant dense<0.000000e+00> : vector<32xf32>
      %195 = vector.multi_reduction <add>, %193, %cst_47 [0] : vector<64x32xf32> to vector<32xf32>
      %196 = vector.shape_cast %195 : vector<32xf32> to vector<1x32xf32>
      %197 = arith.addf %194, %196 : vector<1x32xf32>
      %c0_48 = arith.constant 0 : index
      %c0_49 = arith.constant 0 : index
      %198 = vector.load %arg20[%c0_48, %c0_49] : memref<1x32xf32, #tpu.memory_space<vmem>>, vector<1x32xf32>
      tpu.vector_store %arg20[%c0_48, %c0_49], %197 {strides = array<i32>} : memref<1x32xf32, #tpu.memory_space<vmem>>, vector<1x32xf32>,
      %199 = vector.shape_cast %193 : vector<64x32xf32> to vector<8x8x32xf32>
      %c8_i32 = arith.constant 8 : i32
      %200 = arith.muli %arg2, %c8_i32 : i32
      %201 = arith.index_cast %200 : i32 to index
      %c0_50 = arith.constant 0 : index
      %c0_51 = arith.constant 0 : index
      %202 = vector.load %arg19[%201, %c0_50, %c0_51] : memref<8x8x32xf32, #tpu.memory_space<vmem>>, vector<8x8x32xf32>
      tpu.vector_store %arg19[%201, %c0_50, %c0_51], %199 {strides = array<i32>} : memref<8x8x32xf32, #tpu.memory_space<vmem>>, vector<8x8x32xf32>,
    } else {
    }
    %c1_i32 = arith.constant 1 : i32
    %3 = arith.cmpi eq, %arg1, %c1_i32 : i32
    %4 = arith.extui %3 : i1 to i32
    %c0_i32_1 = arith.constant 0 : i32
    %5 = arith.cmpi ne, %4, %c0_i32_1 : i32
    scf.if %5 {
      %c0_i32_2 = arith.constant 0 : i32
      %6 = arith.cmpi eq, %arg2, %c0_i32_2 : i32
      %7 = arith.extui %6 : i1 to i32
      %c0_i32_3 = arith.constant 0 : i32
      %8 = arith.cmpi ne, %7, %c0_i32_3 : i32
      scf.if %8 {
        %c0_11 = arith.constant 0 : index
        %c0_12 = arith.constant 0 : index
        %20 = vector.load %arg20[%c0_11, %c0_12] : memref<1x32xf32, #tpu.memory_space<vmem>>, vector<1x32xf32>
        %cst = arith.constant 1.562500e-02 : f32
        %21 = vector.broadcast %cst : f32 to vector<1x32xf32>
        %22 = arith.mulf %20, %21 : vector<1x32xf32>
        %c0_13 = arith.constant 0 : index
        %c0_14 = arith.constant 0 : index
        %23 = vector.load %arg13[%c0_13, %c0_14] : memref<32x2xf32, #tpu.memory_space<vmem>>, vector<32x2xf32>
        %cst_15 = arith.constant dense<0.000000e+00> : vector<1x2xf32>
        %24 = tpu.matmul %22, %23, %cst_15 {dimension_numbers = #tpu.dot_dimension_numbers<[1], [0], [0], [1], [0, 0, 1, 1], [], []>} : vector<1x32xf32>, vector<32x2xf32>, vector<1x2xf32> -> vector<1x2xf32>
        %c0_16 = arith.constant 0 : index
        %c0_17 = arith.constant 0 : index
        %25 = vector.load %arg14[%c0_16, %c0_17] : memref<1x2xf32, #tpu.memory_space<vmem>>, vector<1x2xf32>
        %26 = arith.addf %24, %25 : vector<1x2xf32>
        %cst_18 = arith.constant 0.000000e+00 : f32
        %27 = vector.broadcast %cst_18 : f32 to vector<1x2xf32>
        %28 = arith.maximumf %26, %27 : vector<1x2xf32>
        %c0_19 = arith.constant 0 : index
        %c0_20 = arith.constant 0 : index
        %29 = vector.load %arg15[%c0_19, %c0_20] : memref<2x32xf32, #tpu.memory_space<vmem>>, vector<2x32xf32>
        %cst_21 = arith.constant dense<0.000000e+00> : vector<1x32xf32>
        %30 = tpu.matmul %28, %29, %cst_21 {dimension_numbers = #tpu.dot_dimension_numbers<[1], [0], [0], [1], [0, 0, 1, 1], [], []>} : vector<1x2xf32>, vector<2x32xf32>, vector<1x32xf32> -> vector<1x32xf32>
        %c0_22 = arith.constant 0 : index
        %c0_23 = arith.constant 0 : index
        %31 = vector.load %arg16[%c0_22, %c0_23] : memref<1x32xf32, #tpu.memory_space<vmem>>, vector<1x32xf32>
        %32 = arith.addf %30, %31 : vector<1x32xf32>
        %33 = arith.negf %32 : vector<1x32xf32>
        %34 = math.exp %33 : vector<1x32xf32>
        %cst_24 = arith.constant 1.000000e+00 : f32
        %35 = vector.broadcast %cst_24 : f32 to vector<1x32xf32>
        %36 = arith.addf %35, %34 : vector<1x32xf32>
        %37 = arith.divf %35, %36 : vector<1x32xf32>
        %c0_25 = arith.constant 0 : index
        %c0_26 = arith.constant 0 : index
        %38 = vector.load %arg21[%c0_25, %c0_26] : memref<1x32xf32, #tpu.memory_space<vmem>>, vector<1x32xf32>
        tpu.vector_store %arg21[%c0_25, %c0_26], %37 {strides = array<i32>} : memref<1x32xf32, #tpu.memory_space<vmem>>, vector<1x32xf32>,
      } else {
      }
      %c8_i32 = arith.constant 8 : i32
      %9 = arith.muli %arg2, %c8_i32 : i32
      %10 = arith.index_cast %9 : i32 to index
      %c0 = arith.constant 0 : index
      %c0_4 = arith.constant 0 : index
      %11 = vector.load %arg19[%10, %c0, %c0_4] : memref<8x8x32xf32, #tpu.memory_space<vmem>>, vector<8x8x32xf32>
      %c0_5 = arith.constant 0 : index
      %c0_6 = arith.constant 0 : index
      %12 = vector.load %arg21[%c0_5, %c0_6] : memref<1x32xf32, #tpu.memory_space<vmem>>, vector<1x32xf32>
      %13 = vector.shape_cast %12 : vector<1x32xf32> to vector<32xf32>
      %14 = vector.shape_cast %13 : vector<32xf32> to vector<1x1x32xf32>
      %15 = vector.broadcast %14 : vector<1x1x32xf32> to vector<8x8x32xf32>
      %16 = arith.mulf %11, %15 : vector<8x8x32xf32>
      %c0_7 = arith.constant 0 : index
      %c0_8 = arith.constant 0 : index
      %c0_9 = arith.constant 0 : index
      %c0_10 = arith.constant 0 : index
      %17 = vector.load %arg17[%c0_7, %c0_8, %c0_9, %c0_10] : memref<1x8x8x32xf32, #tpu.memory_space<vmem>>, vector<1x8x8x32xf32>
      %18 = vector.shape_cast %17 : vector<1x8x8x32xf32> to vector<8x8x32xf32>
      %19 = vector.shape_cast %16 : vector<8x8x32xf32> to vector<1x8x8x32xf32>
      tpu.vector_store %arg17[%c0_7, %c0_8, %c0_9, %c0_10], %19 {strides = array<i32>} : memref<1x8x8x32xf32, #tpu.memory_space<vmem>>, vector<1x8x8x32xf32>,
    } else {
    }
    return
  }
  func.func @transform_0(%arg0: i32, %arg1: i32, %arg2: i32) -> (i32, i32, i32, i32) {
    %c1_i32 = arith.constant 1 : i32
    %0 = arith.subi %c1_i32, %arg1 : i32
    %1 = arith.muli %arg2, %0 : i32
    %c0_i32 = arith.constant 0 : i32
    %c0_i32_0 = arith.constant 0 : i32
    %c0_i32_1 = arith.constant 0 : i32
    return %arg0, %1, %c0_i32, %c0_i32_0 : i32, i32, i32, i32
  }
  func.func @transform_1(%arg0: i32, %arg1: i32, %arg2: i32) -> (i32, i32, i32, i32) {
    %c1_i32 = arith.constant 1 : i32
    %0 = arith.subi %arg2, %c1_i32 : i32
    %c0_i32 = arith.constant 0 : i32
    %1 = arith.maxsi %0, %c0_i32 : i32
    %c1_i32_0 = arith.constant 1 : i32
    %2 = arith.subi %c1_i32_0, %arg1 : i32
    %3 = arith.muli %1, %2 : i32
    %c0_i32_1 = arith.constant 0 : i32
    %c0_i32_2 = arith.constant 0 : i32
    %c0_i32_3 = arith.constant 0 : i32
    return %arg0, %3, %c0_i32_1, %c0_i32_2 : i32, i32, i32, i32
  }
  func.func @transform_2(%arg0: i32, %arg1: i32, %arg2: i32) -> (i32, i32, i32, i32) {
    %c1_i32 = arith.constant 1 : i32
    %0 = arith.addi %arg2, %c1_i32 : i32
    %c0_i32 = arith.constant 0 : i32
    %1 = arith.minsi %0, %c0_i32 : i32
    %c1_i32_0 = arith.constant 1 : i32
    %2 = arith.subi %c1_i32_0, %arg1 : i32
    %3 = arith.muli %1, %2 : i32
    %c0_i32_1 = arith.constant 0 : i32
    %c0_i32_2 = arith.constant 0 : i32
    %c0_i32_3 = arith.constant 0 : i32
    return %arg0, %3, %c0_i32_1, %c0_i32_2 : i32, i32, i32, i32
  }
  func.func @transform_3(%arg0: i32, %arg1: i32, %arg2: i32) -> (i32, i32) {
    %c0_i32 = arith.constant 0 : i32
    %c0_i32_0 = arith.constant 0 : i32
    %c0_i32_1 = arith.constant 0 : i32
    return %c0_i32, %c0_i32_0 : i32, i32
  }
  func.func @transform_4(%arg0: i32, %arg1: i32, %arg2: i32) -> (i32, i32) {
    %c0_i32 = arith.constant 0 : i32
    %c0_i32_0 = arith.constant 0 : i32
    %c0_i32_1 = arith.constant 0 : i32
    return %c0_i32, %c0_i32_0 : i32, i32
  }
  func.func @transform_5(%arg0: i32, %arg1: i32, %arg2: i32) -> (i32, i32) {
    %c0_i32 = arith.constant 0 : i32
    %c0_i32_0 = arith.constant 0 : i32
    %c0_i32_1 = arith.constant 0 : i32
    return %c0_i32, %c0_i32_0 : i32, i32
  }
  func.func @transform_6(%arg0: i32, %arg1: i32, %arg2: i32) -> (i32, i32) {
    %c0_i32 = arith.constant 0 : i32
    %c0_i32_0 = arith.constant 0 : i32
    %c0_i32_1 = arith.constant 0 : i32
    return %c0_i32, %c0_i32_0 : i32, i32
  }
  func.func @transform_7(%arg0: i32, %arg1: i32, %arg2: i32) -> (i32, i32) {
    %c0_i32 = arith.constant 0 : i32
    %c0_i32_0 = arith.constant 0 : i32
    %c0_i32_1 = arith.constant 0 : i32
    return %c0_i32, %c0_i32_0 : i32, i32
  }
  func.func @transform_8(%arg0: i32, %arg1: i32, %arg2: i32) -> (i32, i32) {
    %c0_i32 = arith.constant 0 : i32
    %c0_i32_0 = arith.constant 0 : i32
    %c0_i32_1 = arith.constant 0 : i32
    return %c0_i32, %c0_i32_0 : i32, i32
  }
  func.func @transform_9(%arg0: i32, %arg1: i32, %arg2: i32) -> (i32, i32) {
    %c0_i32 = arith.constant 0 : i32
    %c0_i32_0 = arith.constant 0 : i32
    %c0_i32_1 = arith.constant 0 : i32
    return %c0_i32, %c0_i32_0 : i32, i32
  }
  func.func @transform_10(%arg0: i32, %arg1: i32, %arg2: i32) -> (i32, i32) {
    %c0_i32 = arith.constant 0 : i32
    %c0_i32_0 = arith.constant 0 : i32
    %c0_i32_1 = arith.constant 0 : i32
    return %c0_i32, %c0_i32_0 : i32, i32
  }
  func.func @transform_11(%arg0: i32, %arg1: i32, %arg2: i32) -> (i32, i32) {
    %c0_i32 = arith.constant 0 : i32
    %c0_i32_0 = arith.constant 0 : i32
    %c0_i32_1 = arith.constant 0 : i32
    return %c0_i32, %c0_i32_0 : i32, i32
  }
  func.func @transform_12(%arg0: i32, %arg1: i32, %arg2: i32) -> (i32, i32) {
    %c0_i32 = arith.constant 0 : i32
    %c0_i32_0 = arith.constant 0 : i32
    %c0_i32_1 = arith.constant 0 : i32
    return %c0_i32, %c0_i32_0 : i32, i32
  }
  func.func @transform_13(%arg0: i32, %arg1: i32, %arg2: i32) -> (i32, i32) {
    %c0_i32 = arith.constant 0 : i32
    %c0_i32_0 = arith.constant 0 : i32
    %c0_i32_1 = arith.constant 0 : i32
    return %c0_i32, %c0_i32_0 : i32, i32
  }
  func.func @transform_14(%arg0: i32, %arg1: i32, %arg2: i32) -> (i32, i32, i32, i32) {
    %0 = arith.muli %arg2, %arg1 : i32
    %c0_i32 = arith.constant 0 : i32
    %c0_i32_0 = arith.constant 0 : i32
    %c0_i32_1 = arith.constant 0 : i32
    return %arg0, %0, %c0_i32, %c0_i32_0 : i32, i32, i32, i32
  }
}

</mosaic_0001>

<llo_original>
// kernel: context_guided_block_down.2
$region0: #{context_guided_block_down.2}
  #allocation0 [shape = 'u32[]', space=smem, size = 0x4, offset = 0x4, fixed_abs, tag = 'smem constant byte address 0x4 - core index']
  #allocation1 [shape = 'u32[144,128]{1,0:T(1,128)}', space=vmem, size = 0x12000, scoped, tag = 'internal scratch']
  %s0 = inlined_call_operand.vmem [shape: bf16[2,8,8,36], index: 0, kind: input, shape index: {}]
  %s1 = inlined_call_operand.vmem [shape: bf16[36,32], index: 1, kind: input, shape index: {}]
  %s2 = inlined_call_operand.vmem [shape: f32[1,32], index: 2, kind: input, shape index: {}]
  %s3 = inlined_call_operand.vmem [shape: bf16[2,8,8,32], index: 3, kind: output, shape index: {}]
  %s4 = sld [smem:[#allocation0]]
  $region45: #{context_guided_block_down.2} parent=0
    _
  %s6 = ssub.s32 1, %s4
  %s7 = scalar_select 0, %s6, %s4
  loop: start=0, step=1, limit=4
  $region2: #{context_guided_block_down.2} parent=0 // loop_pre_header
    _
  $region3: #{context_guided_block_down.2} parent=0 // loop_header
    %s9 = sphi 0, %s13
    %p10 = scmp.ge.s32.totalorder %s9, 4
    %s16 = sphi 0, %s28
    %s17 = sphi 0, %s24
    %s18 = sphi 0, %s16
    %s19 = sphi 0, %s17
    %s20 = sphi 0, %s18
    %s21 = sphi 0, %s19
    %s33 = sphi 0, %s35
    %s36 = sphi 0, %s33
    %s37 = sphi 0, %s36
    %s53 = sphi 0, %s37
    %s57 = sphi 0, %s57
    %s59 = sphi 0, %s57
    %s60 = sphi 0, %s59
    %s74 = sphi 0, %s60
    %s78 = sphi 0, %s78
    %s80 = sphi 0, %s78
    %s81 = sphi 0, %s80
    %s95 = sphi 0, %s81
    %s103 = sphi 0, %s105
    %s106 = sphi 0, %s103
    %s107 = sphi 0, %s106
    %s123 = sphi 0, %s107
  $region4: #{context_guided_block_down.2} parent=0 // loop_header_branch
    %12 = sbr.rel (%p10) target = $region8
  $region5: #{context_guided_block_down.2} parent=0 // loop_body
    %s14 = ssub.s32 %s9, 1
    %s15 = ssub.s32 %s9, 2
    %s22 = sadd.s32 1, %s17
    %p23 = scmp.ge.s32.totalorder %s22, 1
    %s24 = scalar_select %p23, 0, %s22
    %s25 = sadd.s32 1, %s16
    %s26 = scalar_select %p23, %s25, %s16
    %p27 = scmp.ge.s32.totalorder %s26, 2
    %s28 = scalar_select %p27, 0, %s26
    %s29 = ssub.s32 %s16, %s28
    %s30 = ssub.s32 %s17, %s24
    %s31 = sor.u32 %s29, %s30
    %p32 = scmp.eq.s32.totalorder %s31, 0
    %s34 = sadd.s32 %s33, 1
    %s35 = scalar_select %p32, %s33, %s34
    %p38 = pneg %p32
    %p39 = scmp.eq.s32.totalorder %s9, 1
    %p40 = por %p38, %p39
    %p41 = scmp.ne.s32.totalorder %s33, %s36
    %p42 = scmp.eq.s32.totalorder %s9, 0
    %p43 = por %p41, %p42
    %p44 = scmp.ne.s32.totalorder %s33, %s36
    %p45 = scmp.eq.s32.totalorder %s14, 1
    %p46 = por %p44, %p45
    %p47 = scmp.ne.s32.totalorder %s36, %s37
    %p48 = scmp.eq.s32.totalorder %s14, 0
    %p49 = por %p47, %p48
    %p50 = scmp.ne.s32.totalorder %s36, %s37
    %p51 = scmp.eq.s32.totalorder %s15, 1
    %p52 = por %p50, %p51
    %p54 = scmp.ne.s32.totalorder %s37, %s53
    %p55 = scmp.eq.s32.totalorder %s15, 0
    %p56 = por %p54, %p55
    %s58 = sadd.s32 %s57, 1
    %p61 = scmp.eq.s32.totalorder %s9, 1
    %p62 = scmp.ne.s32.totalorder %s57, %s59
    %p63 = scmp.eq.s32.totalorder %s9, 0
    %p64 = por %p62, %p63
    %p65 = scmp.ne.s32.totalorder %s57, %s59
    %p66 = scmp.eq.s32.totalorder %s14, 1
    %p67 = por %p65, %p66
    %p68 = scmp.ne.s32.totalorder %s59, %s60
    %p69 = scmp.eq.s32.totalorder %s14, 0
    %p70 = por %p68, %p69
    %p71 = scmp.ne.s32.totalorder %s59, %s60
    %p72 = scmp.eq.s32.totalorder %s15, 1
    %p73 = por %p71, %p72
    %p75 = scmp.ne.s32.totalorder %s60, %s74
    %p76 = scmp.eq.s32.totalorder %s15, 0
    %p77 = por %p75, %p76
    %s79 = sadd.s32 %s78, 1
    %p82 = scmp.eq.s32.totalorder %s9, 1
    %p83 = scmp.ne.s32.totalorder %s78, %s80
    %p84 = scmp.eq.s32.totalorder %s9, 0
    %p85 = por %p83, %p84
    %p86 = scmp.ne.s32.totalorder %s78, %s80
    %p87 = scmp.eq.s32.totalorder %s14, 1
    %p88 = por %p86, %p87
    %p89 = scmp.ne.s32.totalorder %s80, %s81
    %p90 = scmp.eq.s32.totalorder %s14, 0
    %p91 = por %p89, %p90
    %p92 = scmp.ne.s32.totalorder %s80, %s81
    %p93 = scmp.eq.s32.totalorder %s15, 1
    %p94 = por %p92, %p93
    %p96 = scmp.ne.s32.totalorder %s81, %s95
    %p97 = scmp.eq.s32.totalorder %s15, 0
    %p98 = por %p96, %p97
    %s99 = ssub.s32 %s16, %s28
    %s100 = ssub.s32 %s17, %s24
    %s101 = sor.u32 %s99, %s100
    %p102 = scmp.eq.s32.totalorder %s101, 0
    %s104 = sadd.s32 %s103, 1
    %s105 = scalar_select %p102, %s103, %s104
    %p108 = pneg %p102
    %p109 = scmp.eq.s32.totalorder %s9, 1
    %p110 = por %p108, %p109
    %p111 = scmp.ne.s32.totalorder %s103, %s106
    %p112 = scmp.eq.s32.totalorder %s9, 0
    %p113 = por %p111, %p112
    %p114 = scmp.ne.s32.totalorder %s103, %s106
    %p115 = scmp.eq.s32.totalorder %s14, 1
    %p116 = por %p114, %p115
    %p117 = scmp.ne.s32.totalorder %s106, %s107
    %p118 = scmp.eq.s32.totalorder %s14, 0
    %p119 = por %p117, %p118
    %p120 = scmp.ne.s32.totalorder %s106, %s107
    %p121 = scmp.eq.s32.totalorder %s15, 1
    %p122 = por %p120, %p121
    %p124 = scmp.ne.s32.totalorder %s107, %s123
    %p125 = scmp.eq.s32.totalorder %s15, 0
    %p126 = por %p124, %p125
    %p127 = scmp.le.s32.totalorder 1, %s9
    %p128 = scmp.lt.s32.totalorder %s9, 3
    %p129 = pnand %p127, %p128
    %p130 = pneg %p129
    // Predicated region
    $region9: #{context_guided_block_down.2} parent=5 // pred_check
      _
    $region10: #{context_guided_block_down.2} parent=5 // pred_check_branch
      %132 = sbr.rel (%p129) target = $region12
    $region11: #{context_guided_block_down.2} parent=5 // pred_region
      %s133 = ssub.s32 %s9, 1
      // Predicated region
      $region13: #{context_guided_block_down.2} parent=11 // pred_check
        %p134 = pneg %p70
      $region14: #{context_guided_block_down.2} parent=11 // pred_check_branch
        %136 = sbr.rel (%p134) target = $region16
      $region15: #{context_guided_block_down.2} parent=11 // pred_region
        _
      $region16: #{context_guided_block_down.2} parent=11 // pred_fallthru
        _
      // Predicated region
      $region17: #{context_guided_block_down.2} parent=11 // pred_check
        %p137 = pneg %p91
      $region18: #{context_guided_block_down.2} parent=11 // pred_check_branch
        %139 = sbr.rel (%p137) target = $region20
      $region19: #{context_guided_block_down.2} parent=11 // pred_region
        _
      $region20: #{context_guided_block_down.2} parent=11 // pred_fallthru
        _
    $region12: #{context_guided_block_down.2} parent=5 // pred_fallthru
      _
    %p140 = scmp.lt.s32.totalorder %s9, 2
    // Predicated region
    $region21: #{context_guided_block_down.2} parent=5 // pred_check
      %p141 = pneg %p140
    $region22: #{context_guided_block_down.2} parent=5 // pred_check_branch
      %143 = sbr.rel (%p141) target = $region24
    $region23: #{context_guided_block_down.2} parent=5 // pred_region
      // Predicated region
      $region25: #{context_guided_block_down.2} parent=23 // pred_check
        %p144 = pneg %p43
      $region26: #{context_guided_block_down.2} parent=23 // pred_check_branch
        %146 = sbr.rel (%p144) target = $region28
      $region27: #{context_guided_block_down.2} parent=23 // pred_region
        %s147 = smul.u32 8, %s17
        %p148 = scmp.lt.s32.totalorder %s16, 1
        %s149 = scalar_select %p148, %s16, 1
        %p150 = scmp.lt.s32.totalorder %s147, 7
        %s151 = scalar_select %p150, %s147, 7
        %s152 = smul.addr %s149, 8
        %s153 = sadd.s32 %s151, %s152
        %s154 = smul.addr %s153, 4
        %s155 = scalar_lea.vmem %s0, %s154
        %s156 = smul.u32 8, %s17
      $region28: #{context_guided_block_down.2} parent=23 // pred_fallthru
        _
    $region24: #{context_guided_block_down.2} parent=5 // pred_fallthru
      _
    %p157 = scmp.le.s32.totalorder 1, %s9
    %p158 = scmp.lt.s32.totalorder %s9, 3
    %p159 = pnand %p157, %p158
    %p160 = pneg %p159
    // Predicated region
    $region29: #{context_guided_block_down.2} parent=5 // pred_check
      _
    $region30: #{context_guided_block_down.2} parent=5 // pred_check_branch
      %162 = sbr.rel (%p159) target = $region32
    $region31: #{context_guided_block_down.2} parent=5 // pred_region
      %s163 = ssub.s32 %s9, 1
      %s164 = smul.u32 8, %s19
      %p165 = scmp.lt.s32.totalorder %s18, 1
      %s166 = scalar_select %p165, %s18, 1
      %p167 = scmp.lt.s32.totalorder %s164, 7
      %s168 = scalar_select %p167, %s164, 7
      %s169 = smul.addr %s166, 8
      %s170 = sadd.s32 %s168, %s169
      %s171 = smul.addr %s170, 4
      %s172 = scalar_lea.vmem %s0, %s171
      %p173 = pneg %p49
      %p174 = pneg %p46
      %p175 = pneg %p70
      %p176 = pneg %p67
      %p177 = pneg %p91
      %p178 = pneg %p88
      %p179 = pneg %p119
      %p180 = pneg %p116
      %s181 = smul.u32 8, %s19
      %p182 = scmp.lt.s32.totalorder %s18, 1
      %s183 = scalar_select %p182, %s18, 1
      %p184 = scmp.lt.s32.totalorder %s181, 7
      %s185 = scalar_select %p184, %s181, 7
      %s186 = smul.addr %s183, 8
      %s187 = sadd.s32 %s185, %s186
      %s188 = smul.addr %s187, 4
      %s189 = scalar_lea.vmem %s3, %s188
      %s190 = smul.u32 8, %s19
      %p191 = scmp.lt.s32.totalorder %s18, 1
      %s192 = scalar_select %p191, %s18, 1
      %p193 = scmp.lt.s32.totalorder %s190, 7
      %s194 = scalar_select %p193, %s190, 7
      %s195 = smul.addr %s192, 8
      %s196 = sadd.s32 %s194, %s195
      %s197 = smul.addr %s196, 4
      %s198 = scalar_lea.vmem %s0, %s197
      %s199 = smul.u32 8, %s19
      %s200 = smul.u32 8, %s19
      %p201 = scmp.lt.s32.totalorder %s18, 1
      %s202 = scalar_select %p201, %s18, 1
      %p203 = scmp.lt.s32.totalorder %s200, 7
      %s204 = scalar_select %p203, %s200, 7
      %s205 = smul.addr %s202, 8
      %s206 = sadd.s32 %s204, %s205
      %s207 = smul.addr %s206, 4
      %s208 = scalar_lea.vmem %s3, %s207
      %s209 = smul.u32 8, %s19
      %v211 = vld [vmem:[%s198] sm:$0xf]
      %v212 = vld [vmem:[%s198 + $0x4] sm:$0xf]
      %v213 = vld [vmem:[%s198 + $0x8] sm:$0xf]
      %v214 = vld [vmem:[%s198 + $0xc] sm:$0xf]
      %v215 = vld [vmem:[%s198 + $0x10] sm:$0xf]
      %v216 = vld [vmem:[%s198 + $0x14] sm:$0xf]
      %v217 = vld [vmem:[%s198 + $0x18] sm:$0xf]
      %v218 = vld [vmem:[%s198 + $0x1c] sm:$0xf]
      %v219 = vld [vmem:[%s1] sm:$0xf]
      %v220 = vld [vmem:[%s1 + $0x4] sm:$0xf]
      %v221 = vld [vmem:[%s1 + $0x8] sm:$0xf]
      %v222 = vld [vmem:[%s1 + $0xc] sm:$0xf]
      %v223 = vld [vmem:[%s1 + $0x10] sm:$0x3]
      %v224 = vld [vmem:[%s2] sm:$0x1]
      %v226 = vlaneseq
      %v227 = vshrl.u32 %v226, 7
      %v228 = vsub.s32 0, %v227
      %v229 = vrot.slane %v224, %v228
      %v239 = vunpack.c.l.b16 %v211
      %v240 = vunpack.c.l.b16 %v212
      %v241 = vunpack.c.l.b16 %v213
      %v242 = vunpack.c.l.b16 %v214
      %v243 = vunpack.c.l.b16 %v215
      %v244 = vunpack.c.l.b16 %v216
      %v245 = vunpack.c.l.b16 %v217
      %v246 = vunpack.c.l.b16 %v218
      %v247 = vpack.c.b16 %v240, %v239
      %v248 = vpack.c.b16 %v242, %v241
      %v249 = vpack.c.b16 %v244, %v243
      %v250 = vpack.c.b16 %v246, %v245
      %v256 = vunpack.c.l.b16 %v219
      %v257 = vunpack.c.l.b16 %v220
      %v258 = vunpack.c.l.b16 %v221
      %v259 = vunpack.c.l.b16 %v222
      %v260 = vunpack.c.l.b16 %v223
      %v261 = vpack.c.b16 %v257, %v256
      %v262 = vpack.c.b16 %v259, %v258
      %v263 = vpack.c.b16 %v260, %v260
      %vm266 = vcmask 293888
      %v268 = vsel %vm266, %v247, 0
      %v271 = vsel %vm266, %v248, 0
      %v274 = vsel %vm266, %v249, 0
      %v277 = vsel %vm266, %v250, 0
      %vm279 = vcmask 1041408
      %v281 = vsel %vm279, %v263, 0
      %283 = vmatprep.subr.bf16.mxu0 0
      %284 = vmatpush1.bf16.msra.mxu0 %v261
      %285 = vmatprep.subr.bf16.mxu0 0
      %286 = vmatpush1.bf16.msra.mxu0 %v262
      %287 = vmatprep.subr.bf16.mxu0 0
      %288 = vmatpush1.bf16.msra.mxu0 %v281
      %289 = vmatprep.subr.bf16.mxu0 0
      %290 = vmatpush1.bf16.msra.mxu0 0
      %291 = vmatprep.subr.bf16.mxu0 0
      %292 = vmatpush1.bf16.msra.mxu0 0
      %293 = vmatprep.subr.bf16.mxu0 0
      %294 = vmatpush1.bf16.msra.mxu0 0
      %295 = vmatprep.subr.bf16.mxu0 0
      %296 = vmatpush1.bf16.msra.mxu0 0
      %297 = vmatprep.subr.bf16.mxu0 0
      %298 = vmatpush1.bf16.msra.mxu0 0
      %299 = vmatprep.subr.bf16.mxu0 0
      %300 = vmatpush1.bf16.msra.mxu0 0
      %301 = vmatprep.subr.bf16.mxu0 0
      %302 = vmatpush1.bf16.msra.mxu0 0
      %303 = vmatprep.subr.bf16.mxu0 0
      %304 = vmatpush1.bf16.msra.mxu0 0
      %305 = vmatprep.subr.bf16.mxu0 0
      %306 = vmatpush1.bf16.msra.mxu0 0
      %307 = vmatprep.subr.bf16.mxu0 0
      %308 = vmatpush1.bf16.msra.mxu0 0
      %309 = vmatprep.subr.bf16.mxu0 0
      %310 = vmatpush1.bf16.msra.mxu0 0
      %311 = vmatprep.subr.bf16.mxu0 0
      %312 = vmatpush1.bf16.msra.mxu0 0
      %313 = vmatprep.subr.bf16.mxu0 0
      %314 = vmatpush1.bf16.msra.mxu0 0
      %315 = vmatprep.mubr.bf16.mxu0 0
      %316 = vmatmul.mubr.bf16.gmra.mrb[0].mxu0 %v268
      %v317 = vpop.f32.mrb[0].mxu0
      %v318 = vadd.f32 %v229, %v317
      %v319 = vpop.f32.mrb[0].mxu0
      %v320 = vpop.f32.mrb[0].mxu0
      %v321 = vadd.f32 %v229, %v320
      %v322 = vpop.f32.mrb[0].mxu0
      %323 = vmatprep.mubr.bf16.mxu0 0
      %324 = vmatmul.mubr.bf16.gmra.mrb[0].mxu0 %v271
      %v325 = vpop.f32.mrb[0].mxu0
      %v326 = vadd.f32 %v229, %v325
      %v327 = vpop.f32.mrb[0].mxu0
      %v328 = vpop.f32.mrb[0].mxu0
      %v329 = vadd.f32 %v229, %v328
      %v330 = vpop.f32.mrb[0].mxu0
      %331 = vmatprep.mubr.bf16.mxu0 0
      %332 = vmatmul.mubr.bf16.gmra.mrb[0].mxu0 %v274
      %v333 = vpop.f32.mrb[0].mxu0
      %v334 = vadd.f32 %v229, %v333
      %v335 = vpop.f32.mrb[0].mxu0
      %v336 = vpop.f32.mrb[0].mxu0
      %v337 = vadd.f32 %v229, %v336
      %v338 = vpop.f32.mrb[0].mxu0
      %339 = vmatprep.mubr.bf16.mxu0 0
      %340 = vmatmul.mubr.bf16.gmra.mrb[0].mxu0 %v277
      %v341 = vpop.f32.mrb[0].mxu0
      %v342 = vadd.f32 %v229, %v341
      %v343 = vpop.f32.mrb[0].mxu0
      %v344 = vpop.f32.mrb[0].mxu0
      %v345 = vadd.f32 %v229, %v344
      %v346 = vpop.f32.mrb[0].mxu0
      %347 = vdwg.mxu0
      %v348 = vxor.u32 %v318, 2147483648
      %v349 = vxor.u32 %v321, 2147483648
      %v350 = vxor.u32 %v326, 2147483648
      %v351 = vxor.u32 %v329, 2147483648
      %v352 = vxor.u32 %v334, 2147483648
      %v353 = vxor.u32 %v337, 2147483648
      %v354 = vxor.u32 %v342, 2147483648
      %v355 = vxor.u32 %v345, 2147483648
      %v356 = vmul.f32 %v348, 1.442695
      %v357 = vpow.pop %v356
      %v358 = vmul.f32 %v349, 1.442695
      %v359 = vpow.pop %v358
      %v360 = vmul.f32 %v350, 1.442695
      %v361 = vpow.pop %v360
      %v362 = vmul.f32 %v351, 1.442695
      %v363 = vpow.pop %v362
      %v364 = vmul.f32 %v352, 1.442695
      %v365 = vpow.pop %v364
      %v366 = vmul.f32 %v353, 1.442695
      %v367 = vpow.pop %v366
      %v368 = vmul.f32 %v354, 1.442695
      %v369 = vpow.pop %v368
      %v370 = vmul.f32 %v355, 1.442695
      %v371 = vpow.pop %v370
      %v372 = vadd.f32 %v357, 1.0
      %v373 = vadd.f32 %v359, 1.0
      %v374 = vadd.f32 %v361, 1.0
      %v375 = vadd.f32 %v363, 1.0
      %v376 = vadd.f32 %v365, 1.0
      %v377 = vadd.f32 %v367, 1.0
      %v378 = vadd.f32 %v369, 1.0
      %v379 = vadd.f32 %v371, 1.0
      %v380 = vrcp.pop %v372
      %v381 = vmul.f32 1.0, %v380
      %v382 = vrcp.pop %v373
      %v383 = vmul.f32 1.0, %v382
      %v384 = vrcp.pop %v374
      %v385 = vmul.f32 1.0, %v384
      %v386 = vrcp.pop %v375
      %v387 = vmul.f32 1.0, %v386
      %v388 = vrcp.pop %v376
      %v389 = vmul.f32 1.0, %v388
      %v390 = vrcp.pop %v377
      %v391 = vmul.f32 1.0, %v390
      %v392 = vrcp.pop %v378
      %v393 = vmul.f32 1.0, %v392
      %v394 = vrcp.pop %v379
      %v395 = vmul.f32 1.0, %v394
      %v396 = vmul.f32 %v318, %v381
      %v397 = vmul.f32 %v321, %v383
      %v398 = vmul.f32 %v326, %v385
      %v399 = vmul.f32 %v329, %v387
      %v400 = vmul.f32 %v334, %v389
      %v401 = vmul.f32 %v337, %v391
      %v402 = vmul.f32 %v342, %v393
      %v403 = vmul.f32 %v345, %v395
      %v404 = vpack.c.bf16 %v397, %v396
      %v405 = vpack.c.bf16 %v399, %v398
      %v406 = vpack.c.bf16 %v401, %v400
      %v407 = vpack.c.bf16 %v403, %v402
      %v412 = vunpack.c.l.b16 %v404
      %v413 = vunpack.c.h.b16 %v404
      %v414 = vunpack.c.l.b16 %v405
      %v415 = vunpack.c.h.b16 %v405
      %v416 = vunpack.c.l.b16 %v406
      %v417 = vunpack.c.h.b16 %v406
      %v418 = vunpack.c.l.b16 %v407
      %v419 = vunpack.c.h.b16 %v407
      %v420 = vpack.c.b16 %v412, %v412
      %v421 = vpack.c.b16 %v413, %v413
      %v422 = vpack.c.b16 %v414, %v414
      %v423 = vpack.c.b16 %v415, %v415
      %v424 = vpack.c.b16 %v416, %v416
      %v425 = vpack.c.b16 %v417, %v417
      %v426 = vpack.c.b16 %v418, %v418
      %v427 = vpack.c.b16 %v419, %v419
      %vm436 = vcmask 257024
      %437 = vst.msk [vmem:[%s208] sm:$0xf] %vm436, %v420
      %438 = vst.msk [vmem:[%s208 + $0x4] sm:$0xf] %vm436, %v421
      %439 = vst.msk [vmem:[%s208 + $0x8] sm:$0xf] %vm436, %v422
      %440 = vst.msk [vmem:[%s208 + $0xc] sm:$0xf] %vm436, %v423
      %441 = vst.msk [vmem:[%s208 + $0x10] sm:$0xf] %vm436, %v424
      %442 = vst.msk [vmem:[%s208 + $0x14] sm:$0xf] %vm436, %v425
      %443 = vst.msk [vmem:[%s208 + $0x18] sm:$0xf] %vm436, %v426
      %444 = vst.msk [vmem:[%s208 + $0x1c] sm:$0xf] %vm436, %v427
      %s445 = smul.u32 8, %s19
      %p446 = scmp.lt.s32.totalorder %s18, 1
      %s447 = scalar_select %p446, %s18, 1
      %p448 = scmp.lt.s32.totalorder %s445, 7
      %s449 = scalar_select %p448, %s445, 7
      %s450 = smul.addr %s447, 8
      %s451 = sadd.s32 %s449, %s450
      %s452 = smul.addr %s451, 4
      %s453 = scalar_lea.vmem %s3, %s452
      // Predicated region
      $region33: #{context_guided_block_down.2} parent=31 // pred_check
        %p454 = pneg %p116
      $region34: #{context_guided_block_down.2} parent=31 // pred_check_branch
        %456 = sbr.rel (%p454) target = $region36
      $region35: #{context_guided_block_down.2} parent=31 // pred_region
        %s457 = smul.u32 8, %s19
      $region36: #{context_guided_block_down.2} parent=31 // pred_fallthru
        _
    $region32: #{context_guided_block_down.2} parent=5 // pred_fallthru
      _
    %p458 = scmp.le.s32.totalorder 2, %s9
    // Predicated region
    $region37: #{context_guided_block_down.2} parent=5 // pred_check
      %p459 = pneg %p458
    $region38: #{context_guided_block_down.2} parent=5 // pred_check_branch
      %461 = sbr.rel (%p459) target = $region40
    $region39: #{context_guided_block_down.2} parent=5 // pred_region
      %s462 = ssub.s32 %s9, 2
      // Predicated region
      $region41: #{context_guided_block_down.2} parent=39 // pred_check
        %p463 = pneg %p122
      $region42: #{context_guided_block_down.2} parent=39 // pred_check_branch
        %465 = sbr.rel (%p463) target = $region44
      $region43: #{context_guided_block_down.2} parent=39 // pred_region
        %s466 = smul.u32 8, %s21
        %p467 = scmp.lt.s32.totalorder %s20, 1
        %s468 = scalar_select %p467, %s20, 1
        %p469 = scmp.lt.s32.totalorder %s466, 7
        %s470 = scalar_select %p469, %s466, 7
        %s471 = smul.addr %s468, 8
        %s472 = sadd.s32 %s470, %s471
        %s473 = smul.addr %s472, 4
        %s474 = scalar_lea.vmem %s3, %s473
      $region44: #{context_guided_block_down.2} parent=39 // pred_fallthru
        _
    $region40: #{context_guided_block_down.2} parent=5 // pred_fallthru
      _
  $region6: #{context_guided_block_down.2} parent=0 // loop_footer
    %s13 = sadd.s32 1, %s9
  $region7: #{context_guided_block_down.2} parent=0 // loop_footer_branch
    %8 = sbr.rel target = $region3
  $region8: #{context_guided_block_down.2} parent=0 // loop_exit
    _

// kernel: context_guided_block_down.3
$region0: #{context_guided_block_down.3}
  #allocation0 [shape = 'u32[]', space=smem, size = 0x4, offset = 0x4, fixed_abs, tag = 'smem constant byte address 0x4 - core index']
  #allocation1 [shape = 'u32[144,128]{1,0:T(1,128)}', space=vmem, size = 0x12000, scoped, tag = 'internal scratch']
  #allocation2 [shape = 'f32[12,12,32]{2,1,0:T(8,128)}', space=vmem, size = 0x18000, scoped, tag = 'scratch operand']
  #allocation3 [shape = 'f32[8,8,32]{2,1,0:T(8,128)}', space=vmem, size = 0x8000, scoped, tag = 'scratch operand']
  #allocation4 [shape = 'f32[1,32]{1,0:T(1,128)}', space=vmem, size = 0x200, scoped, tag = 'scratch operand']
  #allocation5 [shape = 'f32[1,32]{1,0:T(1,128)}', space=vmem, size = 0x200, scoped, tag = 'scratch operand']
  %s0 = inlined_call_operand.vmem [shape: bf16[2,8,8,32], index: 0, kind: input, shape index: {}, may-alias: {0,1,2}]
  %s1 = inlined_call_operand.vmem [shape: bf16[2,8,8,32], index: 1, kind: input, shape index: {}, may-alias: {0,1,2}]
  %s2 = inlined_call_operand.vmem [shape: bf16[2,8,8,32], index: 2, kind: input, shape index: {}, may-alias: {0,1,2}]
  %s3 = inlined_call_operand.vmem [shape: f32[9,32], index: 3, kind: input, shape index: {}]
  %s4 = inlined_call_operand.vmem [shape: f32[1,32], index: 4, kind: input, shape index: {}]
  %s5 = inlined_call_operand.vmem [shape: f32[9,32], index: 5, kind: input, shape index: {}]
  %s6 = inlined_call_operand.vmem [shape: f32[1,32], index: 6, kind: input, shape index: {}]
  %s7 = inlined_call_operand.vmem [shape: bf16[32,32], index: 7, kind: input, shape index: {}]
  %s8 = inlined_call_operand.vmem [shape: bf16[32,32], index: 8, kind: input, shape index: {}]
  %s9 = inlined_call_operand.vmem [shape: f32[1,32], index: 9, kind: input, shape index: {}]
  %s10 = inlined_call_operand.vmem [shape: f32[32,2], index: 10, kind: input, shape index: {}]
  %s11 = inlined_call_operand.vmem [shape: f32[1,2], index: 11, kind: input, shape index: {}]
  %s12 = inlined_call_operand.vmem [shape: f32[2,32], index: 12, kind: input, shape index: {}]
  %s13 = inlined_call_operand.vmem [shape: f32[1,32], index: 13, kind: input, shape index: {}]
  %s14 = inlined_call_operand.hbm [shape: f32[2,8,8,32], index: 14, kind: output, shape index: {}]
  %s15 = sld [smem:[#allocation0]]
  $region109: #{context_guided_block_down.3} parent=0
    _
  %s17 = ssub.s32 1, %s15
  %s18 = scalar_select 0, %s17, %s15
  $region1: #{context_guided_block_down.3} parent=0
    #allocation6 [shape = 'u8[65536]{0}', space=vmem, size = 0x10000, scoped, tag = 'output window, operand 0']
    #allocation7 [shape = 's32[2]{0}', space=sflag, size = 0x8, scoped, tag = 'scoped memory for context_guided_block_down.3']
    %19 = vsyncpa [#allocation7], 0
    %s20 = scalar_lea.sflag [#allocation7], 1
    %21 = vsyncpa %s20, 0
    loop: start=0, step=1, limit=6
    $region2: #{context_guided_block_down.3} parent=1 // loop_pre_header
      _
    $region3: #{context_guided_block_down.3} parent=1 // loop_header
      %s23 = sphi 0, %s27
      %p24 = scmp.ge.s32.totalorder %s23, 6
      %s30 = sphi 0, %s49
      %s31 = sphi 0, %s45
      %s32 = sphi 0, %s41
      %s33 = sphi 0, %s30
      %s34 = sphi 0, %s31
      %s35 = sphi 0, %s32
      %s36 = sphi 0, %s33
      %s37 = sphi 0, %s34
      %s38 = sphi 0, %s35
      %s58 = sphi 0, %s60
      %s61 = sphi 0, %s58
      %s62 = sphi 0, %s61
      %s78 = sphi 0, %s62
      %s96 = sphi 0, %s98
      %s99 = sphi 0, %s96
      %s100 = sphi 0, %s99
      %s116 = sphi 0, %s100
      %s134 = sphi 0, %s136
      %s137 = sphi 0, %s134
      %s138 = sphi 0, %s137
      %s154 = sphi 0, %s138
      %s158 = sphi 0, %s158
      %s160 = sphi 0, %s158
      %s161 = sphi 0, %s160
      %s175 = sphi 0, %s161
      %s179 = sphi 0, %s179
      %s181 = sphi 0, %s179
      %s182 = sphi 0, %s181
      %s196 = sphi 0, %s182
      %s200 = sphi 0, %s200
      %s202 = sphi 0, %s200
      %s203 = sphi 0, %s202
      %s217 = sphi 0, %s203
      %s221 = sphi 0, %s221
      %s223 = sphi 0, %s221
      %s224 = sphi 0, %s223
      %s238 = sphi 0, %s224
      %s242 = sphi 0, %s242
      %s244 = sphi 0, %s242
      %s245 = sphi 0, %s244
      %s259 = sphi 0, %s245
      %s263 = sphi 0, %s263
      %s265 = sphi 0, %s263
      %s266 = sphi 0, %s265
      %s280 = sphi 0, %s266
      %s284 = sphi 0, %s284
      %s286 = sphi 0, %s284
      %s287 = sphi 0, %s286
      %s301 = sphi 0, %s287
      %s305 = sphi 0, %s305
      %s307 = sphi 0, %s305
      %s308 = sphi 0, %s307
      %s322 = sphi 0, %s308
      %s326 = sphi 0, %s326
      %s328 = sphi 0, %s326
      %s329 = sphi 0, %s328
      %s343 = sphi 0, %s329
      %s347 = sphi 0, %s347
      %s349 = sphi 0, %s347
      %s350 = sphi 0, %s349
      %s364 = sphi 0, %s350
      %s368 = sphi 0, %s368
      %s370 = sphi 0, %s368
      %s371 = sphi 0, %s370
      %s385 = sphi 0, %s371
      %s395 = sphi 0, %s397
      %s398 = sphi 0, %s395
      %s399 = sphi 0, %s398
      %s415 = sphi 0, %s399
    $region4: #{context_guided_block_down.3} parent=1 // loop_header_branch
      %26 = sbr.rel (%p24) target = $region8
    $region5: #{context_guided_block_down.3} parent=1 // loop_body
      %s28 = ssub.s32 %s23, 1
      %s29 = ssub.s32 %s23, 2
      %s39 = sadd.s32 1, %s32
      %p40 = scmp.ge.s32.totalorder %s39, 1
      %s41 = scalar_select %p40, 0, %s39
      %s42 = sadd.s32 1, %s31
      %s43 = scalar_select %p40, %s42, %s31
      %p44 = scmp.ge.s32.totalorder %s43, 2
      %s45 = scalar_select %p44, 0, %s43
      %s46 = sadd.s32 1, %s30
      %s47 = scalar_select %p44, %s46, %s30
      %p48 = scmp.ge.s32.totalorder %s47, 2
      %s49 = scalar_select %p48, 0, %s47
      %s50 = ssub.s32 1, %s31
      %s51 = smul.u32 %s32, %s50
      %s52 = ssub.s32 1, %s45
      %s53 = smul.u32 %s41, %s52
      %s54 = ssub.s32 %s30, %s49
      %s55 = ssub.s32 %s51, %s53
      %s56 = sor.u32 %s54, %s55
      %p57 = scmp.eq.s32.totalorder %s56, 0
      %s59 = sadd.s32 %s58, 1
      %s60 = scalar_select %p57, %s58, %s59
      %p63 = pneg %p57
      %p64 = scmp.eq.s32.totalorder %s23, 3
      %p65 = por %p63, %p64
      %p66 = scmp.ne.s32.totalorder %s58, %s61
      %p67 = scmp.eq.s32.totalorder %s23, 0
      %p68 = por %p66, %p67
      %p69 = scmp.ne.s32.totalorder %s58, %s61
      %p70 = scmp.eq.s32.totalorder %s28, 3
      %p71 = por %p69, %p70
      %p72 = scmp.ne.s32.totalorder %s61, %s62
      %p73 = scmp.eq.s32.totalorder %s28, 0
      %p74 = por %p72, %p73
      %p75 = scmp.ne.s32.totalorder %s61, %s62
      %p76 = scmp.eq.s32.totalorder %s29, 3
      %p77 = por %p75, %p76
      %p79 = scmp.ne.s32.totalorder %s62, %s78
      %p80 = scmp.eq.s32.totalorder %s29, 0
      %p81 = por %p79, %p80
      %s82 = ssub.s32 %s32, 1
      %p83 = scmp.gt.s32.totalorder %s82, 0
      %s84 = scalar_select %p83, %s82, 0
      %s85 = ssub.s32 1, %s31
      %s86 = smul.u32 %s84, %s85
      %s87 = ssub.s32 %s41, 1
      %p88 = scmp.gt.s32.totalorder %s87, 0
      %s89 = scalar_select %p88, %s87, 0
      %s90 = ssub.s32 1, %s45
      %s91 = smul.u32 %s89, %s90
      %s92 = ssub.s32 %s30, %s49
      %s93 = ssub.s32 %s86, %s91
      %s94 = sor.u32 %s92, %s93
      %p95 = scmp.eq.s32.totalorder %s94, 0
      %s97 = sadd.s32 %s96, 1
      %s98 = scalar_select %p95, %s96, %s97
      %p101 = pneg %p95
      %p102 = scmp.eq.s32.totalorder %s23, 3
      %p103 = por %p101, %p102
      %p104 = scmp.ne.s32.totalorder %s96, %s99
      %p105 = scmp.eq.s32.totalorder %s23, 0
      %p106 = por %p104, %p105
      %p107 = scmp.ne.s32.totalorder %s96, %s99
      %p108 = scmp.eq.s32.totalorder %s28, 3
      %p109 = por %p107, %p108
      %p110 = scmp.ne.s32.totalorder %s99, %s100
      %p111 = scmp.eq.s32.totalorder %s28, 0
      %p112 = por %p110, %p111
      %p113 = scmp.ne.s32.totalorder %s99, %s100
      %p114 = scmp.eq.s32.totalorder %s29, 3
      %p115 = por %p113, %p114
      %p117 = scmp.ne.s32.totalorder %s100, %s116
      %p118 = scmp.eq.s32.totalorder %s29, 0
      %p119 = por %p117, %p118
      %s120 = sadd.s32 %s32, 1
      %p121 = scmp.lt.s32.totalorder %s120, 0
      %s122 = scalar_select %p121, %s120, 0
      %s123 = ssub.s32 1, %s31
      %s124 = smul.u32 %s122, %s123
      %s125 = sadd.s32 %s41, 1
      %p126 = scmp.lt.s32.totalorder %s125, 0
      %s127 = scalar_select %p126, %s125, 0
      %s128 = ssub.s32 1, %s45
      %s129 = smul.u32 %s127, %s128
      %s130 = ssub.s32 %s30, %s49
      %s131 = ssub.s32 %s124, %s129
      %s132 = sor.u32 %s130, %s131
      %p133 = scmp.eq.s32.totalorder %s132, 0
      %s135 = sadd.s32 %s134, 1
      %s136 = scalar_select %p133, %s134, %s135
      %p139 = pneg %p133
      %p140 = scmp.eq.s32.totalorder %s23, 3
      %p141 = por %p139, %p140
      %p142 = scmp.ne.s32.totalorder %s134, %s137
      %p143 = scmp.eq.s32.totalorder %s23, 0
      %p144 = por %p142, %p143
      %p145 = scmp.ne.s32.totalorder %s134, %s137
      %p146 = scmp.eq.s32.totalorder %s28, 3
      %p147 = por %p145, %p146
      %p148 = scmp.ne.s32.totalorder %s137, %s138
      %p149 = scmp.eq.s32.totalorder %s28, 0
      %p150 = por %p148, %p149
      %p151 = scmp.ne.s32.totalorder %s137, %s138
      %p152 = scmp.eq.s32.totalorder %s29, 3
      %p153 = por %p151, %p152
      %p155 = scmp.ne.s32.totalorder %s138, %s154
      %p156 = scmp.eq.s32.totalorder %s29, 0
      %p157 = por %p155, %p156
      %s159 = sadd.s32 %s158, 1
      %p162 = scmp.eq.s32.totalorder %s23, 3
      %p163 = scmp.ne.s32.totalorder %s158, %s160
      %p164 = scmp.eq.s32.totalorder %s23, 0
      %p165 = por %p163, %p164
      %p166 = scmp.ne.s32.totalorder %s158, %s160
      %p167 = scmp.eq.s32.totalorder %s28, 3
      %p168 = por %p166, %p167
      %p169 = scmp.ne.s32.totalorder %s160, %s161
      %p170 = scmp.eq.s32.totalorder %s28, 0
      %p171 = por %p169, %p170
      %p172 = scmp.ne.s32.totalorder %s160, %s161
      %p173 = scmp.eq.s32.totalorder %s29, 3
      %p174 = por %p172, %p173
      %p176 = scmp.ne.s32.totalorder %s161, %s175
      %p177 = scmp.eq.s32.totalorder %s29, 0
      %p178 = por %p176, %p177
      %s180 = sadd.s32 %s179, 1
      %p183 = scmp.eq.s32.totalorder %s23, 3
      %p184 = scmp.ne.s32.totalorder %s179, %s181
      %p185 = scmp.eq.s32.totalorder %s23, 0
      %p186 = por %p184, %p185
      %p187 = scmp.ne.s32.totalorder %s179, %s181
      %p188 = scmp.eq.s32.totalorder %s28, 3
      %p189 = por %p187, %p188
      %p190 = scmp.ne.s32.totalorder %s181, %s182
      %p191 = scmp.eq.s32.totalorder %s28, 0
      %p192 = por %p190, %p191
      %p193 = scmp.ne.s32.totalorder %s181, %s182
      %p194 = scmp.eq.s32.totalorder %s29, 3
      %p195 = por %p193, %p194
      %p197 = scmp.ne.s32.totalorder %s182, %s196
      %p198 = scmp.eq.s32.totalorder %s29, 0
      %p199 = por %p197, %p198
      %s201 = sadd.s32 %s200, 1
      %p204 = scmp.eq.s32.totalorder %s23, 3
      %p205 = scmp.ne.s32.totalorder %s200, %s202
      %p206 = scmp.eq.s32.totalorder %s23, 0
      %p207 = por %p205, %p206
      %p208 = scmp.ne.s32.totalorder %s200, %s202
      %p209 = scmp.eq.s32.totalorder %s28, 3
      %p210 = por %p208, %p209
      %p211 = scmp.ne.s32.totalorder %s202, %s203
      %p212 = scmp.eq.s32.totalorder %s28, 0
      %p213 = por %p211, %p212
      %p214 = scmp.ne.s32.totalorder %s202, %s203
      %p215 = scmp.eq.s32.totalorder %s29, 3
      %p216 = por %p214, %p215
      %p218 = scmp.ne.s32.totalorder %s203, %s217
      %p219 = scmp.eq.s32.totalorder %s29, 0
      %p220 = por %p218, %p219
      %s222 = sadd.s32 %s221, 1
      %p225 = scmp.eq.s32.totalorder %s23, 3
      %p226 = scmp.ne.s32.totalorder %s221, %s223
      %p227 = scmp.eq.s32.totalorder %s23, 0
      %p228 = por %p226, %p227
      %p229 = scmp.ne.s32.totalorder %s221, %s223
      %p230 = scmp.eq.s32.totalorder %s28, 3
      %p231 = por %p229, %p230
      %p232 = scmp.ne.s32.totalorder %s223, %s224
      %p233 = scmp.eq.s32.totalorder %s28, 0
      %p234 = por %p232, %p233
      %p235 = scmp.ne.s32.totalorder %s223, %s224
      %p236 = scmp.eq.s32.totalorder %s29, 3
      %p237 = por %p235, %p236
      %p239 = scmp.ne.s32.totalorder %s224, %s238
      %p240 = scmp.eq.s32.totalorder %s29, 0
      %p241 = por %p239, %p240
      %s243 = sadd.s32 %s242, 1
      %p246 = scmp.eq.s32.totalorder %s23, 3
      %p247 = scmp.ne.s32.totalorder %s242, %s244
      %p248 = scmp.eq.s32.totalorder %s23, 0
      %p249 = por %p247, %p248
      %p250 = scmp.ne.s32.totalorder %s242, %s244
      %p251 = scmp.eq.s32.totalorder %s28, 3
      %p252 = por %p250, %p251
      %p253 = scmp.ne.s32.totalorder %s244, %s245
      %p254 = scmp.eq.s32.totalorder %s28, 0
      %p255 = por %p253, %p254
      %p256 = scmp.ne.s32.totalorder %s244, %s245
      %p257 = scmp.eq.s32.totalorder %s29, 3
      %p258 = por %p256, %p257
      %p260 = scmp.ne.s32.totalorder %s245, %s259
      %p261 = scmp.eq.s32.totalorder %s29, 0
      %p262 = por %p260, %p261
      %s264 = sadd.s32 %s263, 1
      %p267 = scmp.eq.s32.totalorder %s23, 3
      %p268 = scmp.ne.s32.totalorder %s263, %s265
      %p269 = scmp.eq.s32.totalorder %s23, 0
      %p270 = por %p268, %p269
      %p271 = scmp.ne.s32.totalorder %s263, %s265
      %p272 = scmp.eq.s32.totalorder %s28, 3
      %p273 = por %p271, %p272
      %p274 = scmp.ne.s32.totalorder %s265, %s266
      %p275 = scmp.eq.s32.totalorder %s28, 0
      %p276 = por %p274, %p275
      %p277 = scmp.ne.s32.totalorder %s265, %s266
      %p278 = scmp.eq.s32.totalorder %s29, 3
      %p279 = por %p277, %p278
      %p281 = scmp.ne.s32.totalorder %s266, %s280
      %p282 = scmp.eq.s32.totalorder %s29, 0
      %p283 = por %p281, %p282
      %s285 = sadd.s32 %s284, 1
      %p288 = scmp.eq.s32.totalorder %s23, 3
      %p289 = scmp.ne.s32.totalorder %s284, %s286
      %p290 = scmp.eq.s32.totalorder %s23, 0
      %p291 = por %p289, %p290
      %p292 = scmp.ne.s32.totalorder %s284, %s286
      %p293 = scmp.eq.s32.totalorder %s28, 3
      %p294 = por %p292, %p293
      %p295 = scmp.ne.s32.totalorder %s286, %s287
      %p296 = scmp.eq.s32.totalorder %s28, 0
      %p297 = por %p295, %p296
      %p298 = scmp.ne.s32.totalorder %s286, %s287
      %p299 = scmp.eq.s32.totalorder %s29, 3
      %p300 = por %p298, %p299
      %p302 = scmp.ne.s32.totalorder %s287, %s301
      %p303 = scmp.eq.s32.totalorder %s29, 0
      %p304 = por %p302, %p303
      %s306 = sadd.s32 %s305, 1
      %p309 = scmp.eq.s32.totalorder %s23, 3
      %p310 = scmp.ne.s32.totalorder %s305, %s307
      %p311 = scmp.eq.s32.totalorder %s23, 0
      %p312 = por %p310, %p311
      %p313 = scmp.ne.s32.totalorder %s305, %s307
      %p314 = scmp.eq.s32.totalorder %s28, 3
      %p315 = por %p313, %p314
      %p316 = scmp.ne.s32.totalorder %s307, %s308
      %p317 = scmp.eq.s32.totalorder %s28, 0
      %p318 = por %p316, %p317
      %p319 = scmp.ne.s32.totalorder %s307, %s308
      %p320 = scmp.eq.s32.totalorder %s29, 3
      %p321 = por %p319, %p320
      %p323 = scmp.ne.s32.totalorder %s308, %s322
      %p324 = scmp.eq.s32.totalorder %s29, 0
      %p325 = por %p323, %p324
      %s327 = sadd.s32 %s326, 1
      %p330 = scmp.eq.s32.totalorder %s23, 3
      %p331 = scmp.ne.s32.totalorder %s326, %s328
      %p332 = scmp.eq.s32.totalorder %s23, 0
      %p333 = por %p331, %p332
      %p334 = scmp.ne.s32.totalorder %s326, %s328
      %p335 = scmp.eq.s32.totalorder %s28, 3
      %p336 = por %p334, %p335
      %p337 = scmp.ne.s32.totalorder %s328, %s329
      %p338 = scmp.eq.s32.totalorder %s28, 0
      %p339 = por %p337, %p338
      %p340 = scmp.ne.s32.totalorder %s328, %s329
      %p341 = scmp.eq.s32.totalorder %s29, 3
      %p342 = por %p340, %p341
      %p344 = scmp.ne.s32.totalorder %s329, %s343
      %p345 = scmp.eq.s32.totalorder %s29, 0
      %p346 = por %p344, %p345
      %s348 = sadd.s32 %s347, 1
      %p351 = scmp.eq.s32.totalorder %s23, 3
      %p352 = scmp.ne.s32.totalorder %s347, %s349
      %p353 = scmp.eq.s32.totalorder %s23, 0
      %p354 = por %p352, %p353
      %p355 = scmp.ne.s32.totalorder %s347, %s349
      %p356 = scmp.eq.s32.totalorder %s28, 3
      %p357 = por %p355, %p356
      %p358 = scmp.ne.s32.totalorder %s349, %s350
      %p359 = scmp.eq.s32.totalorder %s28, 0
      %p360 = por %p358, %p359
      %p361 = scmp.ne.s32.totalorder %s349, %s350
      %p362 = scmp.eq.s32.totalorder %s29, 3
      %p363 = por %p361, %p362
      %p365 = scmp.ne.s32.totalorder %s350, %s364
      %p366 = scmp.eq.s32.totalorder %s29, 0
      %p367 = por %p365, %p366
      %s369 = sadd.s32 %s368, 1
      %p372 = scmp.eq.s32.totalorder %s23, 3
      %p373 = scmp.ne.s32.totalorder %s368, %s370
      %p374 = scmp.eq.s32.totalorder %s23, 0
      %p375 = por %p373, %p374
      %p376 = scmp.ne.s32.totalorder %s368, %s370
      %p377 = scmp.eq.s32.totalorder %s28, 3
      %p378 = por %p376, %p377
      %p379 = scmp.ne.s32.totalorder %s370, %s371
      %p380 = scmp.eq.s32.totalorder %s28, 0
      %p381 = por %p379, %p380
      %p382 = scmp.ne.s32.totalorder %s370, %s371
      %p383 = scmp.eq.s32.totalorder %s29, 3
      %p384 = por %p382, %p383
      %p386 = scmp.ne.s32.totalorder %s371, %s385
      %p387 = scmp.eq.s32.totalorder %s29, 0
      %p388 = por %p386, %p387
      %s389 = smul.u32 %s32, %s31
      %s390 = smul.u32 %s41, %s45
      %s391 = ssub.s32 %s30, %s49
      %s392 = ssub.s32 %s389, %s390
      %s393 = sor.u32 %s391, %s392
      %p394 = scmp.eq.s32.totalorder %s393, 0
      %s396 = sadd.s32 %s395, 1
      %s397 = scalar_select %p394, %s395, %s396
      %p400 = pneg %p394
      %p401 = scmp.eq.s32.totalorder %s23, 3
      %p402 = por %p400, %p401
      %p403 = scmp.ne.s32.totalorder %s395, %s398
      %p404 = scmp.eq.s32.totalorder %s23, 0
      %p405 = por %p403, %p404
      %p406 = scmp.ne.s32.totalorder %s395, %s398
      %p407 = scmp.eq.s32.totalorder %s28, 3
      %p408 = por %p406, %p407
      %p409 = scmp.ne.s32.totalorder %s398, %s399
      %p410 = scmp.eq.s32.totalorder %s28, 0
      %p411 = por %p409, %p410
      %p412 = scmp.ne.s32.totalorder %s398, %s399
      %p413 = scmp.eq.s32.totalorder %s29, 3
      %p414 = por %p412, %p413
      %p416 = scmp.ne.s32.totalorder %s399, %s415
      %p417 = scmp.eq.s32.totalorder %s29, 0
      %p418 = por %p416, %p417
      %p419 = scmp.le.s32.totalorder 1, %s23
      %p420 = scmp.lt.s32.totalorder %s23, 5
      %p421 = pnand %p419, %p420
      %p422 = pneg %p421
      // Predicated region
      $region9: #{context_guided_block_down.3} parent=5 // pred_check
        _
      $region10: #{context_guided_block_down.3} parent=5 // pred_check_branch
        %424 = sbr.rel (%p421) target = $region12
      $region11: #{context_guided_block_down.3} parent=5 // pred_region
        %s425 = ssub.s32 %s23, 1
        // Predicated region
        $region13: #{context_guided_block_down.3} parent=11 // pred_check
          %p426 = pneg %p171
        $region14: #{context_guided_block_down.3} parent=11 // pred_check_branch
          %428 = sbr.rel (%p426) target = $region16
        $region15: #{context_guided_block_down.3} parent=11 // pred_region
          _
        $region16: #{context_guided_block_down.3} parent=11 // pred_fallthru
          _
        // Predicated region
        $region17: #{context_guided_block_down.3} parent=11 // pred_check
          %p429 = pneg %p192
        $region18: #{context_guided_block_down.3} parent=11 // pred_check_branch
          %431 = sbr.rel (%p429) target = $region20
        $region19: #{context_guided_block_down.3} parent=11 // pred_region
          _
        $region20: #{context_guided_block_down.3} parent=11 // pred_fallthru
          _
        // Predicated region
        $region21: #{context_guided_block_down.3} parent=11 // pred_check
          %p432 = pneg %p213
        $region22: #{context_guided_block_down.3} parent=11 // pred_check_branch
          %434 = sbr.rel (%p432) target = $region24
        $region23: #{context_guided_block_down.3} parent=11 // pred_region
          _
        $region24: #{context_guided_block_down.3} parent=11 // pred_fallthru
          _
        // Predicated region
        $region25: #{context_guided_block_down.3} parent=11 // pred_check
          %p435 = pneg %p234
        $region26: #{context_guided_block_down.3} parent=11 // pred_check_branch
          %437 = sbr.rel (%p435) target = $region28
        $region27: #{context_guided_block_down.3} parent=11 // pred_region
          _
        $region28: #{context_guided_block_down.3} parent=11 // pred_fallthru
          _
        // Predicated region
        $region29: #{context_guided_block_down.3} parent=11 // pred_check
          %p438 = pneg %p255
        $region30: #{context_guided_block_down.3} parent=11 // pred_check_branch
          %440 = sbr.rel (%p438) target = $region32
        $region31: #{context_guided_block_down.3} parent=11 // pred_region
          _
        $region32: #{context_guided_block_down.3} parent=11 // pred_fallthru
          _
        // Predicated region
        $region33: #{context_guided_block_down.3} parent=11 // pred_check
          %p441 = pneg %p276
        $region34: #{context_guided_block_down.3} parent=11 // pred_check_branch
          %443 = sbr.rel (%p441) target = $region36
        $region35: #{context_guided_block_down.3} parent=11 // pred_region
          _
        $region36: #{context_guided_block_down.3} parent=11 // pred_fallthru
          _
        // Predicated region
        $region37: #{context_guided_block_down.3} parent=11 // pred_check
          %p444 = pneg %p297
        $region38: #{context_guided_block_down.3} parent=11 // pred_check_branch
          %446 = sbr.rel (%p444) target = $region40
        $region39: #{context_guided_block_down.3} parent=11 // pred_region
          _
        $region40: #{context_guided_block_down.3} parent=11 // pred_fallthru
          _
        // Predicated region
        $region41: #{context_guided_block_down.3} parent=11 // pred_check
          %p447 = pneg %p318
        $region42: #{context_guided_block_down.3} parent=11 // pred_check_branch
          %449 = sbr.rel (%p447) target = $region44
        $region43: #{context_guided_block_down.3} parent=11 // pred_region
          _
        $region44: #{context_guided_block_down.3} parent=11 // pred_fallthru
          _
        // Predicated region
        $region45: #{context_guided_block_down.3} parent=11 // pred_check
          %p450 = pneg %p339
        $region46: #{context_guided_block_down.3} parent=11 // pred_check_branch
          %452 = sbr.rel (%p450) target = $region48
        $region47: #{context_guided_block_down.3} parent=11 // pred_region
          _
        $region48: #{context_guided_block_down.3} parent=11 // pred_fallthru
          _
        // Predicated region
        $region49: #{context_guided_block_down.3} parent=11 // pred_check
          %p453 = pneg %p360
        $region50: #{context_guided_block_down.3} parent=11 // pred_check_branch
          %455 = sbr.rel (%p453) target = $region52
        $region51: #{context_guided_block_down.3} parent=11 // pred_region
          _
        $region52: #{context_guided_block_down.3} parent=11 // pred_fallthru
          _
        // Predicated region
        $region53: #{context_guided_block_down.3} parent=11 // pred_check
          %p456 = pneg %p381
        $region54: #{context_guided_block_down.3} parent=11 // pred_check_branch
          %458 = sbr.rel (%p456) target = $region56
        $region55: #{context_guided_block_down.3} parent=11 // pred_region
          _
        $region56: #{context_guided_block_down.3} parent=11 // pred_fallthru
          _
      $region12: #{context_guided_block_down.3} parent=5 // pred_fallthru
        _
      %p459 = scmp.lt.s32.totalorder %s23, 4
      // Predicated region
      $region57: #{context_guided_block_down.3} parent=5 // pred_check
        %p460 = pneg %p459
      $region58: #{context_guided_block_down.3} parent=5 // pred_check_branch
        %462 = sbr.rel (%p460) target = $region60
      $region59: #{context_guided_block_down.3} parent=5 // pred_region
        // Predicated region
        $region61: #{context_guided_block_down.3} parent=59 // pred_check
          %p463 = pneg %p68
        $region62: #{context_guided_block_down.3} parent=59 // pred_check_branch
          %465 = sbr.rel (%p463) target = $region64
        $region63: #{context_guided_block_down.3} parent=59 // pred_region
          %s466 = ssub.s32 1, %s31
          %s467 = smul.u32 %s32, %s466
          %s468 = smul.u32 8, %s467
          %p469 = scmp.lt.s32.totalorder %s30, 1
          %s470 = scalar_select %p469, %s30, 1
          %p471 = scmp.lt.s32.totalorder %s468, 7
          %s472 = scalar_select %p471, %s468, 7
          %s473 = smul.addr %s470, 8
          %s474 = sadd.s32 %s472, %s473
          %s475 = smul.addr %s474, 4
          %s476 = scalar_lea.vmem %s0, %s475
          %s477 = ssub.s32 1, %s31
          %s478 = smul.u32 %s32, %s477
          %s479 = smul.u32 8, %s478
        $region64: #{context_guided_block_down.3} parent=59 // pred_fallthru
          _
        // Predicated region
        $region65: #{context_guided_block_down.3} parent=59 // pred_check
          %p480 = pneg %p106
        $region66: #{context_guided_block_down.3} parent=59 // pred_check_branch
          %482 = sbr.rel (%p480) target = $region68
        $region67: #{context_guided_block_down.3} parent=59 // pred_region
          %s483 = ssub.s32 %s32, 1
          %p484 = scmp.gt.s32.totalorder %s483, 0
          %s485 = scalar_select %p484, %s483, 0
          %s486 = ssub.s32 1, %s31
          %s487 = smul.u32 %s485, %s486
          %s488 = smul.u32 8, %s487
          %p489 = scmp.lt.s32.totalorder %s30, 1
          %s490 = scalar_select %p489, %s30, 1
          %p491 = scmp.lt.s32.totalorder %s488, 7
          %s492 = scalar_select %p491, %s488, 7
          %s493 = smul.addr %s490, 8
          %s494 = sadd.s32 %s492, %s493
          %s495 = smul.addr %s494, 4
          %s496 = scalar_lea.vmem %s1, %s495
          %s497 = ssub.s32 %s32, 1
          %p498 = scmp.gt.s32.totalorder %s497, 0
          %s499 = scalar_select %p498, %s497, 0
          %s500 = ssub.s32 1, %s31
          %s501 = smul.u32 %s499, %s500
          %s502 = smul.u32 8, %s501
        $region68: #{context_guided_block_down.3} parent=59 // pred_fallthru
          _
        // Predicated region
        $region69: #{context_guided_block_down.3} parent=59 // pred_check
          %p503 = pneg %p144
        $region70: #{context_guided_block_down.3} parent=59 // pred_check_branch
          %505 = sbr.rel (%p503) target = $region72
        $region71: #{context_guided_block_down.3} parent=59 // pred_region
          %s506 = sadd.s32 %s32, 1
          %p507 = scmp.lt.s32.totalorder %s506, 0
          %s508 = scalar_select %p507, %s506, 0
          %s509 = ssub.s32 1, %s31
          %s510 = smul.u32 %s508, %s509
          %s511 = smul.u32 8, %s510
          %p512 = scmp.lt.s32.totalorder %s30, 1
          %s513 = scalar_select %p512, %s30, 1
          %p514 = scmp.lt.s32.totalorder %s511, 7
          %s515 = scalar_select %p514, %s511, 7
          %s516 = smul.addr %s513, 8
          %s517 = sadd.s32 %s515, %s516
          %s518 = smul.addr %s517, 4
          %s519 = scalar_lea.vmem %s2, %s518
          %s520 = sadd.s32 %s32, 1
          %p521 = scmp.lt.s32.totalorder %s520, 0
          %s522 = scalar_select %p521, %s520, 0
          %s523 = ssub.s32 1, %s31
          %s524 = smul.u32 %s522, %s523
          %s525 = smul.u32 8, %s524
        $region72: #{context_guided_block_down.3} parent=59 // pred_fallthru
          _
      $region60: #{context_guided_block_down.3} parent=5 // pred_fallthru
        _
      %p526 = scmp.le.s32.totalorder 1, %s23
      %p527 = scmp.lt.s32.totalorder %s23, 5
      %p528 = pnand %p526, %p527
      %p529 = pneg %p528
      // Predicated region
      $region73: #{context_guided_block_down.3} parent=5 // pred_check
        _
      $region74: #{context_guided_block_down.3} parent=5 // pred_check_branch
        %531 = sbr.rel (%p528) target = $region76
      $region75: #{context_guided_block_down.3} parent=5 // pred_region
        %s532 = ssub.s32 %s23, 1
        %s533 = ssub.s32 1, %s34
        %s534 = smul.u32 %s35, %s533
        %s535 = smul.u32 8, %s534
        %p536 = scmp.lt.s32.totalorder %s33, 1
        %s537 = scalar_select %p536, %s33, 1
        %p538 = scmp.lt.s32.totalorder %s535, 7
        %s539 = scalar_select %p538, %s535, 7
        %s540 = smul.addr %s537, 8
        %s541 = sadd.s32 %s539, %s540
        %s542 = smul.addr %s541, 4
        %s543 = scalar_lea.vmem %s0, %s542
        %p544 = pneg %p74
        %p545 = pneg %p71
        %s546 = ssub.s32 %s35, 1
        %p547 = scmp.gt.s32.totalorder %s546, 0
        %s548 = scalar_select %p547, %s546, 0
        %s549 = ssub.s32 1, %s34
        %s550 = smul.u32 %s548, %s549
        %s551 = smul.u32 8, %s550
        %p552 = scmp.lt.s32.totalorder %s33, 1
        %s553 = scalar_select %p552, %s33, 1
        %p554 = scmp.lt.s32.totalorder %s551, 7
        %s555 = scalar_select %p554, %s551, 7
        %s556 = smul.addr %s553, 8
        %s557 = sadd.s32 %s555, %s556
        %s558 = smul.addr %s557, 4
        %s559 = scalar_lea.vmem %s1, %s558
        %p560 = pneg %p112
        %p561 = pneg %p109
        %s562 = sadd.s32 %s35, 1
        %p563 = scmp.lt.s32.totalorder %s562, 0
        %s564 = scalar_select %p563, %s562, 0
        %s565 = ssub.s32 1, %s34
        %s566 = smul.u32 %s564, %s565
        %s567 = smul.u32 8, %s566
        %p568 = scmp.lt.s32.totalorder %s33, 1
        %s569 = scalar_select %p568, %s33, 1
        %p570 = scmp.lt.s32.totalorder %s567, 7
        %s571 = scalar_select %p570, %s567, 7
        %s572 = smul.addr %s569, 8
        %s573 = sadd.s32 %s571, %s572
        %s574 = smul.addr %s573, 4
        %s575 = scalar_lea.vmem %s2, %s574
        %p576 = pneg %p150
        %p577 = pneg %p147
        %p578 = pneg %p171
        %p579 = pneg %p168
        %p580 = pneg %p192
        %p581 = pneg %p189
        %p582 = pneg %p213
        %p583 = pneg %p210
        %p584 = pneg %p234
        %p585 = pneg %p231
        %p586 = pneg %p255
        %p587 = pneg %p252
        %p588 = pneg %p276
        %p589 = pneg %p273
        %p590 = pneg %p297
        %p591 = pneg %p294
        %p592 = pneg %p318
        %p593 = pneg %p315
        %p594 = pneg %p339
        %p595 = pneg %p336
        %p596 = pneg %p360
        %p597 = pneg %p357
        %p598 = pneg %p381
        %p599 = pneg %p378
        %p600 = pneg %p411
        %p601 = pneg %p408
        %s602 = sand.u32 %s398, 1
        %s603 = scalar_lea.sflag [#allocation7], %s602
        %s604 = sand.u32 %s398, 1
        %s605 = smul.addr %s604, 64
        %s606 = scalar_lea.vmem [#allocation6], %s605
        %s607 = ssub.s32 1, %s34
        %s608 = smul.u32 %s35, %s607
        %s609 = smul.u32 8, %s608
        %p610 = scmp.lt.s32.totalorder %s33, 1
        %s611 = scalar_select %p610, %s33, 1
        %p612 = scmp.lt.s32.totalorder %s609, 7
        %s613 = scalar_select %p612, %s609, 7
        %s614 = smul.addr %s611, 8
        %s615 = sadd.s32 %s613, %s614
        %s616 = smul.addr %s615, 4
        %s617 = scalar_lea.vmem %s0, %s616
        %s618 = ssub.s32 1, %s34
        %s619 = smul.u32 %s35, %s618
        %s620 = smul.u32 8, %s619
        %s621 = ssub.s32 %s35, 1
        %p622 = scmp.gt.s32.totalorder %s621, 0
        %s623 = scalar_select %p622, %s621, 0
        %s624 = ssub.s32 1, %s34
        %s625 = smul.u32 %s623, %s624
        %s626 = smul.u32 8, %s625
        %p627 = scmp.lt.s32.totalorder %s33, 1
        %s628 = scalar_select %p627, %s33, 1
        %p629 = scmp.lt.s32.totalorder %s626, 7
        %s630 = scalar_select %p629, %s626, 7
        %s631 = smul.addr %s628, 8
        %s632 = sadd.s32 %s630, %s631
        %s633 = smul.addr %s632, 4
        %s634 = scalar_lea.vmem %s1, %s633
        %s635 = ssub.s32 %s35, 1
        %p636 = scmp.gt.s32.totalorder %s635, 0
        %s637 = scalar_select %p636, %s635, 0
        %s638 = ssub.s32 1, %s34
        %s639 = smul.u32 %s637, %s638
        %s640 = smul.u32 8, %s639
        %s641 = sadd.s32 %s35, 1
        %p642 = scmp.lt.s32.totalorder %s641, 0
        %s643 = scalar_select %p642, %s641, 0
        %s644 = ssub.s32 1, %s34
        %s645 = smul.u32 %s643, %s644
        %s646 = smul.u32 8, %s645
        %p647 = scmp.lt.s32.totalorder %s33, 1
        %s648 = scalar_select %p647, %s33, 1
        %p649 = scmp.lt.s32.totalorder %s646, 7
        %s650 = scalar_select %p649, %s646, 7
        %s651 = smul.addr %s648, 8
        %s652 = sadd.s32 %s650, %s651
        %s653 = smul.addr %s652, 4
        %s654 = scalar_lea.vmem %s2, %s653
        %s655 = sadd.s32 %s35, 1
        %p656 = scmp.lt.s32.totalorder %s655, 0
        %s657 = scalar_select %p656, %s655, 0
        %s658 = ssub.s32 1, %s34
        %s659 = smul.u32 %s657, %s658
        %s660 = smul.u32 8, %s659
        %s661 = smul.u32 %s35, %s34
        %s662 = smul.u32 8, %s661
        %p664 = scmp.eq.s32.totalorder %s34, 0
        // Predicated region
        $region77: #{context_guided_block_down.3} parent=75 // pred_check
          %p665 = pneg %p664
        $region78: #{context_guided_block_down.3} parent=75 // pred_check_branch
          %667 = sbr.rel (%p665) target = $region80
        $region79: #{context_guided_block_down.3} parent=75 // pred_region
          %p668 = scmp.eq.s32.totalorder %s35, 0
          // Predicated region
          $region81: #{context_guided_block_down.3} parent=79 // pred_check
            %p669 = pneg %p668
          $region82: #{context_guided_block_down.3} parent=79 // pred_check_branch
            %671 = sbr.rel (%p669) target = $region84
          $region83: #{context_guided_block_down.3} parent=79 // pred_region
            %vm672 = vcmask 253952
            %673 = vst.msk [vmem:[#allocation4] sm:$0x1] %vm672, 0.0
            %vm674 = vcmask 254976
            %675 = vst.msk [vmem:[#allocation2] sm:$0x3] %vm674, 0.0
            %676 = vst.msk [vmem:[#allocation2 + $0x10] sm:$0x3] %vm674, 0.0
            %677 = vst.msk [vmem:[#allocation2 + $0x20] sm:$0x3] %vm674, 0.0
            %678 = vst.msk [vmem:[#allocation2 + $0x30] sm:$0x3] %vm674, 0.0
            %679 = vst.msk [vmem:[#allocation2 + $0x40] sm:$0x3] %vm674, 0.0
            %680 = vst.msk [vmem:[#allocation2 + $0x50] sm:$0x3] %vm674, 0.0
            %681 = vst.msk [vmem:[#allocation2 + $0x60] sm:$0x3] %vm674, 0.0
            %682 = vst.msk [vmem:[#allocation2 + $0x70] sm:$0x3] %vm674, 0.0
            %683 = vst.msk [vmem:[#allocation2 + $0x80] sm:$0x3] %vm674, 0.0
            %684 = vst.msk [vmem:[#allocation2 + $0x90] sm:$0x3] %vm674, 0.0
            %685 = vst.msk [vmem:[#allocation2 + $0xa0] sm:$0x3] %vm674, 0.0
            %686 = vst.msk [vmem:[#allocation2 + $0xb0] sm:$0x3] %vm674, 0.0
            %687 = vst.msk [vmem:[#allocation2 + $0xa] sm:$0x3] %vm674, 0.0
            %688 = vst.msk [vmem:[#allocation2 + $0x1a] sm:$0x3] %vm674, 0.0
            %689 = vst.msk [vmem:[#allocation2 + $0x2a] sm:$0x3] %vm674, 0.0
            %690 = vst.msk [vmem:[#allocation2 + $0x3a] sm:$0x3] %vm674, 0.0
            %691 = vst.msk [vmem:[#allocation2 + $0x4a] sm:$0x3] %vm674, 0.0
            %692 = vst.msk [vmem:[#allocation2 + $0x5a] sm:$0x3] %vm674, 0.0
            %693 = vst.msk [vmem:[#allocation2 + $0x6a] sm:$0x3] %vm674, 0.0
            %694 = vst.msk [vmem:[#allocation2 + $0x7a] sm:$0x3] %vm674, 0.0
            %695 = vst.msk [vmem:[#allocation2 + $0x8a] sm:$0x3] %vm674, 0.0
            %696 = vst.msk [vmem:[#allocation2 + $0x9a] sm:$0x3] %vm674, 0.0
            %697 = vst.msk [vmem:[#allocation2 + $0xaa] sm:$0x3] %vm674, 0.0
            %698 = vst.msk [vmem:[#allocation2 + $0xba] sm:$0x3] %vm674, 0.0
          $region84: #{context_guided_block_down.3} parent=79 // pred_fallthru
            _
          %v699 = vld [vmem:[%s617] sm:$0xf]
          %v700 = vld [vmem:[%s617 + $0x4] sm:$0xf]
          %v701 = vld [vmem:[%s617 + $0x8] sm:$0xf]
          %v702 = vld [vmem:[%s617 + $0xc] sm:$0xf]
          %v703 = vld [vmem:[%s617 + $0x10] sm:$0xf]
          %v704 = vld [vmem:[%s617 + $0x14] sm:$0xf]
          %v705 = vld [vmem:[%s617 + $0x18] sm:$0xf]
          %v706 = vld [vmem:[%s617 + $0x1c] sm:$0xf]
          %v707 = vunpack.c.l.bf16 %v699
          %v708 = vunpack.c.l.bf16 %v700
          %v709 = vunpack.c.l.bf16 %v701
          %v710 = vunpack.c.l.bf16 %v702
          %v711 = vunpack.c.l.bf16 %v703
          %v712 = vunpack.c.l.bf16 %v704
          %v713 = vunpack.c.l.bf16 %v705
          %v714 = vunpack.c.l.bf16 %v706
          %s715 = scalar_lea.vmem [#allocation2], 32
          %vm716 = vcmask 261120
          %717 = vst.msk [vmem:[%s715 + $0x2] sm:$0xff] %vm716, %v707
          %718 = vst.msk [vmem:[%s715 + $0x12] sm:$0xff] %vm716, %v708
          %719 = vst.msk [vmem:[%s715 + $0x22] sm:$0xff] %vm716, %v709
          %720 = vst.msk [vmem:[%s715 + $0x32] sm:$0xff] %vm716, %v710
          %721 = vst.msk [vmem:[%s715 + $0x42] sm:$0xff] %vm716, %v711
          %722 = vst.msk [vmem:[%s715 + $0x52] sm:$0xff] %vm716, %v712
          %723 = vst.msk [vmem:[%s715 + $0x62] sm:$0xff] %vm716, %v713
          %724 = vst.msk [vmem:[%s715 + $0x72] sm:$0xff] %vm716, %v714
          // Predicated region
          $region85: #{context_guided_block_down.3} parent=79 // pred_check
            %p725 = pneg %p668
          $region86: #{context_guided_block_down.3} parent=79 // pred_check_branch
            %727 = sbr.rel (%p725) target = $region88
          $region87: #{context_guided_block_down.3} parent=79 // pred_region
            %728 = vst.msk [vmem:[#allocation2 + $0x2] sm:$0xff] %vm716, 0.0
            %729 = vst.msk [vmem:[#allocation2 + $0x12] sm:$0xff] %vm716, 0.0
            %s730 = scalar_lea.vmem [#allocation2], 160
            %731 = vst.msk [vmem:[%s730 + $0x2] sm:$0xff] %vm716, 0.0
            %732 = vst.msk [vmem:[%s730 + $0x12] sm:$0xff] %vm716, 0.0
          $region88: #{context_guided_block_down.3} parent=79 // pred_fallthru
            _
          %v733 = vld [vmem:[#allocation2] sm:$0xff]
          %v734 = vld [vmem:[#allocation2 + $0x10] sm:$0xff]
          %v735 = vld [vmem:[#allocation2 + $0x20] sm:$0xff]
          %v736 = vld [vmem:[#allocation2 + $0x30] sm:$0xff]
          %v737 = vld [vmem:[#allocation2 + $0x40] sm:$0xff]
          %v738 = vld [vmem:[#allocation2 + $0x50] sm:$0xff]
          %v739 = vld [vmem:[#allocation2 + $0x60] sm:$0xff]
          %v740 = vld [vmem:[#allocation2 + $0x70] sm:$0xff]
          %v741 = vld [vmem:[#allocation2 + $0x80] sm:$0xff]
          %v742 = vld [vmem:[#allocation2 + $0x90] sm:$0xff]
          %v743 = vld [vmem:[#allocation2 + $0xa0] sm:$0xff]
          %v744 = vld [vmem:[#allocation2 + $0xb0] sm:$0xff]
          %v745 = vld [vmem:[#allocation2 + $0x11] sm:$0xff]
          %v746 = vld [vmem:[#allocation2 + $0x21] sm:$0xff]
          %v747 = vld [vmem:[#allocation2 + $0x31] sm:$0xff]
          %v748 = vld [vmem:[#allocation2 + $0x41] sm:$0xff]
          %v749 = vld [vmem:[#allocation2 + $0x51] sm:$0xff]
          %v750 = vld [vmem:[#allocation2 + $0x61] sm:$0xff]
          %v751 = vld [vmem:[#allocation2 + $0x71] sm:$0xff]
          %v752 = vld [vmem:[#allocation2 + $0x81] sm:$0xff]
          %v753 = vld [vmem:[#allocation2 + $0x91] sm:$0xff]
          %v754 = vld [vmem:[#allocation2 + $0xa1] sm:$0xff]
          %v755 = vld [vmem:[#allocation2 + $0x2] sm:$0xff]
          %v756 = vld [vmem:[#allocation2 + $0x12] sm:$0xff]
          %v757 = vld [vmem:[#allocation2 + $0x22] sm:$0xff]
          %v758 = vld [vmem:[#allocation2 + $0x32] sm:$0xff]
          %v759 = vld [vmem:[#allocation2 + $0x42] sm:$0xff]
          %v760 = vld [vmem:[#allocation2 + $0x52] sm:$0xff]
          %v761 = vld [vmem:[#allocation2 + $0x62] sm:$0xff]
          %v762 = vld [vmem:[#allocation2 + $0x72] sm:$0xff]
          %v763 = vld [vmem:[#allocation2 + $0x82] sm:$0xff]
          %v764 = vld [vmem:[#allocation2 + $0x92] sm:$0xff]
          %v765 = vld [vmem:[#allocation2 + $0xa2] sm:$0xff]
          %v766 = vld [vmem:[#allocation2 + $0xb2] sm:$0xff]
          %v767 = vld [vmem:[#allocation2 + $0x13] sm:$0xff]
          %v768 = vld [vmem:[#allocation2 + $0x23] sm:$0xff]
          %v769 = vld [vmem:[#allocation2 + $0x33] sm:$0xff]
          %v770 = vld [vmem:[#allocation2 + $0x43] sm:$0xff]
          %v771 = vld [vmem:[#allocation2 + $0x53] sm:$0xff]
          %v772 = vld [vmem:[#allocation2 + $0x63] sm:$0xff]
          %v773 = vld [vmem:[#allocation2 + $0x73] sm:$0xff]
          %v774 = vld [vmem:[#allocation2 + $0x83] sm:$0xff]
          %v775 = vld [vmem:[#allocation2 + $0x93] sm:$0xff]
          %v776 = vld [vmem:[#allocation2 + $0xa3] sm:$0xff]
          %v777 = vld [vmem:[#allocation2 + $0x4] sm:$0xff]
          %v778 = vld [vmem:[#allocation2 + $0x14] sm:$0xff]
          %v779 = vld [vmem:[#allocation2 + $0x24] sm:$0xff]
          %v780 = vld [vmem:[#allocation2 + $0x34] sm:$0xff]
          %v781 = vld [vmem:[#allocation2 + $0x44] sm:$0xff]
          %v782 = vld [vmem:[#allocation2 + $0x54] sm:$0xff]
          %v783 = vld [vmem:[#allocation2 + $0x64] sm:$0xff]
          %v784 = vld [vmem:[#allocation2 + $0x74] sm:$0xff]
          %v785 = vld [vmem:[#allocation2 + $0x84] sm:$0xff]
          %v786 = vld [vmem:[#allocation2 + $0x94] sm:$0xff]
          %v787 = vld [vmem:[#allocation2 + $0xa4] sm:$0xff]
          %v788 = vld [vmem:[#allocation2 + $0xb4] sm:$0xff]
          %v789 = vld [vmem:[%s3] sm:$0xff]
          %v790 = vld [vmem:[%s3 + $0x8] sm:$0x1]
          %v791 = vlaneseq
          %v792 = vshrl.u32 %v791, 7
          %v793 = vsub.s32 0, %v792
          %v794 = vrot.slane %v789, %v793
          %v795 = vmul.f32 %v745, %v794
          %v796 = vmul.f32 %v746, %v794
          %v797 = vmul.f32 %v747, %v794
          %v798 = vmul.f32 %v748, %v794
          %v799 = vmul.f32 %v749, %v794
          %v800 = vmul.f32 %v750, %v794
          %v801 = vmul.f32 %v751, %v794
          %v802 = vmul.f32 %v752, %v794
          %v803 = vadd.f32 %v795, 0.0
          %v804 = vadd.f32 %v796, 0.0
          %v805 = vadd.f32 %v797, 0.0
          %v806 = vadd.f32 %v798, 0.0
          %v807 = vadd.f32 %v799, 0.0
          %v808 = vadd.f32 %v800, 0.0
          %v809 = vadd.f32 %v801, 0.0
          %v810 = vadd.f32 %v802, 0.0
          %v811 = vlaneseq
          %v812 = vshrl.u32 %v811, 7
          %v813 = vsub.s32 1, %v812
          %v814 = vrot.slane %v789, %v813
          %v815 = vmul.f32 %v756, %v814
          %v816 = vmul.f32 %v757, %v814
          %v817 = vmul.f32 %v758, %v814
          %v818 = vmul.f32 %v759, %v814
          %v819 = vmul.f32 %v760, %v814
          %v820 = vmul.f32 %v761, %v814
          %v821 = vmul.f32 %v762, %v814
          %v822 = vmul.f32 %v763, %v814
          %v823 = vadd.f32 %v803, %v815
          %v824 = vadd.f32 %v804, %v816
          %v825 = vadd.f32 %v805, %v817
          %v826 = vadd.f32 %v806, %v818
          %v827 = vadd.f32 %v807, %v819
          %v828 = vadd.f32 %v808, %v820
          %v829 = vadd.f32 %v809, %v821
          %v830 = vadd.f32 %v810, %v822
          %v831 = vlaneseq
          %v832 = vshrl.u32 %v831, 7
          %v833 = vsub.s32 2, %v832
          %v834 = vrot.slane %v789, %v833
          %v835 = vmul.f32 %v767, %v834
          %v836 = vmul.f32 %v768, %v834
          %v837 = vmul.f32 %v769, %v834
          %v838 = vmul.f32 %v770, %v834
          %v839 = vmul.f32 %v771, %v834
          %v840 = vmul.f32 %v772, %v834
          %v841 = vmul.f32 %v773, %v834
          %v842 = vmul.f32 %v774, %v834
          %v843 = vadd.f32 %v823, %v835
          %v844 = vadd.f32 %v824, %v836
          %v845 = vadd.f32 %v825, %v837
          %v846 = vadd.f32 %v826, %v838
          %v847 = vadd.f32 %v827, %v839
          %v848 = vadd.f32 %v828, %v840
          %v849 = vadd.f32 %v829, %v841
          %v850 = vadd.f32 %v830, %v842
          %v851 = vlaneseq
          %v852 = vshrl.u32 %v851, 7
          %v853 = vsub.s32 3, %v852
          %v854 = vrot.slane %v789, %v853
          %v855 = vmul.f32 %v746, %v854
          %v856 = vmul.f32 %v747, %v854
          %v857 = vmul.f32 %v748, %v854
          %v858 = vmul.f32 %v749, %v854
          %v859 = vmul.f32 %v750, %v854
          %v860 = vmul.f32 %v751, %v854
          %v861 = vmul.f32 %v752, %v854
          %v862 = vmul.f32 %v753, %v854
          %v863 = vadd.f32 %v843, %v855
          %v864 = vadd.f32 %v844, %v856
          %v865 = vadd.f32 %v845, %v857
          %v866 = vadd.f32 %v846, %v858
          %v867 = vadd.f32 %v847, %v859
          %v868 = vadd.f32 %v848, %v860
          %v869 = vadd.f32 %v849, %v861
          %v870 = vadd.f32 %v850, %v862
          %v871 = vlaneseq
          %v872 = vshrl.u32 %v871, 7
          %v873 = vsub.s32 4, %v872
          %v874 = vrot.slane %v789, %v873
          %v875 = vmul.f32 %v757, %v874
          %v876 = vmul.f32 %v758, %v874
          %v877 = vmul.f32 %v759, %v874
          %v878 = vmul.f32 %v760, %v874
          %v879 = vmul.f32 %v761, %v874
          %v880 = vmul.f32 %v762, %v874
          %v881 = vmul.f32 %v763, %v874
          %v882 = vmul.f32 %v764, %v874
          %v883 = vadd.f32 %v863, %v875
          %v884 = vadd.f32 %v864, %v876
          %v885 = vadd.f32 %v865, %v877
          %v886 = vadd.f32 %v866, %v878
          %v887 = vadd.f32 %v867, %v879
          %v888 = vadd.f32 %v868, %v880
          %v889 = vadd.f32 %v869, %v881
          %v890 = vadd.f32 %v870, %v882
          %v891 = vlaneseq
          %v892 = vshrl.u32 %v891, 7
          %v893 = vsub.s32 5, %v892
          %v894 = vrot.slane %v789, %v893
          %v895 = vmul.f32 %v768, %v894
          %v896 = vmul.f32 %v769, %v894
          %v897 = vmul.f32 %v770, %v894
          %v898 = vmul.f32 %v771, %v894
          %v899 = vmul.f32 %v772, %v894
          %v900 = vmul.f32 %v773, %v894
          %v901 = vmul.f32 %v774, %v894
          %v902 = vmul.f32 %v775, %v894
          %v903 = vadd.f32 %v883, %v895
          %v904 = vadd.f32 %v884, %v896
          %v905 = vadd.f32 %v885, %v897
          %v906 = vadd.f32 %v886, %v898
          %v907 = vadd.f32 %v887, %v899
          %v908 = vadd.f32 %v888, %v900
          %v909 = vadd.f32 %v889, %v901
          %v910 = vadd.f32 %v890, %v902
          %v911 = vlaneseq
          %v912 = vshrl.u32 %v911, 7
          %v913 = vsub.s32 6, %v912
          %v914 = vrot.slane %v789, %v913
          %v915 = vmul.f32 %v747, %v914
          %v916 = vmul.f32 %v748, %v914
          %v917 = vmul.f32 %v749, %v914
          %v918 = vmul.f32 %v750, %v914
          %v919 = vmul.f32 %v751, %v914
          %v920 = vmul.f32 %v752, %v914
          %v921 = vmul.f32 %v753, %v914
          %v922 = vmul.f32 %v754, %v914
          %v923 = vadd.f32 %v903, %v915
          %v924 = vadd.f32 %v904, %v916
          %v925 = vadd.f32 %v905, %v917
          %v926 = vadd.f32 %v906, %v918
          %v927 = vadd.f32 %v907, %v919
          %v928 = vadd.f32 %v908, %v920
          %v929 = vadd.f32 %v909, %v921
          %v930 = vadd.f32 %v910, %v922
          %v931 = vlaneseq
          %v932 = vshrl.u32 %v931, 7
          %v933 = vsub.s32 7, %v932
          %v934 = vrot.slane %v789, %v933
          %v935 = vmul.f32 %v758, %v934
          %v936 = vmul.f32 %v759, %v934
          %v937 = vmul.f32 %v760, %v934
          %v938 = vmul.f32 %v761, %v934
          %v939 = vmul.f32 %v762, %v934
          %v940 = vmul.f32 %v763, %v934
          %v941 = vmul.f32 %v764, %v934
          %v942 = vmul.f32 %v765, %v934
          %v943 = vadd.f32 %v923, %v935
          %v944 = vadd.f32 %v924, %v936
          %v945 = vadd.f32 %v925, %v937
          %v946 = vadd.f32 %v926, %v938
          %v947 = vadd.f32 %v927, %v939
          %v948 = vadd.f32 %v928, %v940
          %v949 = vadd.f32 %v929, %v941
          %v950 = vadd.f32 %v930, %v942
          %v951 = vlaneseq
          %v952 = vshrl.u32 %v951, 7
          %v953 = vsub.s32 0, %v952
          %v954 = vrot.slane %v790, %v953
          %v955 = vmul.f32 %v769, %v954
          %v956 = vmul.f32 %v770, %v954
          %v957 = vmul.f32 %v771, %v954
          %v958 = vmul.f32 %v772, %v954
          %v959 = vmul.f32 %v773, %v954
          %v960 = vmul.f32 %v774, %v954
          %v961 = vmul.f32 %v775, %v954
          %v962 = vmul.f32 %v776, %v954
          %v963 = vadd.f32 %v943, %v955
          %v964 = vadd.f32 %v944, %v956
          %v965 = vadd.f32 %v945, %v957
          %v966 = vadd.f32 %v946, %v958
          %v967 = vadd.f32 %v947, %v959
          %v968 = vadd.f32 %v948, %v960
          %v969 = vadd.f32 %v949, %v961
          %v970 = vadd.f32 %v950, %v962
          %v971 = vld [vmem:[%s4] sm:$0x1]
          %v973 = vlaneseq
          %v974 = vshrl.u32 %v973, 7
          %v975 = vsub.s32 0, %v974
          %v976 = vrot.slane %v971, %v975
          %v978 = vadd.f32 %v963, %v976
          %v979 = vadd.f32 %v964, %v976
          %v980 = vadd.f32 %v965, %v976
          %v981 = vadd.f32 %v966, %v976
          %v982 = vadd.f32 %v967, %v976
          %v983 = vadd.f32 %v968, %v976
          %v984 = vadd.f32 %v969, %v976
          %v985 = vadd.f32 %v970, %v976
          %v986 = vxor.u32 %v978, 2147483648
          %v987 = vxor.u32 %v979, 2147483648
          %v988 = vxor.u32 %v980, 2147483648
          %v989 = vxor.u32 %v981, 2147483648
          %v990 = vxor.u32 %v982, 2147483648
          %v991 = vxor.u32 %v983, 2147483648
          %v992 = vxor.u32 %v984, 2147483648
          %v993 = vxor.u32 %v985, 2147483648
          %v994 = vmul.f32 %v986, 1.442695
          %v995 = vpow.pop %v994
          %v996 = vmul.f32 %v987, 1.442695
          %v997 = vpow.pop %v996
          %v998 = vmul.f32 %v988, 1.442695
          %v999 = vpow.pop %v998
          %v1000 = vmul.f32 %v989, 1.442695
          %v1001 = vpow.pop %v1000
          %v1002 = vmul.f32 %v990, 1.442695
          %v1003 = vpow.pop %v1002
          %v1004 = vmul.f32 %v991, 1.442695
          %v1005 = vpow.pop %v1004
          %v1006 = vmul.f32 %v992, 1.442695
          %v1007 = vpow.pop %v1006
          %v1008 = vmul.f32 %v993, 1.442695
          %v1009 = vpow.pop %v1008
          %v1010 = vadd.f32 %v995, 1.0
          %v1011 = vadd.f32 %v997, 1.0
          %v1012 = vadd.f32 %v999, 1.0
          %v1013 = vadd.f32 %v1001, 1.0
          %v1014 = vadd.f32 %v1003, 1.0
          %v1015 = vadd.f32 %v1005, 1.0
          %v1016 = vadd.f32 %v1007, 1.0
          %v1017 = vadd.f32 %v1009, 1.0
          %v1018 = vrcp.pop %v1010
          %v1019 = vmul.f32 1.0, %v1018
          %v1020 = vrcp.pop %v1011
          %v1021 = vmul.f32 1.0, %v1020
          %v1022 = vrcp.pop %v1012
          %v1023 = vmul.f32 1.0, %v1022
          %v1024 = vrcp.pop %v1013
          %v1025 = vmul.f32 1.0, %v1024
          %v1026 = vrcp.pop %v1014
          %v1027 = vmul.f32 1.0, %v1026
          %v1028 = vrcp.pop %v1015
          %v1029 = vmul.f32 1.0, %v1028
          %v1030 = vrcp.pop %v1016
          %v1031 = vmul.f32 1.0, %v1030
          %v1032 = vrcp.pop %v1017
          %v1033 = vmul.f32 1.0, %v1032
          %v1034 = vmul.f32 %v978, %v1019
          %v1035 = vmul.f32 %v979, %v1021
          %v1036 = vmul.f32 %v980, %v1023
          %v1037 = vmul.f32 %v981, %v1025
          %v1038 = vmul.f32 %v982, %v1027
          %v1039 = vmul.f32 %v983, %v1029
          %v1040 = vmul.f32 %v984, %v1031
          %v1041 = vmul.f32 %v985, %v1033
          %v1042 = vpack.c.bf16 %v1035, %v1034
          %v1043 = vpack.c.bf16 %v1037, %v1036
          %v1044 = vpack.c.bf16 %v1039, %v1038
          %v1045 = vpack.c.bf16 %v1041, %v1040
          %v1046 = vld [vmem:[%s7] sm:$0xf]
          %v1047 = vld [vmem:[%s7 + $0x4] sm:$0xf]
          %v1048 = vld [vmem:[%s7 + $0x8] sm:$0xf]
          %v1049 = vld [vmem:[%s7 + $0xc] sm:$0xf]
          %v1050 = vld [vmem:[%s5] sm:$0xff]
          %v1051 = vld [vmem:[%s5 + $0x8] sm:$0x1]
          %v1052 = vlaneseq
          %v1053 = vshrl.u32 %v1052, 7
          %v1054 = vsub.s32 0, %v1053
          %v1055 = vrot.slane %v1050, %v1054
          %v1056 = vmul.f32 %v733, %v1055
          %v1057 = vmul.f32 %v734, %v1055
          %v1058 = vmul.f32 %v735, %v1055
          %v1059 = vmul.f32 %v736, %v1055
          %v1060 = vmul.f32 %v737, %v1055
          %v1061 = vmul.f32 %v738, %v1055
          %v1062 = vmul.f32 %v739, %v1055
          %v1063 = vmul.f32 %v740, %v1055
          %v1064 = vadd.f32 %v1056, 0.0
          %v1065 = vadd.f32 %v1057, 0.0
          %v1066 = vadd.f32 %v1058, 0.0
          %v1067 = vadd.f32 %v1059, 0.0
          %v1068 = vadd.f32 %v1060, 0.0
          %v1069 = vadd.f32 %v1061, 0.0
          %v1070 = vadd.f32 %v1062, 0.0
          %v1071 = vadd.f32 %v1063, 0.0
          %v1072 = vlaneseq
          %v1073 = vshrl.u32 %v1072, 7
          %v1074 = vsub.s32 1, %v1073
          %v1075 = vrot.slane %v1050, %v1074
          %v1076 = vmul.f32 %v755, %v1075
          %v1077 = vmul.f32 %v756, %v1075
          %v1078 = vmul.f32 %v757, %v1075
          %v1079 = vmul.f32 %v758, %v1075
          %v1080 = vmul.f32 %v759, %v1075
          %v1081 = vmul.f32 %v760, %v1075
          %v1082 = vmul.f32 %v761, %v1075
          %v1083 = vmul.f32 %v762, %v1075
          %v1084 = vadd.f32 %v1064, %v1076
          %v1085 = vadd.f32 %v1065, %v1077
          %v1086 = vadd.f32 %v1066, %v1078
          %v1087 = vadd.f32 %v1067, %v1079
          %v1088 = vadd.f32 %v1068, %v1080
          %v1089 = vadd.f32 %v1069, %v1081
          %v1090 = vadd.f32 %v1070, %v1082
          %v1091 = vadd.f32 %v1071, %v1083
          %v1092 = vlaneseq
          %v1093 = vshrl.u32 %v1092, 7
          %v1094 = vsub.s32 2, %v1093
          %v1095 = vrot.slane %v1050, %v1094
          %v1096 = vmul.f32 %v777, %v1095
          %v1097 = vmul.f32 %v778, %v1095
          %v1098 = vmul.f32 %v779, %v1095
          %v1099 = vmul.f32 %v780, %v1095
          %v1100 = vmul.f32 %v781, %v1095
          %v1101 = vmul.f32 %v782, %v1095
          %v1102 = vmul.f32 %v783, %v1095
          %v1103 = vmul.f32 %v784, %v1095
          %v1104 = vadd.f32 %v1084, %v1096
          %v1105 = vadd.f32 %v1085, %v1097
          %v1106 = vadd.f32 %v1086, %v1098
          %v1107 = vadd.f32 %v1087, %v1099
          %v1108 = vadd.f32 %v1088, %v1100
          %v1109 = vadd.f32 %v1089, %v1101
          %v1110 = vadd.f32 %v1090, %v1102
          %v1111 = vadd.f32 %v1091, %v1103
          %v1112 = vlaneseq
          %v1113 = vshrl.u32 %v1112, 7
          %v1114 = vsub.s32 3, %v1113
          %v1115 = vrot.slane %v1050, %v1114
          %v1116 = vmul.f32 %v735, %v1115
          %v1117 = vmul.f32 %v736, %v1115
          %v1118 = vmul.f32 %v737, %v1115
          %v1119 = vmul.f32 %v738, %v1115
          %v1120 = vmul.f32 %v739, %v1115
          %v1121 = vmul.f32 %v740, %v1115
          %v1122 = vmul.f32 %v741, %v1115
          %v1123 = vmul.f32 %v742, %v1115
          %v1124 = vadd.f32 %v1104, %v1116
          %v1125 = vadd.f32 %v1105, %v1117
          %v1126 = vadd.f32 %v1106, %v1118
          %v1127 = vadd.f32 %v1107, %v1119
          %v1128 = vadd.f32 %v1108, %v1120
          %v1129 = vadd.f32 %v1109, %v1121
          %v1130 = vadd.f32 %v1110, %v1122
          %v1131 = vadd.f32 %v1111, %v1123
          %v1132 = vlaneseq
          %v1133 = vshrl.u32 %v1132, 7
          %v1134 = vsub.s32 4, %v1133
          %v1135 = vrot.slane %v1050, %v1134
          %v1136 = vmul.f32 %v757, %v1135
          %v1137 = vmul.f32 %v758, %v1135
          %v1138 = vmul.f32 %v759, %v1135
          %v1139 = vmul.f32 %v760, %v1135
          %v1140 = vmul.f32 %v761, %v1135
          %v1141 = vmul.f32 %v762, %v1135
          %v1142 = vmul.f32 %v763, %v1135
          %v1143 = vmul.f32 %v764, %v1135
          %v1144 = vadd.f32 %v1124, %v1136
          %v1145 = vadd.f32 %v1125, %v1137
          %v1146 = vadd.f32 %v1126, %v1138
          %v1147 = vadd.f32 %v1127, %v1139
          %v1148 = vadd.f32 %v1128, %v1140
          %v1149 = vadd.f32 %v1129, %v1141
          %v1150 = vadd.f32 %v1130, %v1142
          %v1151 = vadd.f32 %v1131, %v1143
          %v1152 = vlaneseq
          %v1153 = vshrl.u32 %v1152, 7
          %v1154 = vsub.s32 5, %v1153
          %v1155 = vrot.slane %v1050, %v1154
          %v1156 = vmul.f32 %v779, %v1155
          %v1157 = vmul.f32 %v780, %v1155
          %v1158 = vmul.f32 %v781, %v1155
          %v1159 = vmul.f32 %v782, %v1155
          %v1160 = vmul.f32 %v783, %v1155
          %v1161 = vmul.f32 %v784, %v1155
          %v1162 = vmul.f32 %v785, %v1155
          %v1163 = vmul.f32 %v786, %v1155
          %v1164 = vadd.f32 %v1144, %v1156
          %v1165 = vadd.f32 %v1145, %v1157
          %v1166 = vadd.f32 %v1146, %v1158
          %v1167 = vadd.f32 %v1147, %v1159
          %v1168 = vadd.f32 %v1148, %v1160
          %v1169 = vadd.f32 %v1149, %v1161
          %v1170 = vadd.f32 %v1150, %v1162
          %v1171 = vadd.f32 %v1151, %v1163
          %v1172 = vlaneseq
          %v1173 = vshrl.u32 %v1172, 7
          %v1174 = vsub.s32 6, %v1173
          %v1175 = vrot.slane %v1050, %v1174
          %v1176 = vmul.f32 %v737, %v1175
          %v1177 = vmul.f32 %v738, %v1175
          %v1178 = vmul.f32 %v739, %v1175
          %v1179 = vmul.f32 %v740, %v1175
          %v1180 = vmul.f32 %v741, %v1175
          %v1181 = vmul.f32 %v742, %v1175
          %v1182 = vmul.f32 %v743, %v1175
          %v1183 = vmul.f32 %v744, %v1175
          %v1184 = vadd.f32 %v1164, %v1176
          %v1185 = vadd.f32 %v1165, %v1177
          %v1186 = vadd.f32 %v1166, %v1178
          %v1187 = vadd.f32 %v1167, %v1179
          %v1188 = vadd.f32 %v1168, %v1180
          %v1189 = vadd.f32 %v1169, %v1181
          %v1190 = vadd.f32 %v1170, %v1182
          %v1191 = vadd.f32 %v1171, %v1183
          %v1192 = vlaneseq
          %v1193 = vshrl.u32 %v1192, 7
          %v1194 = vsub.s32 7, %v1193
          %v1195 = vrot.slane %v1050, %v1194
          %v1196 = vmul.f32 %v759, %v1195
          %v1197 = vmul.f32 %v760, %v1195
          %v1198 = vmul.f32 %v761, %v1195
          %v1199 = vmul.f32 %v762, %v1195
          %v1200 = vmul.f32 %v763, %v1195
          %v1201 = vmul.f32 %v764, %v1195
          %v1202 = vmul.f32 %v765, %v1195
          %v1203 = vmul.f32 %v766, %v1195
          %v1204 = vadd.f32 %v1184, %v1196
          %v1205 = vadd.f32 %v1185, %v1197
          %v1206 = vadd.f32 %v1186, %v1198
          %v1207 = vadd.f32 %v1187, %v1199
          %v1208 = vadd.f32 %v1188, %v1200
          %v1209 = vadd.f32 %v1189, %v1201
          %v1210 = vadd.f32 %v1190, %v1202
          %v1211 = vadd.f32 %v1191, %v1203
          %v1212 = vlaneseq
          %v1213 = vshrl.u32 %v1212, 7
          %v1214 = vsub.s32 0, %v1213
          %v1215 = vrot.slane %v1051, %v1214
          %v1216 = vmul.f32 %v781, %v1215
          %v1217 = vmul.f32 %v782, %v1215
          %v1218 = vmul.f32 %v783, %v1215
          %v1219 = vmul.f32 %v784, %v1215
          %v1220 = vmul.f32 %v785, %v1215
          %v1221 = vmul.f32 %v786, %v1215
          %v1222 = vmul.f32 %v787, %v1215
          %v1223 = vmul.f32 %v788, %v1215
          %v1224 = vadd.f32 %v1204, %v1216
          %v1225 = vadd.f32 %v1205, %v1217
          %v1226 = vadd.f32 %v1206, %v1218
          %v1227 = vadd.f32 %v1207, %v1219
          %v1228 = vadd.f32 %v1208, %v1220
          %v1229 = vadd.f32 %v1209, %v1221
          %v1230 = vadd.f32 %v1210, %v1222
          %v1231 = vadd.f32 %v1211, %v1223
          %v1232 = vld [vmem:[%s6] sm:$0x1]
          %v1234 = vlaneseq
          %v1235 = vshrl.u32 %v1234, 7
          %v1236 = vsub.s32 0, %v1235
          %v1237 = vrot.slane %v1232, %v1236
          %v1239 = vadd.f32 %v1224, %v1237
          %v1240 = vadd.f32 %v1225, %v1237
          %v1241 = vadd.f32 %v1226, %v1237
          %v1242 = vadd.f32 %v1227, %v1237
          %v1243 = vadd.f32 %v1228, %v1237
          %v1244 = vadd.f32 %v1229, %v1237
          %v1245 = vadd.f32 %v1230, %v1237
          %v1246 = vadd.f32 %v1231, %v1237
          %v1247 = vxor.u32 %v1239, 2147483648
          %v1248 = vxor.u32 %v1240, 2147483648
          %v1249 = vxor.u32 %v1241, 2147483648
          %v1250 = vxor.u32 %v1242, 2147483648
          %v1251 = vxor.u32 %v1243, 2147483648
          %v1252 = vxor.u32 %v1244, 2147483648
          %v1253 = vxor.u32 %v1245, 2147483648
          %v1254 = vxor.u32 %v1246, 2147483648
          %v1255 = vmul.f32 %v1247, 1.442695
          %v1256 = vpow.pop %v1255
          %v1257 = vmul.f32 %v1248, 1.442695
          %v1258 = vpow.pop %v1257
          %v1259 = vmul.f32 %v1249, 1.442695
          %v1260 = vpow.pop %v1259
          %v1261 = vmul.f32 %v1250, 1.442695
          %v1262 = vpow.pop %v1261
          %v1263 = vmul.f32 %v1251, 1.442695
          %v1264 = vpow.pop %v1263
          %v1265 = vmul.f32 %v1252, 1.442695
          %v1266 = vpow.pop %v1265
          %v1267 = vmul.f32 %v1253, 1.442695
          %v1268 = vpow.pop %v1267
          %v1269 = vmul.f32 %v1254, 1.442695
          %v1270 = vpow.pop %v1269
          %v1271 = vadd.f32 %v1256, 1.0
          %v1272 = vadd.f32 %v1258, 1.0
          %v1273 = vadd.f32 %v1260, 1.0
          %v1274 = vadd.f32 %v1262, 1.0
          %v1275 = vadd.f32 %v1264, 1.0
          %v1276 = vadd.f32 %v1266, 1.0
          %v1277 = vadd.f32 %v1268, 1.0
          %v1278 = vadd.f32 %v1270, 1.0
          %v1279 = vrcp.pop %v1271
          %v1280 = vmul.f32 1.0, %v1279
          %v1281 = vrcp.pop %v1272
          %v1282 = vmul.f32 1.0, %v1281
          %v1283 = vrcp.pop %v1273
          %v1284 = vmul.f32 1.0, %v1283
          %v1285 = vrcp.pop %v1274
          %v1286 = vmul.f32 1.0, %v1285
          %v1287 = vrcp.pop %v1275
          %v1288 = vmul.f32 1.0, %v1287
          %v1289 = vrcp.pop %v1276
          %v1290 = vmul.f32 1.0, %v1289
          %v1291 = vrcp.pop %v1277
          %v1292 = vmul.f32 1.0, %v1291
          %v1293 = vrcp.pop %v1278
          %v1294 = vmul.f32 1.0, %v1293
          %v1295 = vmul.f32 %v1239, %v1280
          %v1296 = vmul.f32 %v1240, %v1282
          %v1297 = vmul.f32 %v1241, %v1284
          %v1298 = vmul.f32 %v1242, %v1286
          %v1299 = vmul.f32 %v1243, %v1288
          %v1300 = vmul.f32 %v1244, %v1290
          %v1301 = vmul.f32 %v1245, %v1292
          %v1302 = vmul.f32 %v1246, %v1294
          %v1303 = vpack.c.bf16 %v1296, %v1295
          %v1304 = vpack.c.bf16 %v1298, %v1297
          %v1305 = vpack.c.bf16 %v1300, %v1299
          %v1306 = vpack.c.bf16 %v1302, %v1301
          %v1307 = vld [vmem:[%s8] sm:$0xf]
          %v1308 = vld [vmem:[%s8 + $0x4] sm:$0xf]
          %v1309 = vld [vmem:[%s8 + $0x8] sm:$0xf]
          %v1310 = vld [vmem:[%s8 + $0xc] sm:$0xf]
          %v1315 = vunpack.c.l.b16 %v1307
          %v1316 = vunpack.c.l.b16 %v1308
          %v1317 = vunpack.c.l.b16 %v1309
          %v1318 = vunpack.c.l.b16 %v1310
          %v1319 = vpack.c.b16 %v1316, %v1315
          %v1320 = vpack.c.b16 %v1318, %v1317
          %v1324 = vsel %vm716, %v1303, 0
          %v1327 = vsel %vm716, %v1304, 0
          %v1330 = vsel %vm716, %v1305, 0
          %v1333 = vsel %vm716, %v1306, 0
          %1335 = vmatprep.subr.bf16.mxu0 0
          %1336 = vmatpush1.bf16.msra.mxu0 %v1319
          %1337 = vmatprep.subr.bf16.mxu0 0
          %1338 = vmatpush1.bf16.msra.mxu0 %v1320
          %1339 = vmatprep.subr.bf16.mxu0 0
          %1340 = vmatpush1.bf16.msra.mxu0 0
          %1341 = vmatprep.subr.bf16.mxu0 0
          %1342 = vmatpush1.bf16.msra.mxu0 0
          %1343 = vmatprep.subr.bf16.mxu0 0
          %1344 = vmatpush1.bf16.msra.mxu0 0
          %1345 = vmatprep.subr.bf16.mxu0 0
          %1346 = vmatpush1.bf16.msra.mxu0 0
          %1347 = vmatprep.subr.bf16.mxu0 0
          %1348 = vmatpush1.bf16.msra.mxu0 0
          %1349 = vmatprep.subr.bf16.mxu0 0
          %1350 = vmatpush1.bf16.msra.mxu0 0
          %1351 = vmatprep.subr.bf16.mxu0 0
          %1352 = vmatpush1.bf16.msra.mxu0 0
          %1353 = vmatprep.subr.bf16.mxu0 0
          %1354 = vmatpush1.bf16.msra.mxu0 0
          %1355 = vmatprep.subr.bf16.mxu0 0
          %1356 = vmatpush1.bf16.msra.mxu0 0
          %1357 = vmatprep.subr.bf16.mxu0 0
          %1358 = vmatpush1.bf16.msra.mxu0 0
          %1359 = vmatprep.subr.bf16.mxu0 0
          %1360 = vmatpush1.bf16.msra.mxu0 0
          %1361 = vmatprep.subr.bf16.mxu0 0
          %1362 = vmatpush1.bf16.msra.mxu0 0
          %1363 = vmatprep.subr.bf16.mxu0 0
          %1364 = vmatpush1.bf16.msra.mxu0 0
          %1365 = vmatprep.subr.bf16.mxu0 0
          %1366 = vmatpush1.bf16.msra.mxu0 0
          %1367 = vmatprep.mubr.bf16.mxu0 0
          %1368 = vmatmul.mubr.bf16.gmra.mrb[0].mxu0 %v1324
          %v1369 = vpop.f32.mrb[0].mxu0
          %v1370 = vadd.f32 0.0, %v1369
          %v1371 = vpop.f32.mrb[0].mxu0
          %v1372 = vpop.f32.mrb[0].mxu0
          %v1373 = vadd.f32 0.0, %v1372
          %v1374 = vpop.f32.mrb[0].mxu0
          %1375 = vmatprep.mubr.bf16.mxu0 0
          %1376 = vmatmul.mubr.bf16.gmra.mrb[0].mxu0 %v1327
          %v1377 = vpop.f32.mrb[0].mxu0
          %v1378 = vadd.f32 0.0, %v1377
          %v1379 = vpop.f32.mrb[0].mxu0
          %v1380 = vpop.f32.mrb[0].mxu0
          %v1381 = vadd.f32 0.0, %v1380
          %v1382 = vpop.f32.mrb[0].mxu0
          %1383 = vmatprep.mubr.bf16.mxu0 0
          %1384 = vmatmul.mubr.bf16.gmra.mrb[0].mxu0 %v1330
          %v1385 = vpop.f32.mrb[0].mxu0
          %v1386 = vadd.f32 0.0, %v1385
          %v1387 = vpop.f32.mrb[0].mxu0
          %v1388 = vpop.f32.mrb[0].mxu0
          %v1389 = vadd.f32 0.0, %v1388
          %v1390 = vpop.f32.mrb[0].mxu0
          %1391 = vmatprep.mubr.bf16.mxu0 0
          %1392 = vmatmul.mubr.bf16.gmra.mrb[0].mxu0 %v1333
          %v1393 = vpop.f32.mrb[0].mxu0
          %v1394 = vadd.f32 0.0, %v1393
          %v1395 = vpop.f32.mrb[0].mxu0
          %v1396 = vpop.f32.mrb[0].mxu0
          %v1397 = vadd.f32 0.0, %v1396
          %v1398 = vpop.f32.mrb[0].mxu0
          %1399 = vdwg.mxu0
          %v1404 = vunpack.c.l.b16 %v1046
          %v1405 = vunpack.c.l.b16 %v1047
          %v1406 = vunpack.c.l.b16 %v1048
          %v1407 = vunpack.c.l.b16 %v1049
          %v1408 = vpack.c.b16 %v1405, %v1404
          %v1409 = vpack.c.b16 %v1407, %v1406
          %v1413 = vsel %vm716, %v1042, 0
          %v1416 = vsel %vm716, %v1043, 0
          %v1419 = vsel %vm716, %v1044, 0
          %v1422 = vsel %vm716, %v1045, 0
          %1424 = vmatprep.subr.bf16.mxu0 0
          %1425 = vmatpush1.bf16.msra.mxu0 %v1408
          %1426 = vmatprep.subr.bf16.mxu0 0
          %1427 = vmatpush1.bf16.msra.mxu0 %v1409
          %1428 = vmatprep.subr.bf16.mxu0 0
          %1429 = vmatpush1.bf16.msra.mxu0 0
          %1430 = vmatprep.subr.bf16.mxu0 0
          %1431 = vmatpush1.bf16.msra.mxu0 0
          %1432 = vmatprep.subr.bf16.mxu0 0
          %1433 = vmatpush1.bf16.msra.mxu0 0
          %1434 = vmatprep.subr.bf16.mxu0 0
          %1435 = vmatpush1.bf16.msra.mxu0 0
          %1436 = vmatprep.subr.bf16.mxu0 0
          %1437 = vmatpush1.bf16.msra.mxu0 0
          %1438 = vmatprep.subr.bf16.mxu0 0
          %1439 = vmatpush1.bf16.msra.mxu0 0
          %1440 = vmatprep.subr.bf16.mxu0 0
          %1441 = vmatpush1.bf16.msra.mxu0 0
          %1442 = vmatprep.subr.bf16.mxu0 0
          %1443 = vmatpush1.bf16.msra.mxu0 0
          %1444 = vmatprep.subr.bf16.mxu0 0
          %1445 = vmatpush1.bf16.msra.mxu0 0
          %1446 = vmatprep.subr.bf16.mxu0 0
          %1447 = vmatpush1.bf16.msra.mxu0 0
          %1448 = vmatprep.subr.bf16.mxu0 0
          %1449 = vmatpush1.bf16.msra.mxu0 0
          %1450 = vmatprep.subr.bf16.mxu0 0
          %1451 = vmatpush1.bf16.msra.mxu0 0
          %1452 = vmatprep.subr.bf16.mxu0 0
          %1453 = vmatpush1.bf16.msra.mxu0 0
          %1454 = vmatprep.subr.bf16.mxu0 0
          %1455 = vmatpush1.bf16.msra.mxu0 0
          %1456 = vmatprep.mubr.bf16.mxu0 0
          %1457 = vmatmul.mubr.bf16.gmra.mrb[0].mxu0 %v1413
          %v1458 = vpop.f32.mrb[0].mxu0
          %v1459 = vadd.f32 %v1370, %v1458
          %v1460 = vpop.f32.mrb[0].mxu0
          %v1461 = vpop.f32.mrb[0].mxu0
          %v1462 = vadd.f32 %v1373, %v1461
          %v1463 = vpop.f32.mrb[0].mxu0
          %1464 = vmatprep.mubr.bf16.mxu0 0
          %1465 = vmatmul.mubr.bf16.gmra.mrb[0].mxu0 %v1416
          %v1466 = vpop.f32.mrb[0].mxu0
          %v1467 = vadd.f32 %v1378, %v1466
          %v1468 = vpop.f32.mrb[0].mxu0
          %v1469 = vpop.f32.mrb[0].mxu0
          %v1470 = vadd.f32 %v1381, %v1469
          %v1471 = vpop.f32.mrb[0].mxu0
          %1472 = vmatprep.mubr.bf16.mxu0 0
          %1473 = vmatmul.mubr.bf16.gmra.mrb[0].mxu0 %v1419
          %v1474 = vpop.f32.mrb[0].mxu0
          %v1475 = vadd.f32 %v1386, %v1474
          %v1476 = vpop.f32.mrb[0].mxu0
          %v1477 = vpop.f32.mrb[0].mxu0
          %v1478 = vadd.f32 %v1389, %v1477
          %v1479 = vpop.f32.mrb[0].mxu0
          %1480 = vmatprep.mubr.bf16.mxu0 0
          %1481 = vmatmul.mubr.bf16.gmra.mrb[0].mxu0 %v1422
          %v1482 = vpop.f32.mrb[0].mxu0
          %v1483 = vadd.f32 %v1394, %v1482
          %v1484 = vpop.f32.mrb[0].mxu0
          %v1485 = vpop.f32.mrb[0].mxu0
          %v1486 = vadd.f32 %v1397, %v1485
          %v1487 = vpop.f32.mrb[0].mxu0
          %1488 = vdwg.mxu0
          %v1489 = vld [vmem:[%s9] sm:$0x1]
          %v1491 = vlaneseq
          %v1492 = vshrl.u32 %v1491, 7
          %v1493 = vsub.s32 0, %v1492
          %v1494 = vrot.slane %v1489, %v1493
          %v1496 = vadd.f32 %v1459, %v1494
          %v1497 = vadd.f32 %v1462, %v1494
          %v1498 = vadd.f32 %v1467, %v1494
          %v1499 = vadd.f32 %v1470, %v1494
          %v1500 = vadd.f32 %v1475, %v1494
          %v1501 = vadd.f32 %v1478, %v1494
          %v1502 = vadd.f32 %v1483, %v1494
          %v1503 = vadd.f32 %v1486, %v1494
          %v1504 = vxor.u32 %v1496, 2147483648
          %v1505 = vxor.u32 %v1497, 2147483648
          %v1506 = vxor.u32 %v1498, 2147483648
          %v1507 = vxor.u32 %v1499, 2147483648
          %v1508 = vxor.u32 %v1500, 2147483648
          %v1509 = vxor.u32 %v1501, 2147483648
          %v1510 = vxor.u32 %v1502, 2147483648
          %v1511 = vxor.u32 %v1503, 2147483648
          %v1512 = vmul.f32 %v1504, 1.442695
          %v1513 = vpow.pop %v1512
          %v1514 = vmul.f32 %v1505, 1.442695
          %v1515 = vpow.pop %v1514
          %v1516 = vmul.f32 %v1506, 1.442695
          %v1517 = vpow.pop %v1516
          %v1518 = vmul.f32 %v1507, 1.442695
          %v1519 = vpow.pop %v1518
          %v1520 = vmul.f32 %v1508, 1.442695
          %v1521 = vpow.pop %v1520
          %v1522 = vmul.f32 %v1509, 1.442695
          %v1523 = vpow.pop %v1522
          %v1524 = vmul.f32 %v1510, 1.442695
          %v1525 = vpow.pop %v1524
          %v1526 = vmul.f32 %v1511, 1.442695
          %v1527 = vpow.pop %v1526
          %v1528 = vadd.f32 %v1513, 1.0
          %v1529 = vadd.f32 %v1515, 1.0
          %v1530 = vadd.f32 %v1517, 1.0
          %v1531 = vadd.f32 %v1519, 1.0
          %v1532 = vadd.f32 %v1521, 1.0
          %v1533 = vadd.f32 %v1523, 1.0
          %v1534 = vadd.f32 %v1525, 1.0
          %v1535 = vadd.f32 %v1527, 1.0
          %v1536 = vrcp.pop %v1528
          %v1537 = vmul.f32 1.0, %v1536
          %v1538 = vrcp.pop %v1529
          %v1539 = vmul.f32 1.0, %v1538
          %v1540 = vrcp.pop %v1530
          %v1541 = vmul.f32 1.0, %v1540
          %v1542 = vrcp.pop %v1531
          %v1543 = vmul.f32 1.0, %v1542
          %v1544 = vrcp.pop %v1532
          %v1545 = vmul.f32 1.0, %v1544
          %v1546 = vrcp.pop %v1533
          %v1547 = vmul.f32 1.0, %v1546
          %v1548 = vrcp.pop %v1534
          %v1549 = vmul.f32 1.0, %v1548
          %v1550 = vrcp.pop %v1535
          %v1551 = vmul.f32 1.0, %v1550
          %v1552 = vmul.f32 %v1496, %v1537
          %v1553 = vmul.f32 %v1497, %v1539
          %v1554 = vmul.f32 %v1498, %v1541
          %v1555 = vmul.f32 %v1499, %v1543
          %v1556 = vmul.f32 %v1500, %v1545
          %v1557 = vmul.f32 %v1501, %v1547
          %v1558 = vmul.f32 %v1502, %v1549
          %v1559 = vmul.f32 %v1503, %v1551
          %v1560 = vld [vmem:[#allocation4] sm:$0x1]
          %v1561 = vsel %vm716, %v1552, 0.0
          %v1562 = vsel %vm716, %v1553, 0.0
          %v1563 = vadd.f32 %v1561, %v1562
          %v1564 = vsel %vm716, %v1554, 0.0
          %v1565 = vadd.f32 %v1563, %v1564
          %v1566 = vsel %vm716, %v1555, 0.0
          %v1567 = vadd.f32 %v1565, %v1566
          %v1568 = vsel %vm716, %v1556, 0.0
          %v1569 = vadd.f32 %v1567, %v1568
          %v1570 = vsel %vm716, %v1557, 0.0
          %v1571 = vadd.f32 %v1569, %v1570
          %v1572 = vsel %vm716, %v1558, 0.0
          %v1573 = vadd.f32 %v1571, %v1572
          %v1574 = vsel %vm716, %v1559, 0.0
          %v1575 = vadd.f32 %v1573, %v1574
          %v1576 = vrot.slane %v1575, 4
          %v1577 = vadd.f32 %v1575, %v1576
          %v1578 = vrot.slane %v1577, 2
          %v1579 = vadd.f32 %v1577, %v1578
          %v1580 = vrot.slane %v1579, 1
          %v1581 = vadd.f32 %v1579, %v1580
          %v1582 = vadd.f32 %v1560, %v1581
          %vm1583 = vcmask 253952
          %1584 = vst.msk [vmem:[#allocation4] sm:$0x1] %vm1583, %v1582
          %s1585 = smul.u32 %s35, 8
          %s1586 = smul.u32 %s1585, 8
          %s1587 = scalar_lea.vmem [#allocation3], %s1586
          %1588 = vst.msk [vmem:[%s1587] sm:$0xff] %vm716, %v1552
          %1589 = vst.msk [vmem:[%s1587 + $0x8] sm:$0xff] %vm716, %v1553
          %1590 = vst.msk [vmem:[%s1587 + $0x10] sm:$0xff] %vm716, %v1554
          %1591 = vst.msk [vmem:[%s1587 + $0x18] sm:$0xff] %vm716, %v1555
          %1592 = vst.msk [vmem:[%s1587 + $0x20] sm:$0xff] %vm716, %v1556
          %1593 = vst.msk [vmem:[%s1587 + $0x28] sm:$0xff] %vm716, %v1557
          %1594 = vst.msk [vmem:[%s1587 + $0x30] sm:$0xff] %vm716, %v1558
          %1595 = vst.msk [vmem:[%s1587 + $0x38] sm:$0xff] %vm716, %v1559
        $region80: #{context_guided_block_down.3} parent=75 // pred_fallthru
          _
        %p1596 = scmp.eq.s32.totalorder %s34, 1
        // Predicated region
        $region89: #{context_guided_block_down.3} parent=75 // pred_check
          %p1597 = pneg %p1596
        $region90: #{context_guided_block_down.3} parent=75 // pred_check_branch
          %1599 = sbr.rel (%p1597) target = $region92
        $region91: #{context_guided_block_down.3} parent=75 // pred_region
          %p1600 = scmp.eq.s32.totalorder %s35, 0
          // Predicated region
          $region93: #{context_guided_block_down.3} parent=91 // pred_check
            %p1601 = pneg %p1600
          $region94: #{context_guided_block_down.3} parent=91 // pred_check_branch
            %1603 = sbr.rel (%p1601) target = $region96
          $region95: #{context_guided_block_down.3} parent=91 // pred_region
            %v1604 = vld [vmem:[#allocation4] sm:$0x1]
            %v1605 = vmul.f32 %v1604, 0.015625
            %v1606 = vld [vmem:[%s10] sm:$0xff]
            %v1607 = vld [vmem:[%s10 + $0x8] sm:$0xff]
            %v1608 = vld [vmem:[%s10 + $0x10] sm:$0xff]
            %v1609 = vld [vmem:[%s10 + $0x18] sm:$0xff]
            %v1610 = vld [vmem:[%s11] sm:$0x1]
            %vm1611 = vcmask 261120
            %v1613 = vsel %vm1611, %v1605, 0
            %1615 = vmatprep.subr.mxu0 0.0
            %1616 = vmatpush1.msra.mxu0 %v1606
            %1617 = vmatprep.subr.mxu0 0.0
            %1618 = vmatpush1.msra.mxu0 %v1607
            %1619 = vmatprep.subr.mxu0 0.0
            %1620 = vmatpush1.msra.mxu0 %v1608
            %1621 = vmatprep.subr.mxu0 0.0
            %1622 = vmatpush1.msra.mxu0 %v1609
            %1623 = vmatprep.subr.mxu0 0.0
            %1624 = vmatpush1.msra.mxu0 0.0
            %1625 = vmatprep.subr.mxu0 0.0
            %1626 = vmatpush1.msra.mxu0 0.0
            %1627 = vmatprep.subr.mxu0 0.0
            %1628 = vmatpush1.msra.mxu0 0.0
            %1629 = vmatprep.subr.mxu0 0.0
            %1630 = vmatpush1.msra.mxu0 0.0
            %1631 = vmatprep.subr.mxu0 0.0
            %1632 = vmatpush1.msra.mxu0 0.0
            %1633 = vmatprep.subr.mxu0 0.0
            %1634 = vmatpush1.msra.mxu0 0.0
            %1635 = vmatprep.subr.mxu0 0.0
            %1636 = vmatpush1.msra.mxu0 0.0
            %1637 = vmatprep.subr.mxu0 0.0
            %1638 = vmatpush1.msra.mxu0 0.0
            %1639 = vmatprep.subr.mxu0 0.0
            %1640 = vmatpush1.msra.mxu0 0.0
            %1641 = vmatprep.subr.mxu0 0.0
            %1642 = vmatpush1.msra.mxu0 0.0
            %1643 = vmatprep.subr.mxu0 0.0
            %1644 = vmatpush1.msra.mxu0 0.0
            %1645 = vmatprep.subr.mxu0 0.0
            %1646 = vmatpush1.msra.mxu0 0.0
            %1647 = vmatprep.subr.mxu0 0.0
            %1648 = vmatpush1.msra.mxu0 0.0
            %1649 = vmatprep.subr.mxu0 0.0
            %1650 = vmatpush1.msra.mxu0 0.0
            %1651 = vmatprep.subr.mxu0 0.0
            %1652 = vmatpush1.msra.mxu0 0.0
            %1653 = vmatprep.subr.mxu0 0.0
            %1654 = vmatpush1.msra.mxu0 0.0
            %1655 = vmatprep.subr.mxu0 0.0
            %1656 = vmatpush1.msra.mxu0 0.0
            %1657 = vmatprep.subr.mxu0 0.0
            %1658 = vmatpush1.msra.mxu0 0.0
            %1659 = vmatprep.subr.mxu0 0.0
            %1660 = vmatpush1.msra.mxu0 0.0
            %1661 = vmatprep.subr.mxu0 0.0
            %1662 = vmatpush1.msra.mxu0 0.0
            %1663 = vmatprep.subr.mxu0 0.0
            %1664 = vmatpush1.msra.mxu0 0.0
            %1665 = vmatprep.subr.mxu0 0.0
            %1666 = vmatpush1.msra.mxu0 0.0
            %1667 = vmatprep.subr.mxu0 0.0
            %1668 = vmatpush1.msra.mxu0 0.0
            %1669 = vmatprep.subr.mxu0 0.0
            %1670 = vmatpush1.msra.mxu0 0.0
            %1671 = vmatprep.subr.mxu0 0.0
            %1672 = vmatpush1.msra.mxu0 0.0
            %1673 = vmatprep.subr.mxu0 0.0
            %1674 = vmatpush1.msra.mxu0 0.0
            %1675 = vmatprep.subr.mxu0 0.0
            %1676 = vmatpush1.msra.mxu0 0.0
            %1677 = vmatprep.subr.mxu0 0.0
            %1678 = vmatpush1.msra.mxu0 0.0
            %1679 = vmatprep.mubr.f32.mxu0 0.0
            %1680 = vmatmul.mubr.f32.gmra.mrb[0].mxu0 %v1613
            %v1681 = vpop.f32.mrb[0].mxu0
            %v1682 = vadd.f32 %v1610, %v1681
            %v1683 = vpop.f32.mrb[0].mxu0
            %1684 = vdwg.mxu0
            %v1685 = vmax.f32 %v1682, 0.0
            %v1686 = vld [vmem:[%s12] sm:$0x3]
            %v1687 = vld [vmem:[%s13] sm:$0x1]
            %vm1688 = vcmask 15360
            %v1690 = vsel %vm1688, %v1685, 0
            %vm1692 = vcmask 1041408
            %v1694 = vsel %vm1692, %v1686, 0
            %1696 = vmatprep.subr.mxu0 0.0
            %1697 = vmatpush1.msra.mxu0 %v1694
            %1698 = vmatprep.subr.mxu0 0.0
            %1699 = vmatpush1.msra.mxu0 0.0
            %1700 = vmatprep.subr.mxu0 0.0
            %1701 = vmatpush1.msra.mxu0 0.0
            %1702 = vmatprep.subr.mxu0 0.0
            %1703 = vmatpush1.msra.mxu0 0.0
            %1704 = vmatprep.subr.mxu0 0.0
            %1705 = vmatpush1.msra.mxu0 0.0
            %1706 = vmatprep.subr.mxu0 0.0
            %1707 = vmatpush1.msra.mxu0 0.0
            %1708 = vmatprep.subr.mxu0 0.0
            %1709 = vmatpush1.msra.mxu0 0.0
            %1710 = vmatprep.subr.mxu0 0.0
            %1711 = vmatpush1.msra.mxu0 0.0
            %1712 = vmatprep.subr.mxu0 0.0
            %1713 = vmatpush1.msra.mxu0 0.0
            %1714 = vmatprep.subr.mxu0 0.0
            %1715 = vmatpush1.msra.mxu0 0.0
            %1716 = vmatprep.subr.mxu0 0.0
            %1717 = vmatpush1.msra.mxu0 0.0
            %1718 = vmatprep.subr.mxu0 0.0
            %1719 = vmatpush1.msra.mxu0 0.0
            %1720 = vmatprep.subr.mxu0 0.0
            %1721 = vmatpush1.msra.mxu0 0.0
            %1722 = vmatprep.subr.mxu0 0.0
            %1723 = vmatpush1.msra.mxu0 0.0
            %1724 = vmatprep.subr.mxu0 0.0
            %1725 = vmatpush1.msra.mxu0 0.0
            %1726 = vmatprep.subr.mxu0 0.0
            %1727 = vmatpush1.msra.mxu0 0.0
            %1728 = vmatprep.subr.mxu0 0.0
            %1729 = vmatpush1.msra.mxu0 0.0
            %1730 = vmatprep.subr.mxu0 0.0
            %1731 = vmatpush1.msra.mxu0 0.0
            %1732 = vmatprep.subr.mxu0 0.0
            %1733 = vmatpush1.msra.mxu0 0.0
            %1734 = vmatprep.subr.mxu0 0.0
            %1735 = vmatpush1.msra.mxu0 0.0
            %1736 = vmatprep.subr.mxu0 0.0
            %1737 = vmatpush1.msra.mxu0 0.0
            %1738 = vmatprep.subr.mxu0 0.0
            %1739 = vmatpush1.msra.mxu0 0.0
            %1740 = vmatprep.subr.mxu0 0.0
            %1741 = vmatpush1.msra.mxu0 0.0
            %1742 = vmatprep.subr.mxu0 0.0
            %1743 = vmatpush1.msra.mxu0 0.0
            %1744 = vmatprep.subr.mxu0 0.0
            %1745 = vmatpush1.msra.mxu0 0.0
            %1746 = vmatprep.subr.mxu0 0.0
            %1747 = vmatpush1.msra.mxu0 0.0
            %1748 = vmatprep.subr.mxu0 0.0
            %1749 = vmatpush1.msra.mxu0 0.0
            %1750 = vmatprep.subr.mxu0 0.0
            %1751 = vmatpush1.msra.mxu0 0.0
            %1752 = vmatprep.subr.mxu0 0.0
            %1753 = vmatpush1.msra.mxu0 0.0
            %1754 = vmatprep.subr.mxu0 0.0
            %1755 = vmatpush1.msra.mxu0 0.0
            %1756 = vmatprep.subr.mxu0 0.0
            %1757 = vmatpush1.msra.mxu0 0.0
            %1758 = vmatprep.subr.mxu0 0.0
            %1759 = vmatpush1.msra.mxu0 0.0
            %1760 = vmatprep.mubr.f32.mxu0 0.0
            %1761 = vmatmul.mubr.f32.gmra.mrb[0].mxu0 %v1690
            %v1762 = vpop.f32.mrb[0].mxu0
            %v1763 = vadd.f32 %v1687, %v1762
            %v1764 = vpop.f32.mrb[0].mxu0
            %1765 = vdwg.mxu0
            %v1766 = vxor.u32 %v1763, 2147483648
            %v1767 = vmul.f32 %v1766, 1.442695
            %v1768 = vpow.pop %v1767
            %v1769 = vadd.f32 %v1768, 1.0
            %v1770 = vrcp.pop %v1769
            %v1771 = vmul.f32 1.0, %v1770
            %vm1772 = vcmask 253952
            %1773 = vst.msk [vmem:[#allocation5] sm:$0x1] %vm1772, %v1771
          $region96: #{context_guided_block_down.3} parent=91 // pred_fallthru
            _
          %s1774 = smul.u32 %s35, 8
          %s1775 = smul.u32 %s1774, 8
          %s1776 = scalar_lea.vmem [#allocation3], %s1775
          %v1777 = vld [vmem:[%s1776] sm:$0xff]
          %v1778 = vld [vmem:[%s1776 + $0x8] sm:$0xff]
          %v1779 = vld [vmem:[%s1776 + $0x10] sm:$0xff]
          %v1780 = vld [vmem:[%s1776 + $0x18] sm:$0xff]
          %v1781 = vld [vmem:[%s1776 + $0x20] sm:$0xff]
          %v1782 = vld [vmem:[%s1776 + $0x28] sm:$0xff]
          %v1783 = vld [vmem:[%s1776 + $0x30] sm:$0xff]
          %v1784 = vld [vmem:[%s1776 + $0x38] sm:$0xff]
          %v1785 = vld [vmem:[#allocation5] sm:$0x1]
          %v1787 = vlaneseq
          %v1788 = vshrl.u32 %v1787, 7
          %v1789 = vsub.s32 0, %v1788
          %v1790 = vrot.slane %v1785, %v1789
          %v1792 = vmul.f32 %v1777, %v1790
          %v1793 = vmul.f32 %v1778, %v1790
          %v1794 = vmul.f32 %v1779, %v1790
          %v1795 = vmul.f32 %v1780, %v1790
          %v1796 = vmul.f32 %v1781, %v1790
          %v1797 = vmul.f32 %v1782, %v1790
          %v1798 = vmul.f32 %v1783, %v1790
          %v1799 = vmul.f32 %v1784, %v1790
          %vm1800 = vcmask 261120
          %1801 = vst.msk [vmem:[%s606] sm:$0xff] %vm1800, %v1792
          %1802 = vst.msk [vmem:[%s606 + $0x8] sm:$0xff] %vm1800, %v1793
          %1803 = vst.msk [vmem:[%s606 + $0x10] sm:$0xff] %vm1800, %v1794
          %1804 = vst.msk [vmem:[%s606 + $0x18] sm:$0xff] %vm1800, %v1795
          %1805 = vst.msk [vmem:[%s606 + $0x20] sm:$0xff] %vm1800, %v1796
          %1806 = vst.msk [vmem:[%s606 + $0x28] sm:$0xff] %vm1800, %v1797
          %1807 = vst.msk [vmem:[%s606 + $0x30] sm:$0xff] %vm1800, %v1798
          %1808 = vst.msk [vmem:[%s606 + $0x38] sm:$0xff] %vm1800, %v1799
        $region92: #{context_guided_block_down.3} parent=75 // pred_fallthru
          _
        %s1809 = sand.u32 %s398, 1
        %s1810 = scalar_lea.sflag [#allocation7], %s1809
        %s1811 = sand.u32 %s398, 1
        %s1812 = smul.addr %s1811, 64
        %s1813 = scalar_lea.vmem [#allocation6], %s1812
        // Predicated region
        $region97: #{context_guided_block_down.3} parent=75 // pred_check
          %p1814 = pneg %p408
        $region98: #{context_guided_block_down.3} parent=75 // pred_check_branch
          %1816 = sbr.rel (%p1814) target = $region100
        $region99: #{context_guided_block_down.3} parent=75 // pred_region
          %s1817 = smul.u32 %s35, %s34
          %s1818 = smul.u32 8, %s1817
          %s1820 = ssub.s32 1024, 1024
          %1821 = vsyncadd %s1810, %s1820
          %s1822 = smul.addr %s33, 8
          %s1823 = sadd.s32 %s1818, %s1822
          %s1824 = smul.addr %s1823, 128
          %s1825 = scalar_lea.hbm %s14, %s1824
          %s1826 = sshll.u32 %s1813, 4
          %s1827 = int_to_ptr.vmem [resolvable:$true] %s1826
          %1832 = dma.vmem_to_hbm [thread:$0]  %s1827, 1024, %s1825, %s1810, 128, 128, 8
        $region100: #{context_guided_block_down.3} parent=75 // pred_fallthru
          _
      $region76: #{context_guided_block_down.3} parent=5 // pred_fallthru
        _
      %p1833 = scmp.le.s32.totalorder 2, %s23
      // Predicated region
      $region101: #{context_guided_block_down.3} parent=5 // pred_check
        %p1834 = pneg %p1833
      $region102: #{context_guided_block_down.3} parent=5 // pred_check_branch
        %1836 = sbr.rel (%p1834) target = $region104
      $region103: #{context_guided_block_down.3} parent=5 // pred_region
        %s1837 = ssub.s32 %s23, 2
        // Predicated region
        $region105: #{context_guided_block_down.3} parent=103 // pred_check
          %p1838 = pneg %p414
        $region106: #{context_guided_block_down.3} parent=103 // pred_check_branch
          %1840 = sbr.rel (%p1838) target = $region108
        $region107: #{context_guided_block_down.3} parent=103 // pred_region
          %s1841 = sand.u32 %s399, 1
          %s1842 = scalar_lea.sflag [#allocation7], %s1841
          %s1843 = sand.u32 %s399, 1
          %s1844 = smul.addr %s1843, 64
          %s1845 = scalar_lea.vmem [#allocation6], %s1844
          %1846 = dma.done %s1842, 1024
        $region108: #{context_guided_block_down.3} parent=103 // pred_fallthru
          _
      $region104: #{context_guided_block_down.3} parent=5 // pred_fallthru
        _
    $region6: #{context_guided_block_down.3} parent=1 // loop_footer
      %s27 = sadd.s32 1, %s23
    $region7: #{context_guided_block_down.3} parent=1 // loop_footer_branch
      %22 = sbr.rel target = $region3
    $region8: #{context_guided_block_down.3} parent=1 // loop_exit
      _
    %1847 = vsyncpa [#allocation7], 1
    %s1848 = scalar_lea.sflag [#allocation7], 1
    %1849 = vsyncpa %s1848, 1

</llo_original>
